<compile_context>
chip_gen: v7x
topology: tpu7x:2x2x1
jax: 0.10.0
libtpu: 0.0.40
codegen_flags: <defaults>
</compile_context>

<pallas_src>
import functools

import jax
import jax.numpy as jnp
from jax.experimental import pallas as pl
from jax.experimental.pallas import tpu as pltpu


def _edge_mlp_kernel(src_ref, dst_ref, ea_ref, u_ref,
                     w1s_ref, w1d_ref, w1e_ref, w1u_ref, b1_ref,
                     w2_ref, b2_ref, g_ref, bt_ref, avg_ref, o_ref):
    f32 = jnp.float32
    cdt = w1s_ref.dtype      # MXU compute dtype (bf16 by default)

    # ---- Linear 1 (torch.cat fused away: four partial dots, f32 accumulate).
    # Inputs arrive in their native dtype; cast to the compute dtype here.
    h = jnp.dot(src_ref[...].astype(cdt), w1s_ref[...], preferred_element_type=f32)
    h = h + jnp.dot(dst_ref[...].astype(cdt), w1d_ref[...], preferred_element_type=f32)
    h = h + jnp.dot(ea_ref[...].astype(cdt), w1e_ref[...], preferred_element_type=f32)
    h = h + jnp.dot(u_ref[...].astype(cdt), w1u_ref[...], preferred_element_type=f32)
    h = jnp.maximum(h + b1_ref[...], 0.0)                      # bias + ReLU (f32)

    # ---- Linear 2.
    y = jnp.dot(h.astype(cdt), w2_ref[...], preferred_element_type=f32) + b2_ref[...]

    # ---- LayerNorm per n_hidden-lane group (== per original edge row).
    # Group mean / biased variance via a small averaging matmul on the MXU
    # (which has slack -- the kernel is HBM-bound); accumulation stays in f32.
    avg = avg_ref[...]
    mean = jnp.dot(y.astype(avg.dtype), avg, preferred_element_type=f32)
    yc = y - mean
    var = jnp.dot((yc * yc).astype(avg.dtype), avg, preferred_element_type=f32)
    y_hat = yc * jax.lax.rsqrt(var + 1e-5)
    o_ref[...] = (y_hat * g_ref[...] + bt_ref[...]).astype(o_ref.dtype)


def _block_diag(w, fold):
    """(d, h) -> (fold*d, fold*h) block-diagonal replication of w."""
    d, h = w.shape
    eye = jnp.eye(fold, dtype=w.dtype)
    return (eye[:, None, :, None] * w[None, :, None, :]).reshape(fold * d, fold * h)


def _round_up(x, m):
    return ((x + m - 1) // m) * m


@functools.partial(jax.jit, static_argnames=("compute_dtype", "tile_rows"))
def edge_model_ltp_forward(src, dest, edge_attr, u, params,
                           compute_dtype=jnp.bfloat16, tile_rows=None):
    """Pallas implementation of EdgeModelLtp.forward (with u provided)."""
    w1, b1, w2, b2, gamma, beta = params
    n, n_feat = src.shape
    n_edge_feat = edge_attr.shape[1]
    n_global = u.shape[1]
    n_hidden = w1.shape[1]
    d_in = 2 * n_feat + n_edge_feat + n_global

    # Lane folding factor: pack `fold` consecutive edges into one 128-lane row.
    # NOTE: if 128 % n_hidden != 0 we fall back to fold=1 (correct, but stores
    # are masked / sub-128-lane -> noticeably slower).
    fold = 128 // n_hidden if 128 % n_hidden == 0 else 1
    lanes = fold * n_hidden

    # --- Tile selection: large tiles amortize the ~0.35us/step overhead, but
    # keep >=2 grid steps whenever possible so v7x's two TensorCores both work.
    rows_exact = -(-n // fold)                      # cdiv(n, fold)
    if tile_rows is None:
        tile_rows = max(16, min(512, _round_up(-(-rows_exact // 2), 16)))
    rows_pad = _round_up(rows_exact, tile_rows)
    n_pad = rows_pad * fold
    pad = n_pad - n

    # Keep inputs in their native dtype (no f32 up-cast / bf16 down-cast HBM
    # round trip).  The fold reshape is a free row-major bitcast; a real copy
    # only happens when padding is required.
    def _prep(x):
        if pad:
            x = jnp.pad(x, ((0, pad), (0, 0)))
        return x.reshape(n_pad // fold, fold * x.shape[1])

    src_f, dst_f, ea_f, u_f = _prep(src), _prep(dest), _prep(edge_attr), _prep(u)

    # Split W1 along rows (this fuses torch.cat) and replicate every weight
    # block block-diagonally for the folded-lane layout.
    s0, s1, s2 = n_feat, 2 * n_feat, 2 * n_feat + n_edge_feat
    w1s = _block_diag(w1[:s0], fold).astype(compute_dtype)
    w1d = _block_diag(w1[s0:s1], fold).astype(compute_dtype)
    w1e = _block_diag(w1[s1:s2], fold).astype(compute_dtype)
    w1u = _block_diag(w1[s2:], fold).astype(compute_dtype)
    w2b = _block_diag(w2, fold).astype(compute_dtype)
    b1t = jnp.tile(b1.astype(jnp.float32), (1, fold))
    b2t = jnp.tile(b2.astype(jnp.float32), (1, fold))
    gt = jnp.tile(gamma.astype(jnp.float32), (1, fold))
    btt = jnp.tile(beta.astype(jnp.float32), (1, fold))
    # Per-group averaging matrix (mean over each block of n_hidden lanes).
    # Entries are 0 and 1/n_hidden (exact in bf16 for n_hidden=32).
    grp = jnp.arange(lanes) // n_hidden
    avg = ((grp[:, None] == grp[None, :]).astype(jnp.float32) / n_hidden
           ).astype(compute_dtype)

    grid = (rows_pad // tile_rows,)

    def _data_spec(width):
        return pl.BlockSpec((tile_rows, width), lambda i: (i, 0))

    def _const_spec(shape):
        return pl.BlockSpec(shape, lambda i: (0, 0))

    in_itemsize = src.dtype.itemsize
    w_itemsize = jnp.dtype(compute_dtype).itemsize
    cost = pl.CostEstimate(
        # W1 partial dots (contraction fold*d_in), W2 and the two LN matmuls.
        flops=2 * rows_pad * lanes * (fold * d_in + 3 * lanes),
        transcendentals=rows_pad * lanes,             # rsqrt per output element
        bytes_accessed=(rows_pad * fold * d_in * in_itemsize      # inputs
                        + rows_pad * lanes * 4                    # f32 output
                        + (fold * d_in * lanes + 2 * lanes * lanes) * w_itemsize
                        + 4 * lanes * 4 * 4),                     # biases/γ/β
    )

    out = pl.pallas_call(
        _edge_mlp_kernel,
        out_shape=jax.ShapeDtypeStruct((rows_pad, lanes), jnp.float32),
        grid_spec=pltpu.PrefetchScalarGridSpec(
            num_scalar_prefetch=0,
            grid=grid,
            in_specs=[
                _data_spec(fold * n_feat),        # src  (lane-folded)
                _data_spec(fold * n_feat),        # dest (lane-folded)
                _data_spec(fold * n_edge_feat),   # edge_attr (lane-folded)
                _data_spec(fold * n_global),      # u    (lane-folded)
                _const_spec(w1s.shape),
                _const_spec(w1d.shape),
                _const_spec(w1e.shape),
                _const_spec(w1u.shape),
                _const_spec(b1t.shape),
                _const_spec(w2b.shape),
                _const_spec(b2t.shape),
                _const_spec(gt.shape),
                _const_spec(btt.shape),
                _const_spec(avg.shape),
            ],
            out_specs=pl.BlockSpec((tile_rows, lanes), lambda i: (i, 0)),
        ),
        compiler_params=pltpu.CompilerParams(
            dimension_semantics=("parallel",)),   # row tiles shard across v7x TCs
        cost_estimate=cost,
    )(src_f, dst_f, ea_f, u_f, w1s, w1d, w1e, w1u, b1t, w2b, b2t, gt, btt, avg)

    # (rows_pad, fold*H) -> (n_pad, H) is the inverse row-major bitcast; the
    # trailing slice is a no-op when no padding was required.
    return out.reshape(n_pad, n_hidden)[:n]


def init_params(key, n_features, n_edge_features, n_global, n_hidden):
    d_in = 2 * n_features + n_edge_features + n_global
    k1, k2, k3, k4 = jax.random.split(key, 4)
    lim1 = 1.0 / jnp.sqrt(d_in)
    lim2 = 1.0 / jnp.sqrt(n_hidden)
    w1 = jax.random.uniform(k1, (d_in, n_hidden), jnp.float32, -lim1, lim1)
    b1 = jax.random.uniform(k2, (1, n_hidden), jnp.float32, -lim1, lim1)
    w2 = jax.random.uniform(k3, (n_hidden, n_hidden), jnp.float32, -lim2, lim2)
    b2 = jax.random.uniform(k4, (1, n_hidden), jnp.float32, -lim2, lim2)
    gamma = jnp.ones((1, n_hidden), jnp.float32)
    beta = jnp.zeros((1, n_hidden), jnp.float32)
    return (w1, b1, w2, b2, gamma, beta)


def _reference(src, dest, edge_attr, u, params):
    w1, b1, w2, b2, gamma, beta = params
    hp = jax.lax.Precision.HIGHEST
    x = jnp.concatenate([src, dest, edge_attr, u], axis=1)
    h = jnp.maximum(jnp.dot(x, w1, precision=hp) + b1, 0.0)
    y = jnp.dot(h, w2, precision=hp) + b2
    mean = jnp.mean(y, axis=-1, keepdims=True)
    var = jnp.mean((y - mean) ** 2, axis=-1, keepdims=True)
    return (y - mean) * jax.lax.rsqrt(var + 1e-5) * gamma + beta


if __name__ == "__main__":
    # Shapes implied by HeteroGNN_global:
    #   edge_update = EdgeModelLtp(2R, 2R, 2R, R) with representation_size R.
    # R = 32 -> src/dest/edge_attr/u are 64-wide, hidden = 32.
    rep = 32
    n_features = 2 * rep
    n_edge_features = 2 * rep
    n_global = 2 * rep
    n_hidden = rep

    key = jax.random.PRNGKey(0)
    kp = jax.random.fold_in(key, 123)
    params = init_params(kp, n_features, n_edge_features, n_global, n_hidden)

    # 2048 edges: no-pad path (free bitcast inputs), 2-step parallel grid.
    #  500 edges: exercises the padded / ragged-tail path.
    for n_edges in (2048, 500):
        kk = jax.random.fold_in(key, n_edges)
        ks, kd, ke, ku = jax.random.split(kk, 4)
        src = jax.random.normal(ks, (n_edges, n_features), jnp.float32)
        dest = jax.random.normal(kd, (n_edges, n_features), jnp.float32)
        edge_attr = jax.random.normal(ke, (n_edges, n_edge_features), jnp.float32)
        u = jax.random.normal(ku, (n_edges, n_global), jnp.float32)

        ref = _reference(src, dest, edge_attr, u, params)
        out = edge_model_ltp_forward(src, dest, edge_attr, u, params)
        out = jax.block_until_ready(out)

        assert out.shape == (n_edges, n_hidden), out.shape
        assert bool(jnp.all(jnp.isfinite(out)))
        err = float(jnp.max(jnp.abs(out - ref)))
        assert err < 1e-1, (n_edges, err)

    print("KERNEL_OK")
</pallas_src>

<mosaic_0001>
module attributes {stable_mosaic.version = 11 : i64} {
  func.func @_edge_mlp_kernel(%arg0: i32, %arg1: memref<256x256xf32, #tpu.memory_space<vmem>>, %arg2: memref<256x256xf32, #tpu.memory_space<vmem>>, %arg3: memref<256x256xf32, #tpu.memory_space<vmem>>, %arg4: memref<256x256xf32, #tpu.memory_space<vmem>>, %arg5: memref<256x128xbf16, #tpu.memory_space<vmem>>, %arg6: memref<256x128xbf16, #tpu.memory_space<vmem>>, %arg7: memref<256x128xbf16, #tpu.memory_space<vmem>>, %arg8: memref<256x128xbf16, #tpu.memory_space<vmem>>, %arg9: memref<1x128xf32, #tpu.memory_space<vmem>>, %arg10: memref<128x128xbf16, #tpu.memory_space<vmem>>, %arg11: memref<1x128xf32, #tpu.memory_space<vmem>>, %arg12: memref<1x128xf32, #tpu.memory_space<vmem>>, %arg13: memref<1x128xf32, #tpu.memory_space<vmem>>, %arg14: memref<128x128xbf16, #tpu.memory_space<vmem>>, %arg15: memref<256x128xf32, #tpu.memory_space<vmem>>) attributes {dimension_semantics = [#tpu.dimension_semantics<parallel>], iteration_bounds = array<i64: 2>, scalar_prefetch = 0 : i64, scratch_operands = 0 : i64, tpu.core_type = #tpu.core_type<tc>, window_params = [{transform_indices = @transform_0, window_bounds = array<i64: 256, 256>}, {transform_indices = @transform_1, window_bounds = array<i64: 256, 256>}, {transform_indices = @transform_2, window_bounds = array<i64: 256, 256>}, {transform_indices = @transform_3, window_bounds = array<i64: 256, 256>}, {pipeline_mode = #tpu.pipeline_mode<synchronous>, transform_indices = @transform_4, window_bounds = array<i64: 256, 128>}, {pipeline_mode = #tpu.pipeline_mode<synchronous>, transform_indices = @transform_5, window_bounds = array<i64: 256, 128>}, {pipeline_mode = #tpu.pipeline_mode<synchronous>, transform_indices = @transform_6, window_bounds = array<i64: 256, 128>}, {pipeline_mode = #tpu.pipeline_mode<synchronous>, transform_indices = @transform_7, window_bounds = array<i64: 256, 128>}, {pipeline_mode = #tpu.pipeline_mode<synchronous>, transform_indices = @transform_8, window_bounds = array<i64: 1, 128>}, {pipeline_mode = #tpu.pipeline_mode<synchronous>, transform_indices = @transform_9, window_bounds = array<i64: 128, 128>}, {pipeline_mode = #tpu.pipeline_mode<synchronous>, transform_indices = @transform_10, window_bounds = array<i64: 1, 128>}, {pipeline_mode = #tpu.pipeline_mode<synchronous>, transform_indices = @transform_11, window_bounds = array<i64: 1, 128>}, {pipeline_mode = #tpu.pipeline_mode<synchronous>, transform_indices = @transform_12, window_bounds = array<i64: 1, 128>}, {pipeline_mode = #tpu.pipeline_mode<synchronous>, transform_indices = @transform_13, window_bounds = array<i64: 128, 128>}, {transform_indices = @transform_14, window_bounds = array<i64: 256, 128>}]} {
    %c0 = arith.constant 0 : index
    %c0_0 = arith.constant 0 : index
    %0 = vector.load %arg1[%c0, %c0_0] : memref<256x256xf32, #tpu.memory_space<vmem>>, vector<256x256xf32>
    %1 = arith.truncf %0 : vector<256x256xf32> to vector<256x256xbf16>
    %c0_1 = arith.constant 0 : index
    %c0_2 = arith.constant 0 : index
    %2 = vector.load %arg5[%c0_1, %c0_2] : memref<256x128xbf16, #tpu.memory_space<vmem>>, vector<256x128xbf16>
    %cst = arith.constant dense<0.000000e+00> : vector<256x128xf32>
    %3 = tpu.matmul %1, %2, %cst {dimension_numbers = #tpu.dot_dimension_numbers<[1], [0], [0], [1], [0, 0, 1, 1], [], []>} : vector<256x256xbf16>, vector<256x128xbf16>, vector<256x128xf32> -> vector<256x128xf32>
    %c0_3 = arith.constant 0 : index
    %c0_4 = arith.constant 0 : index
    %4 = vector.load %arg2[%c0_3, %c0_4] : memref<256x256xf32, #tpu.memory_space<vmem>>, vector<256x256xf32>
    %5 = arith.truncf %4 : vector<256x256xf32> to vector<256x256xbf16>
    %c0_5 = arith.constant 0 : index
    %c0_6 = arith.constant 0 : index
    %6 = vector.load %arg6[%c0_5, %c0_6] : memref<256x128xbf16, #tpu.memory_space<vmem>>, vector<256x128xbf16>
    %cst_7 = arith.constant dense<0.000000e+00> : vector<256x128xf32>
    %7 = tpu.matmul %5, %6, %cst_7 {dimension_numbers = #tpu.dot_dimension_numbers<[1], [0], [0], [1], [0, 0, 1, 1], [], []>} : vector<256x256xbf16>, vector<256x128xbf16>, vector<256x128xf32> -> vector<256x128xf32>
    %8 = arith.addf %3, %7 : vector<256x128xf32>
    %c0_8 = arith.constant 0 : index
    %c0_9 = arith.constant 0 : index
    %9 = vector.load %arg3[%c0_8, %c0_9] : memref<256x256xf32, #tpu.memory_space<vmem>>, vector<256x256xf32>
    %10 = arith.truncf %9 : vector<256x256xf32> to vector<256x256xbf16>
    %c0_10 = arith.constant 0 : index
    %c0_11 = arith.constant 0 : index
    %11 = vector.load %arg7[%c0_10, %c0_11] : memref<256x128xbf16, #tpu.memory_space<vmem>>, vector<256x128xbf16>
    %cst_12 = arith.constant dense<0.000000e+00> : vector<256x128xf32>
    %12 = tpu.matmul %10, %11, %cst_12 {dimension_numbers = #tpu.dot_dimension_numbers<[1], [0], [0], [1], [0, 0, 1, 1], [], []>} : vector<256x256xbf16>, vector<256x128xbf16>, vector<256x128xf32> -> vector<256x128xf32>
    %13 = arith.addf %8, %12 : vector<256x128xf32>
    %c0_13 = arith.constant 0 : index
    %c0_14 = arith.constant 0 : index
    %14 = vector.load %arg4[%c0_13, %c0_14] : memref<256x256xf32, #tpu.memory_space<vmem>>, vector<256x256xf32>
    %15 = arith.truncf %14 : vector<256x256xf32> to vector<256x256xbf16>
    %c0_15 = arith.constant 0 : index
    %c0_16 = arith.constant 0 : index
    %16 = vector.load %arg8[%c0_15, %c0_16] : memref<256x128xbf16, #tpu.memory_space<vmem>>, vector<256x128xbf16>
    %cst_17 = arith.constant dense<0.000000e+00> : vector<256x128xf32>
    %17 = tpu.matmul %15, %16, %cst_17 {dimension_numbers = #tpu.dot_dimension_numbers<[1], [0], [0], [1], [0, 0, 1, 1], [], []>} : vector<256x256xbf16>, vector<256x128xbf16>, vector<256x128xf32> -> vector<256x128xf32>
    %18 = arith.addf %13, %17 : vector<256x128xf32>
    %c0_18 = arith.constant 0 : index
    %c0_19 = arith.constant 0 : index
    %19 = vector.load %arg9[%c0_18, %c0_19] : memref<1x128xf32, #tpu.memory_space<vmem>>, vector<1x128xf32>
    %20 = vector.broadcast %19 : vector<1x128xf32> to vector<256x128xf32>
    %21 = arith.addf %18, %20 : vector<256x128xf32>
    %cst_20 = arith.constant 0.000000e+00 : f32
    %22 = vector.broadcast %cst_20 : f32 to vector<256x128xf32>
    %23 = arith.maximumf %21, %22 : vector<256x128xf32>
    %24 = arith.truncf %23 : vector<256x128xf32> to vector<256x128xbf16>
    %c0_21 = arith.constant 0 : index
    %c0_22 = arith.constant 0 : index
    %25 = vector.load %arg10[%c0_21, %c0_22] : memref<128x128xbf16, #tpu.memory_space<vmem>>, vector<128x128xbf16>
    %cst_23 = arith.constant dense<0.000000e+00> : vector<256x128xf32>
    %26 = tpu.matmul %24, %25, %cst_23 {dimension_numbers = #tpu.dot_dimension_numbers<[1], [0], [0], [1], [0, 0, 1, 1], [], []>} : vector<256x128xbf16>, vector<128x128xbf16>, vector<256x128xf32> -> vector<256x128xf32>
    %c0_24 = arith.constant 0 : index
    %c0_25 = arith.constant 0 : index
    %27 = vector.load %arg11[%c0_24, %c0_25] : memref<1x128xf32, #tpu.memory_space<vmem>>, vector<1x128xf32>
    %28 = vector.broadcast %27 : vector<1x128xf32> to vector<256x128xf32>
    %29 = arith.addf %26, %28 : vector<256x128xf32>
    %c0_26 = arith.constant 0 : index
    %c0_27 = arith.constant 0 : index
    %30 = vector.load %arg14[%c0_26, %c0_27] : memref<128x128xbf16, #tpu.memory_space<vmem>>, vector<128x128xbf16>
    %31 = arith.truncf %29 : vector<256x128xf32> to vector<256x128xbf16>
    %cst_28 = arith.constant dense<0.000000e+00> : vector<256x128xf32>
    %32 = tpu.matmul %31, %30, %cst_28 {dimension_numbers = #tpu.dot_dimension_numbers<[1], [0], [0], [1], [0, 0, 1, 1], [], []>} : vector<256x128xbf16>, vector<128x128xbf16>, vector<256x128xf32> -> vector<256x128xf32>
    %33 = arith.subf %29, %32 : vector<256x128xf32>
    %34 = arith.mulf %33, %33 : vector<256x128xf32>
    %35 = arith.truncf %34 : vector<256x128xf32> to vector<256x128xbf16>
    %cst_29 = arith.constant dense<0.000000e+00> : vector<256x128xf32>
    %36 = tpu.matmul %35, %30, %cst_29 {dimension_numbers = #tpu.dot_dimension_numbers<[1], [0], [0], [1], [0, 0, 1, 1], [], []>} : vector<256x128xbf16>, vector<128x128xbf16>, vector<256x128xf32> -> vector<256x128xf32>
    %cst_30 = arith.constant 9.99999974E-6 : f32
    %37 = vector.broadcast %cst_30 : f32 to vector<256x128xf32>
    %38 = arith.addf %36, %37 : vector<256x128xf32>
    %39 = math.rsqrt %38 : vector<256x128xf32>
    %40 = arith.mulf %33, %39 : vector<256x128xf32>
    %c0_31 = arith.constant 0 : index
    %c0_32 = arith.constant 0 : index
    %41 = vector.load %arg12[%c0_31, %c0_32] : memref<1x128xf32, #tpu.memory_space<vmem>>, vector<1x128xf32>
    %42 = vector.broadcast %41 : vector<1x128xf32> to vector<256x128xf32>
    %43 = arith.mulf %40, %42 : vector<256x128xf32>
    %c0_33 = arith.constant 0 : index
    %c0_34 = arith.constant 0 : index
    %44 = vector.load %arg13[%c0_33, %c0_34] : memref<1x128xf32, #tpu.memory_space<vmem>>, vector<1x128xf32>
    %45 = vector.broadcast %44 : vector<1x128xf32> to vector<256x128xf32>
    %46 = arith.addf %43, %45 : vector<256x128xf32>
    %c0_35 = arith.constant 0 : index
    %c0_36 = arith.constant 0 : index
    %47 = vector.load %arg15[%c0_35, %c0_36] : memref<256x128xf32, #tpu.memory_space<vmem>>, vector<256x128xf32>
    tpu.vector_store %arg15[%c0_35, %c0_36], %46 {strides = array<i32>} : memref<256x128xf32, #tpu.memory_space<vmem>>, vector<256x128xf32>,
    return
  }
  func.func @transform_0(%arg0: i32) -> (i32, i32) {
    %c0_i32 = arith.constant 0 : i32
    %c0_i32_0 = arith.constant 0 : i32
    return %arg0, %c0_i32 : i32, i32
  }
  func.func @transform_1(%arg0: i32) -> (i32, i32) {
    %c0_i32 = arith.constant 0 : i32
    %c0_i32_0 = arith.constant 0 : i32
    return %arg0, %c0_i32 : i32, i32
  }
  func.func @transform_2(%arg0: i32) -> (i32, i32) {
    %c0_i32 = arith.constant 0 : i32
    %c0_i32_0 = arith.constant 0 : i32
    return %arg0, %c0_i32 : i32, i32
  }
  func.func @transform_3(%arg0: i32) -> (i32, i32) {
    %c0_i32 = arith.constant 0 : i32
    %c0_i32_0 = arith.constant 0 : i32
    return %arg0, %c0_i32 : i32, i32
  }
  func.func @transform_4(%arg0: i32) -> (i32, i32) {
    %c0_i32 = arith.constant 0 : i32
    %c0_i32_0 = arith.constant 0 : i32
    %c0_i32_1 = arith.constant 0 : i32
    return %c0_i32, %c0_i32_0 : i32, i32
  }
  func.func @transform_5(%arg0: i32) -> (i32, i32) {
    %c0_i32 = arith.constant 0 : i32
    %c0_i32_0 = arith.constant 0 : i32
    %c0_i32_1 = arith.constant 0 : i32
    return %c0_i32, %c0_i32_0 : i32, i32
  }
  func.func @transform_6(%arg0: i32) -> (i32, i32) {
    %c0_i32 = arith.constant 0 : i32
    %c0_i32_0 = arith.constant 0 : i32
    %c0_i32_1 = arith.constant 0 : i32
    return %c0_i32, %c0_i32_0 : i32, i32
  }
  func.func @transform_7(%arg0: i32) -> (i32, i32) {
    %c0_i32 = arith.constant 0 : i32
    %c0_i32_0 = arith.constant 0 : i32
    %c0_i32_1 = arith.constant 0 : i32
    return %c0_i32, %c0_i32_0 : i32, i32
  }
  func.func @transform_8(%arg0: i32) -> (i32, i32) {
    %c0_i32 = arith.constant 0 : i32
    %c0_i32_0 = arith.constant 0 : i32
    %c0_i32_1 = arith.constant 0 : i32
    return %c0_i32, %c0_i32_0 : i32, i32
  }
  func.func @transform_9(%arg0: i32) -> (i32, i32) {
    %c0_i32 = arith.constant 0 : i32
    %c0_i32_0 = arith.constant 0 : i32
    %c0_i32_1 = arith.constant 0 : i32
    return %c0_i32, %c0_i32_0 : i32, i32
  }
  func.func @transform_10(%arg0: i32) -> (i32, i32) {
    %c0_i32 = arith.constant 0 : i32
    %c0_i32_0 = arith.constant 0 : i32
    %c0_i32_1 = arith.constant 0 : i32
    return %c0_i32, %c0_i32_0 : i32, i32
  }
  func.func @transform_11(%arg0: i32) -> (i32, i32) {
    %c0_i32 = arith.constant 0 : i32
    %c0_i32_0 = arith.constant 0 : i32
    %c0_i32_1 = arith.constant 0 : i32
    return %c0_i32, %c0_i32_0 : i32, i32
  }
  func.func @transform_12(%arg0: i32) -> (i32, i32) {
    %c0_i32 = arith.constant 0 : i32
    %c0_i32_0 = arith.constant 0 : i32
    %c0_i32_1 = arith.constant 0 : i32
    return %c0_i32, %c0_i32_0 : i32, i32
  }
  func.func @transform_13(%arg0: i32) -> (i32, i32) {
    %c0_i32 = arith.constant 0 : i32
    %c0_i32_0 = arith.constant 0 : i32
    %c0_i32_1 = arith.constant 0 : i32
    return %c0_i32, %c0_i32_0 : i32, i32
  }
  func.func @transform_14(%arg0: i32) -> (i32, i32) {
    %c0_i32 = arith.constant 0 : i32
    %c0_i32_0 = arith.constant 0 : i32
    return %arg0, %c0_i32 : i32, i32
  }
}

</mosaic_0001>

<llo_original>
// kernel: edge_model_ltp_forward.1
$region0: #{edge_model_ltp_forward.1}
  #allocation0 [shape = 'u32[]', space=smem, size = 0x4, offset = 0x4, fixed_abs, tag = 'smem constant byte address 0x4 - core index']
  #allocation1 [shape = 'u32[144,128]{1,0:T(1,128)}', space=vmem, size = 0x12000, scoped, tag = 'internal scratch']
  %s0 = inlined_call_operand.vmem [shape: f32[512,256], index: 0, kind: input, shape index: {}]
  %s1 = inlined_call_operand.vmem [shape: f32[512,256], index: 1, kind: input, shape index: {}]
  %s2 = inlined_call_operand.vmem [shape: f32[512,256], index: 2, kind: input, shape index: {}]
  %s3 = inlined_call_operand.vmem [shape: f32[512,256], index: 3, kind: input, shape index: {}]
  %s4 = inlined_call_operand.vmem [shape: bf16[256,128], index: 4, kind: input, shape index: {}]
  %s5 = inlined_call_operand.vmem [shape: bf16[256,128], index: 5, kind: input, shape index: {}]
  %s6 = inlined_call_operand.vmem [shape: bf16[256,128], index: 6, kind: input, shape index: {}]
  %s7 = inlined_call_operand.vmem [shape: bf16[256,128], index: 7, kind: input, shape index: {}]
  %s8 = inlined_call_operand.vmem [shape: f32[1,128], index: 8, kind: input, shape index: {}]
  %s9 = inlined_call_operand.vmem [shape: bf16[128,128], index: 9, kind: input, shape index: {}]
  %s10 = inlined_call_operand.vmem [shape: f32[1,128], index: 10, kind: input, shape index: {}]
  %s11 = inlined_call_operand.vmem [shape: f32[1,128], index: 11, kind: input, shape index: {}]
  %s12 = inlined_call_operand.vmem [shape: f32[1,128], index: 12, kind: input, shape index: {}]
  %s13 = inlined_call_operand.vmem [shape: bf16[128,128], index: 13, kind: input, shape index: {}]
  %s14 = inlined_call_operand.vmem [shape: f32[512,128], index: 14, kind: output, shape index: {}]
  %s15 = sld [smem:[#allocation0]]
  $region89: #{edge_model_ltp_forward.1} parent=0
    _
  %s17 = ssub.s32 1, %s15
  %s18 = scalar_select 0, %s17, %s15
  loop: start=0, step=1, limit=4
  $region2: #{edge_model_ltp_forward.1} parent=0 // loop_pre_header
    _
  $region3: #{edge_model_ltp_forward.1} parent=0 // loop_header
    %s20 = sphi 0, %s24
    %p21 = scmp.ge.s32.totalorder %s20, 4
    %s30 = sphi 0, %s32
    %s33 = sphi 0, %s30
    %s34 = sphi 0, %s33
    %s50 = sphi 0, %s34
    %s56 = sphi 0, %s58
    %s59 = sphi 0, %s56
    %s60 = sphi 0, %s59
    %s76 = sphi 0, %s60
    %s82 = sphi 0, %s84
    %s85 = sphi 0, %s82
    %s86 = sphi 0, %s85
    %s102 = sphi 0, %s86
    %s108 = sphi 0, %s110
    %s111 = sphi 0, %s108
    %s112 = sphi 0, %s111
    %s128 = sphi 0, %s112
    %s132 = sphi 0, %s132
    %s134 = sphi 0, %s132
    %s135 = sphi 0, %s134
    %s149 = sphi 0, %s135
    %s153 = sphi 0, %s153
    %s155 = sphi 0, %s153
    %s156 = sphi 0, %s155
    %s170 = sphi 0, %s156
    %s174 = sphi 0, %s174
    %s176 = sphi 0, %s174
    %s177 = sphi 0, %s176
    %s191 = sphi 0, %s177
    %s195 = sphi 0, %s195
    %s197 = sphi 0, %s195
    %s198 = sphi 0, %s197
    %s212 = sphi 0, %s198
    %s216 = sphi 0, %s216
    %s218 = sphi 0, %s216
    %s219 = sphi 0, %s218
    %s233 = sphi 0, %s219
    %s237 = sphi 0, %s237
    %s239 = sphi 0, %s237
    %s240 = sphi 0, %s239
    %s254 = sphi 0, %s240
    %s258 = sphi 0, %s258
    %s260 = sphi 0, %s258
    %s261 = sphi 0, %s260
    %s275 = sphi 0, %s261
    %s279 = sphi 0, %s279
    %s281 = sphi 0, %s279
    %s282 = sphi 0, %s281
    %s296 = sphi 0, %s282
    %s300 = sphi 0, %s300
    %s302 = sphi 0, %s300
    %s303 = sphi 0, %s302
    %s317 = sphi 0, %s303
    %s321 = sphi 0, %s321
    %s323 = sphi 0, %s321
    %s324 = sphi 0, %s323
    %s338 = sphi 0, %s324
    %s344 = sphi 0, %s346
    %s347 = sphi 0, %s344
    %s348 = sphi 0, %s347
    %s364 = sphi 0, %s348
  $region4: #{edge_model_ltp_forward.1} parent=0 // loop_header_branch
    %23 = sbr.rel (%p21) target = $region8
  $region5: #{edge_model_ltp_forward.1} parent=0 // loop_body
    %s25 = ssub.s32 %s20, 1
    %s26 = ssub.s32 %s20, 2
    %s27 = sadd.s32 %s20, 1
    %s28 = ssub.s32 %s20, %s27
    %p29 = scmp.eq.s32.totalorder %s28, 0
    %s31 = sadd.s32 %s30, 1
    %s32 = scalar_select %p29, %s30, %s31
    %p35 = pneg %p29
    %p36 = scmp.eq.s32.totalorder %s20, 1
    %p37 = por %p35, %p36
    %p38 = scmp.ne.s32.totalorder %s30, %s33
    %p39 = scmp.eq.s32.totalorder %s20, 0
    %p40 = por %p38, %p39
    %p41 = scmp.ne.s32.totalorder %s30, %s33
    %p42 = scmp.eq.s32.totalorder %s25, 1
    %p43 = por %p41, %p42
    %p44 = scmp.ne.s32.totalorder %s33, %s34
    %p45 = scmp.eq.s32.totalorder %s25, 0
    %p46 = por %p44, %p45
    %p47 = scmp.ne.s32.totalorder %s33, %s34
    %p48 = scmp.eq.s32.totalorder %s26, 1
    %p49 = por %p47, %p48
    %p51 = scmp.ne.s32.totalorder %s34, %s50
    %p52 = scmp.eq.s32.totalorder %s26, 0
    %p53 = por %p51, %p52
    %s54 = ssub.s32 %s20, %s27
    %p55 = scmp.eq.s32.totalorder %s54, 0
    %s57 = sadd.s32 %s56, 1
    %s58 = scalar_select %p55, %s56, %s57
    %p61 = pneg %p55
    %p62 = scmp.eq.s32.totalorder %s20, 1
    %p63 = por %p61, %p62
    %p64 = scmp.ne.s32.totalorder %s56, %s59
    %p65 = scmp.eq.s32.totalorder %s20, 0
    %p66 = por %p64, %p65
    %p67 = scmp.ne.s32.totalorder %s56, %s59
    %p68 = scmp.eq.s32.totalorder %s25, 1
    %p69 = por %p67, %p68
    %p70 = scmp.ne.s32.totalorder %s59, %s60
    %p71 = scmp.eq.s32.totalorder %s25, 0
    %p72 = por %p70, %p71
    %p73 = scmp.ne.s32.totalorder %s59, %s60
    %p74 = scmp.eq.s32.totalorder %s26, 1
    %p75 = por %p73, %p74
    %p77 = scmp.ne.s32.totalorder %s60, %s76
    %p78 = scmp.eq.s32.totalorder %s26, 0
    %p79 = por %p77, %p78
    %s80 = ssub.s32 %s20, %s27
    %p81 = scmp.eq.s32.totalorder %s80, 0
    %s83 = sadd.s32 %s82, 1
    %s84 = scalar_select %p81, %s82, %s83
    %p87 = pneg %p81
    %p88 = scmp.eq.s32.totalorder %s20, 1
    %p89 = por %p87, %p88
    %p90 = scmp.ne.s32.totalorder %s82, %s85
    %p91 = scmp.eq.s32.totalorder %s20, 0
    %p92 = por %p90, %p91
    %p93 = scmp.ne.s32.totalorder %s82, %s85
    %p94 = scmp.eq.s32.totalorder %s25, 1
    %p95 = por %p93, %p94
    %p96 = scmp.ne.s32.totalorder %s85, %s86
    %p97 = scmp.eq.s32.totalorder %s25, 0
    %p98 = por %p96, %p97
    %p99 = scmp.ne.s32.totalorder %s85, %s86
    %p100 = scmp.eq.s32.totalorder %s26, 1
    %p101 = por %p99, %p100
    %p103 = scmp.ne.s32.totalorder %s86, %s102
    %p104 = scmp.eq.s32.totalorder %s26, 0
    %p105 = por %p103, %p104
    %s106 = ssub.s32 %s20, %s27
    %p107 = scmp.eq.s32.totalorder %s106, 0
    %s109 = sadd.s32 %s108, 1
    %s110 = scalar_select %p107, %s108, %s109
    %p113 = pneg %p107
    %p114 = scmp.eq.s32.totalorder %s20, 1
    %p115 = por %p113, %p114
    %p116 = scmp.ne.s32.totalorder %s108, %s111
    %p117 = scmp.eq.s32.totalorder %s20, 0
    %p118 = por %p116, %p117
    %p119 = scmp.ne.s32.totalorder %s108, %s111
    %p120 = scmp.eq.s32.totalorder %s25, 1
    %p121 = por %p119, %p120
    %p122 = scmp.ne.s32.totalorder %s111, %s112
    %p123 = scmp.eq.s32.totalorder %s25, 0
    %p124 = por %p122, %p123
    %p125 = scmp.ne.s32.totalorder %s111, %s112
    %p126 = scmp.eq.s32.totalorder %s26, 1
    %p127 = por %p125, %p126
    %p129 = scmp.ne.s32.totalorder %s112, %s128
    %p130 = scmp.eq.s32.totalorder %s26, 0
    %p131 = por %p129, %p130
    %s133 = sadd.s32 %s132, 1
    %p136 = scmp.eq.s32.totalorder %s20, 1
    %p137 = scmp.ne.s32.totalorder %s132, %s134
    %p138 = scmp.eq.s32.totalorder %s20, 0
    %p139 = por %p137, %p138
    %p140 = scmp.ne.s32.totalorder %s132, %s134
    %p141 = scmp.eq.s32.totalorder %s25, 1
    %p142 = por %p140, %p141
    %p143 = scmp.ne.s32.totalorder %s134, %s135
    %p144 = scmp.eq.s32.totalorder %s25, 0
    %p145 = por %p143, %p144
    %p146 = scmp.ne.s32.totalorder %s134, %s135
    %p147 = scmp.eq.s32.totalorder %s26, 1
    %p148 = por %p146, %p147
    %p150 = scmp.ne.s32.totalorder %s135, %s149
    %p151 = scmp.eq.s32.totalorder %s26, 0
    %p152 = por %p150, %p151
    %s154 = sadd.s32 %s153, 1
    %p157 = scmp.eq.s32.totalorder %s20, 1
    %p158 = scmp.ne.s32.totalorder %s153, %s155
    %p159 = scmp.eq.s32.totalorder %s20, 0
    %p160 = por %p158, %p159
    %p161 = scmp.ne.s32.totalorder %s153, %s155
    %p162 = scmp.eq.s32.totalorder %s25, 1
    %p163 = por %p161, %p162
    %p164 = scmp.ne.s32.totalorder %s155, %s156
    %p165 = scmp.eq.s32.totalorder %s25, 0
    %p166 = por %p164, %p165
    %p167 = scmp.ne.s32.totalorder %s155, %s156
    %p168 = scmp.eq.s32.totalorder %s26, 1
    %p169 = por %p167, %p168
    %p171 = scmp.ne.s32.totalorder %s156, %s170
    %p172 = scmp.eq.s32.totalorder %s26, 0
    %p173 = por %p171, %p172
    %s175 = sadd.s32 %s174, 1
    %p178 = scmp.eq.s32.totalorder %s20, 1
    %p179 = scmp.ne.s32.totalorder %s174, %s176
    %p180 = scmp.eq.s32.totalorder %s20, 0
    %p181 = por %p179, %p180
    %p182 = scmp.ne.s32.totalorder %s174, %s176
    %p183 = scmp.eq.s32.totalorder %s25, 1
    %p184 = por %p182, %p183
    %p185 = scmp.ne.s32.totalorder %s176, %s177
    %p186 = scmp.eq.s32.totalorder %s25, 0
    %p187 = por %p185, %p186
    %p188 = scmp.ne.s32.totalorder %s176, %s177
    %p189 = scmp.eq.s32.totalorder %s26, 1
    %p190 = por %p188, %p189
    %p192 = scmp.ne.s32.totalorder %s177, %s191
    %p193 = scmp.eq.s32.totalorder %s26, 0
    %p194 = por %p192, %p193
    %s196 = sadd.s32 %s195, 1
    %p199 = scmp.eq.s32.totalorder %s20, 1
    %p200 = scmp.ne.s32.totalorder %s195, %s197
    %p201 = scmp.eq.s32.totalorder %s20, 0
    %p202 = por %p200, %p201
    %p203 = scmp.ne.s32.totalorder %s195, %s197
    %p204 = scmp.eq.s32.totalorder %s25, 1
    %p205 = por %p203, %p204
    %p206 = scmp.ne.s32.totalorder %s197, %s198
    %p207 = scmp.eq.s32.totalorder %s25, 0
    %p208 = por %p206, %p207
    %p209 = scmp.ne.s32.totalorder %s197, %s198
    %p210 = scmp.eq.s32.totalorder %s26, 1
    %p211 = por %p209, %p210
    %p213 = scmp.ne.s32.totalorder %s198, %s212
    %p214 = scmp.eq.s32.totalorder %s26, 0
    %p215 = por %p213, %p214
    %s217 = sadd.s32 %s216, 1
    %p220 = scmp.eq.s32.totalorder %s20, 1
    %p221 = scmp.ne.s32.totalorder %s216, %s218
    %p222 = scmp.eq.s32.totalorder %s20, 0
    %p223 = por %p221, %p222
    %p224 = scmp.ne.s32.totalorder %s216, %s218
    %p225 = scmp.eq.s32.totalorder %s25, 1
    %p226 = por %p224, %p225
    %p227 = scmp.ne.s32.totalorder %s218, %s219
    %p228 = scmp.eq.s32.totalorder %s25, 0
    %p229 = por %p227, %p228
    %p230 = scmp.ne.s32.totalorder %s218, %s219
    %p231 = scmp.eq.s32.totalorder %s26, 1
    %p232 = por %p230, %p231
    %p234 = scmp.ne.s32.totalorder %s219, %s233
    %p235 = scmp.eq.s32.totalorder %s26, 0
    %p236 = por %p234, %p235
    %s238 = sadd.s32 %s237, 1
    %p241 = scmp.eq.s32.totalorder %s20, 1
    %p242 = scmp.ne.s32.totalorder %s237, %s239
    %p243 = scmp.eq.s32.totalorder %s20, 0
    %p244 = por %p242, %p243
    %p245 = scmp.ne.s32.totalorder %s237, %s239
    %p246 = scmp.eq.s32.totalorder %s25, 1
    %p247 = por %p245, %p246
    %p248 = scmp.ne.s32.totalorder %s239, %s240
    %p249 = scmp.eq.s32.totalorder %s25, 0
    %p250 = por %p248, %p249
    %p251 = scmp.ne.s32.totalorder %s239, %s240
    %p252 = scmp.eq.s32.totalorder %s26, 1
    %p253 = por %p251, %p252
    %p255 = scmp.ne.s32.totalorder %s240, %s254
    %p256 = scmp.eq.s32.totalorder %s26, 0
    %p257 = por %p255, %p256
    %s259 = sadd.s32 %s258, 1
    %p262 = scmp.eq.s32.totalorder %s20, 1
    %p263 = scmp.ne.s32.totalorder %s258, %s260
    %p264 = scmp.eq.s32.totalorder %s20, 0
    %p265 = por %p263, %p264
    %p266 = scmp.ne.s32.totalorder %s258, %s260
    %p267 = scmp.eq.s32.totalorder %s25, 1
    %p268 = por %p266, %p267
    %p269 = scmp.ne.s32.totalorder %s260, %s261
    %p270 = scmp.eq.s32.totalorder %s25, 0
    %p271 = por %p269, %p270
    %p272 = scmp.ne.s32.totalorder %s260, %s261
    %p273 = scmp.eq.s32.totalorder %s26, 1
    %p274 = por %p272, %p273
    %p276 = scmp.ne.s32.totalorder %s261, %s275
    %p277 = scmp.eq.s32.totalorder %s26, 0
    %p278 = por %p276, %p277
    %s280 = sadd.s32 %s279, 1
    %p283 = scmp.eq.s32.totalorder %s20, 1
    %p284 = scmp.ne.s32.totalorder %s279, %s281
    %p285 = scmp.eq.s32.totalorder %s20, 0
    %p286 = por %p284, %p285
    %p287 = scmp.ne.s32.totalorder %s279, %s281
    %p288 = scmp.eq.s32.totalorder %s25, 1
    %p289 = por %p287, %p288
    %p290 = scmp.ne.s32.totalorder %s281, %s282
    %p291 = scmp.eq.s32.totalorder %s25, 0
    %p292 = por %p290, %p291
    %p293 = scmp.ne.s32.totalorder %s281, %s282
    %p294 = scmp.eq.s32.totalorder %s26, 1
    %p295 = por %p293, %p294
    %p297 = scmp.ne.s32.totalorder %s282, %s296
    %p298 = scmp.eq.s32.totalorder %s26, 0
    %p299 = por %p297, %p298
    %s301 = sadd.s32 %s300, 1
    %p304 = scmp.eq.s32.totalorder %s20, 1
    %p305 = scmp.ne.s32.totalorder %s300, %s302
    %p306 = scmp.eq.s32.totalorder %s20, 0
    %p307 = por %p305, %p306
    %p308 = scmp.ne.s32.totalorder %s300, %s302
    %p309 = scmp.eq.s32.totalorder %s25, 1
    %p310 = por %p308, %p309
    %p311 = scmp.ne.s32.totalorder %s302, %s303
    %p312 = scmp.eq.s32.totalorder %s25, 0
    %p313 = por %p311, %p312
    %p314 = scmp.ne.s32.totalorder %s302, %s303
    %p315 = scmp.eq.s32.totalorder %s26, 1
    %p316 = por %p314, %p315
    %p318 = scmp.ne.s32.totalorder %s303, %s317
    %p319 = scmp.eq.s32.totalorder %s26, 0
    %p320 = por %p318, %p319
    %s322 = sadd.s32 %s321, 1
    %p325 = scmp.eq.s32.totalorder %s20, 1
    %p326 = scmp.ne.s32.totalorder %s321, %s323
    %p327 = scmp.eq.s32.totalorder %s20, 0
    %p328 = por %p326, %p327
    %p329 = scmp.ne.s32.totalorder %s321, %s323
    %p330 = scmp.eq.s32.totalorder %s25, 1
    %p331 = por %p329, %p330
    %p332 = scmp.ne.s32.totalorder %s323, %s324
    %p333 = scmp.eq.s32.totalorder %s25, 0
    %p334 = por %p332, %p333
    %p335 = scmp.ne.s32.totalorder %s323, %s324
    %p336 = scmp.eq.s32.totalorder %s26, 1
    %p337 = por %p335, %p336
    %p339 = scmp.ne.s32.totalorder %s324, %s338
    %p340 = scmp.eq.s32.totalorder %s26, 0
    %p341 = por %p339, %p340
    %s342 = ssub.s32 %s20, %s27
    %p343 = scmp.eq.s32.totalorder %s342, 0
    %s345 = sadd.s32 %s344, 1
    %s346 = scalar_select %p343, %s344, %s345
    %p349 = pneg %p343
    %p350 = scmp.eq.s32.totalorder %s20, 1
    %p351 = por %p349, %p350
    %p352 = scmp.ne.s32.totalorder %s344, %s347
    %p353 = scmp.eq.s32.totalorder %s20, 0
    %p354 = por %p352, %p353
    %p355 = scmp.ne.s32.totalorder %s344, %s347
    %p356 = scmp.eq.s32.totalorder %s25, 1
    %p357 = por %p355, %p356
    %p358 = scmp.ne.s32.totalorder %s347, %s348
    %p359 = scmp.eq.s32.totalorder %s25, 0
    %p360 = por %p358, %p359
    %p361 = scmp.ne.s32.totalorder %s347, %s348
    %p362 = scmp.eq.s32.totalorder %s26, 1
    %p363 = por %p361, %p362
    %p365 = scmp.ne.s32.totalorder %s348, %s364
    %p366 = scmp.eq.s32.totalorder %s26, 0
    %p367 = por %p365, %p366
    %p368 = scmp.le.s32.totalorder 1, %s20
    %p369 = scmp.lt.s32.totalorder %s20, 3
    %p370 = pnand %p368, %p369
    %p371 = pneg %p370
    // Predicated region
    $region9: #{edge_model_ltp_forward.1} parent=5 // pred_check
      _
    $region10: #{edge_model_ltp_forward.1} parent=5 // pred_check_branch
      %373 = sbr.rel (%p370) target = $region12
    $region11: #{edge_model_ltp_forward.1} parent=5 // pred_region
      %s374 = ssub.s32 %s20, 1
      // Predicated region
      $region13: #{edge_model_ltp_forward.1} parent=11 // pred_check
        %p375 = pneg %p145
      $region14: #{edge_model_ltp_forward.1} parent=11 // pred_check_branch
        %377 = sbr.rel (%p375) target = $region16
      $region15: #{edge_model_ltp_forward.1} parent=11 // pred_region
        _
      $region16: #{edge_model_ltp_forward.1} parent=11 // pred_fallthru
        _
      // Predicated region
      $region17: #{edge_model_ltp_forward.1} parent=11 // pred_check
        %p378 = pneg %p166
      $region18: #{edge_model_ltp_forward.1} parent=11 // pred_check_branch
        %380 = sbr.rel (%p378) target = $region20
      $region19: #{edge_model_ltp_forward.1} parent=11 // pred_region
        _
      $region20: #{edge_model_ltp_forward.1} parent=11 // pred_fallthru
        _
      // Predicated region
      $region21: #{edge_model_ltp_forward.1} parent=11 // pred_check
        %p381 = pneg %p187
      $region22: #{edge_model_ltp_forward.1} parent=11 // pred_check_branch
        %383 = sbr.rel (%p381) target = $region24
      $region23: #{edge_model_ltp_forward.1} parent=11 // pred_region
        _
      $region24: #{edge_model_ltp_forward.1} parent=11 // pred_fallthru
        _
      // Predicated region
      $region25: #{edge_model_ltp_forward.1} parent=11 // pred_check
        %p384 = pneg %p208
      $region26: #{edge_model_ltp_forward.1} parent=11 // pred_check_branch
        %386 = sbr.rel (%p384) target = $region28
      $region27: #{edge_model_ltp_forward.1} parent=11 // pred_region
        _
      $region28: #{edge_model_ltp_forward.1} parent=11 // pred_fallthru
        _
      // Predicated region
      $region29: #{edge_model_ltp_forward.1} parent=11 // pred_check
        %p387 = pneg %p229
      $region30: #{edge_model_ltp_forward.1} parent=11 // pred_check_branch
        %389 = sbr.rel (%p387) target = $region32
      $region31: #{edge_model_ltp_forward.1} parent=11 // pred_region
        _
      $region32: #{edge_model_ltp_forward.1} parent=11 // pred_fallthru
        _
      // Predicated region
      $region33: #{edge_model_ltp_forward.1} parent=11 // pred_check
        %p390 = pneg %p250
      $region34: #{edge_model_ltp_forward.1} parent=11 // pred_check_branch
        %392 = sbr.rel (%p390) target = $region36
      $region35: #{edge_model_ltp_forward.1} parent=11 // pred_region
        _
      $region36: #{edge_model_ltp_forward.1} parent=11 // pred_fallthru
        _
      // Predicated region
      $region37: #{edge_model_ltp_forward.1} parent=11 // pred_check
        %p393 = pneg %p271
      $region38: #{edge_model_ltp_forward.1} parent=11 // pred_check_branch
        %395 = sbr.rel (%p393) target = $region40
      $region39: #{edge_model_ltp_forward.1} parent=11 // pred_region
        _
      $region40: #{edge_model_ltp_forward.1} parent=11 // pred_fallthru
        _
      // Predicated region
      $region41: #{edge_model_ltp_forward.1} parent=11 // pred_check
        %p396 = pneg %p292
      $region42: #{edge_model_ltp_forward.1} parent=11 // pred_check_branch
        %398 = sbr.rel (%p396) target = $region44
      $region43: #{edge_model_ltp_forward.1} parent=11 // pred_region
        _
      $region44: #{edge_model_ltp_forward.1} parent=11 // pred_fallthru
        _
      // Predicated region
      $region45: #{edge_model_ltp_forward.1} parent=11 // pred_check
        %p399 = pneg %p313
      $region46: #{edge_model_ltp_forward.1} parent=11 // pred_check_branch
        %401 = sbr.rel (%p399) target = $region48
      $region47: #{edge_model_ltp_forward.1} parent=11 // pred_region
        _
      $region48: #{edge_model_ltp_forward.1} parent=11 // pred_fallthru
        _
      // Predicated region
      $region49: #{edge_model_ltp_forward.1} parent=11 // pred_check
        %p402 = pneg %p334
      $region50: #{edge_model_ltp_forward.1} parent=11 // pred_check_branch
        %404 = sbr.rel (%p402) target = $region52
      $region51: #{edge_model_ltp_forward.1} parent=11 // pred_region
        _
      $region52: #{edge_model_ltp_forward.1} parent=11 // pred_fallthru
        _
    $region12: #{edge_model_ltp_forward.1} parent=5 // pred_fallthru
      _
    %p405 = scmp.lt.s32.totalorder %s20, 2
    // Predicated region
    $region53: #{edge_model_ltp_forward.1} parent=5 // pred_check
      %p406 = pneg %p405
    $region54: #{edge_model_ltp_forward.1} parent=5 // pred_check_branch
      %408 = sbr.rel (%p406) target = $region56
    $region55: #{edge_model_ltp_forward.1} parent=5 // pred_region
      // Predicated region
      $region57: #{edge_model_ltp_forward.1} parent=55 // pred_check
        %p409 = pneg %p40
      $region58: #{edge_model_ltp_forward.1} parent=55 // pred_check_branch
        %411 = sbr.rel (%p409) target = $region60
      $region59: #{edge_model_ltp_forward.1} parent=55 // pred_region
        %s412 = smul.u32 32, %s20
        %p413 = scmp.lt.s32.totalorder %s412, 63
        %s414 = scalar_select %p413, %s412, 63
        %s415 = smul.addr %s414, 2
        %s416 = smul.addr %s415, 8
        %s417 = scalar_lea.vmem %s0, %s416
        %s418 = smul.u32 32, %s20
      $region60: #{edge_model_ltp_forward.1} parent=55 // pred_fallthru
        _
      // Predicated region
      $region61: #{edge_model_ltp_forward.1} parent=55 // pred_check
        %p419 = pneg %p66
      $region62: #{edge_model_ltp_forward.1} parent=55 // pred_check_branch
        %421 = sbr.rel (%p419) target = $region64
      $region63: #{edge_model_ltp_forward.1} parent=55 // pred_region
        %s422 = smul.u32 32, %s20
        %p423 = scmp.lt.s32.totalorder %s422, 63
        %s424 = scalar_select %p423, %s422, 63
        %s425 = smul.addr %s424, 2
        %s426 = smul.addr %s425, 8
        %s427 = scalar_lea.vmem %s1, %s426
        %s428 = smul.u32 32, %s20
      $region64: #{edge_model_ltp_forward.1} parent=55 // pred_fallthru
        _
      // Predicated region
      $region65: #{edge_model_ltp_forward.1} parent=55 // pred_check
        %p429 = pneg %p92
      $region66: #{edge_model_ltp_forward.1} parent=55 // pred_check_branch
        %431 = sbr.rel (%p429) target = $region68
      $region67: #{edge_model_ltp_forward.1} parent=55 // pred_region
        %s432 = smul.u32 32, %s20
        %p433 = scmp.lt.s32.totalorder %s432, 63
        %s434 = scalar_select %p433, %s432, 63
        %s435 = smul.addr %s434, 2
        %s436 = smul.addr %s435, 8
        %s437 = scalar_lea.vmem %s2, %s436
        %s438 = smul.u32 32, %s20
      $region68: #{edge_model_ltp_forward.1} parent=55 // pred_fallthru
        _
      // Predicated region
      $region69: #{edge_model_ltp_forward.1} parent=55 // pred_check
        %p439 = pneg %p118
      $region70: #{edge_model_ltp_forward.1} parent=55 // pred_check_branch
        %441 = sbr.rel (%p439) target = $region72
      $region71: #{edge_model_ltp_forward.1} parent=55 // pred_region
        %s442 = smul.u32 32, %s20
        %p443 = scmp.lt.s32.totalorder %s442, 63
        %s444 = scalar_select %p443, %s442, 63
        %s445 = smul.addr %s444, 2
        %s446 = smul.addr %s445, 8
        %s447 = scalar_lea.vmem %s3, %s446
        %s448 = smul.u32 32, %s20
      $region72: #{edge_model_ltp_forward.1} parent=55 // pred_fallthru
        _
    $region56: #{edge_model_ltp_forward.1} parent=5 // pred_fallthru
      _
    %p449 = scmp.le.s32.totalorder 1, %s20
    %p450 = scmp.lt.s32.totalorder %s20, 3
    %p451 = pnand %p449, %p450
    %p452 = pneg %p451
    // Predicated region
    $region73: #{edge_model_ltp_forward.1} parent=5 // pred_check
      _
    $region74: #{edge_model_ltp_forward.1} parent=5 // pred_check_branch
      %454 = sbr.rel (%p451) target = $region76
    $region75: #{edge_model_ltp_forward.1} parent=5 // pred_region
      %s455 = ssub.s32 %s20, 1
      %s456 = smul.u32 32, %s25
      %p457 = scmp.lt.s32.totalorder %s456, 63
      %s458 = scalar_select %p457, %s456, 63
      %s459 = smul.addr %s458, 2
      %s460 = smul.addr %s459, 8
      %s461 = scalar_lea.vmem %s0, %s460
      %p462 = pneg %p46
      %p463 = pneg %p43
      %s464 = smul.u32 32, %s25
      %p465 = scmp.lt.s32.totalorder %s464, 63
      %s466 = scalar_select %p465, %s464, 63
      %s467 = smul.addr %s466, 2
      %s468 = smul.addr %s467, 8
      %s469 = scalar_lea.vmem %s1, %s468
      %p470 = pneg %p72
      %p471 = pneg %p69
      %s472 = smul.u32 32, %s25
      %p473 = scmp.lt.s32.totalorder %s472, 63
      %s474 = scalar_select %p473, %s472, 63
      %s475 = smul.addr %s474, 2
      %s476 = smul.addr %s475, 8
      %s477 = scalar_lea.vmem %s2, %s476
      %p478 = pneg %p98
      %p479 = pneg %p95
      %s480 = smul.u32 32, %s25
      %p481 = scmp.lt.s32.totalorder %s480, 63
      %s482 = scalar_select %p481, %s480, 63
      %s483 = smul.addr %s482, 2
      %s484 = smul.addr %s483, 8
      %s485 = scalar_lea.vmem %s3, %s484
      %p486 = pneg %p124
      %p487 = pneg %p121
      %p488 = pneg %p145
      %p489 = pneg %p142
      %p490 = pneg %p166
      %p491 = pneg %p163
      %p492 = pneg %p187
      %p493 = pneg %p184
      %p494 = pneg %p208
      %p495 = pneg %p205
      %p496 = pneg %p229
      %p497 = pneg %p226
      %p498 = pneg %p250
      %p499 = pneg %p247
      %p500 = pneg %p271
      %p501 = pneg %p268
      %p502 = pneg %p292
      %p503 = pneg %p289
      %p504 = pneg %p313
      %p505 = pneg %p310
      %p506 = pneg %p334
      %p507 = pneg %p331
      %p508 = pneg %p360
      %p509 = pneg %p357
      %s510 = smul.u32 32, %s25
      %p511 = scmp.lt.s32.totalorder %s510, 63
      %s512 = scalar_select %p511, %s510, 63
      %s513 = smul.addr %s512, 8
      %s514 = scalar_lea.vmem %s14, %s513
      %s515 = smul.u32 32, %s25
      %p516 = scmp.lt.s32.totalorder %s515, 63
      %s517 = scalar_select %p516, %s515, 63
      %s518 = smul.addr %s517, 2
      %s519 = smul.addr %s518, 8
      %s520 = scalar_lea.vmem %s0, %s519
      %s521 = smul.u32 32, %s25
      %s522 = smul.u32 32, %s25
      %p523 = scmp.lt.s32.totalorder %s522, 63
      %s524 = scalar_select %p523, %s522, 63
      %s525 = smul.addr %s524, 2
      %s526 = smul.addr %s525, 8
      %s527 = scalar_lea.vmem %s1, %s526
      %s528 = smul.u32 32, %s25
      %s529 = smul.u32 32, %s25
      %p530 = scmp.lt.s32.totalorder %s529, 63
      %s531 = scalar_select %p530, %s529, 63
      %s532 = smul.addr %s531, 2
      %s533 = smul.addr %s532, 8
      %s534 = scalar_lea.vmem %s2, %s533
      %s535 = smul.u32 32, %s25
      %s536 = smul.u32 32, %s25
      %p537 = scmp.lt.s32.totalorder %s536, 63
      %s538 = scalar_select %p537, %s536, 63
      %s539 = smul.addr %s538, 2
      %s540 = smul.addr %s539, 8
      %s541 = scalar_lea.vmem %s3, %s540
      %s542 = smul.u32 32, %s25
      %s543 = smul.u32 32, %s25
      %p544 = scmp.lt.s32.totalorder %s543, 63
      %s545 = scalar_select %p544, %s543, 63
      %s546 = smul.addr %s545, 8
      %s547 = scalar_lea.vmem %s14, %s546
      %s548 = smul.u32 32, %s25
      %v550 = vld [vmem:[%s520] sm:$0xff]
      %v551 = vld [vmem:[%s520 + $0x8] sm:$0xff]
      %v552 = vld [vmem:[%s520 + $0x10] sm:$0xff]
      %v553 = vld [vmem:[%s520 + $0x18] sm:$0xff]
      %v554 = vld [vmem:[%s520 + $0x20] sm:$0xff]
      %v555 = vld [vmem:[%s520 + $0x28] sm:$0xff]
      %v556 = vld [vmem:[%s520 + $0x30] sm:$0xff]
      %v557 = vld [vmem:[%s520 + $0x38] sm:$0xff]
      %v558 = vld [vmem:[%s520 + $0x40] sm:$0xff]
      %v559 = vld [vmem:[%s520 + $0x48] sm:$0xff]
      %v560 = vld [vmem:[%s520 + $0x50] sm:$0xff]
      %v561 = vld [vmem:[%s520 + $0x58] sm:$0xff]
      %v562 = vld [vmem:[%s520 + $0x60] sm:$0xff]
      %v563 = vld [vmem:[%s520 + $0x68] sm:$0xff]
      %v564 = vld [vmem:[%s520 + $0x70] sm:$0xff]
      %v565 = vld [vmem:[%s520 + $0x78] sm:$0xff]
      %v566 = vld [vmem:[%s520 + $0x80] sm:$0xff]
      %v567 = vld [vmem:[%s520 + $0x88] sm:$0xff]
      %v568 = vld [vmem:[%s520 + $0x90] sm:$0xff]
      %v569 = vld [vmem:[%s520 + $0x98] sm:$0xff]
      %v570 = vld [vmem:[%s520 + $0xa0] sm:$0xff]
      %v571 = vld [vmem:[%s520 + $0xa8] sm:$0xff]
      %v572 = vld [vmem:[%s520 + $0xb0] sm:$0xff]
      %v573 = vld [vmem:[%s520 + $0xb8] sm:$0xff]
      %v574 = vld [vmem:[%s520 + $0xc0] sm:$0xff]
      %v575 = vld [vmem:[%s520 + $0xc8] sm:$0xff]
      %v576 = vld [vmem:[%s520 + $0xd0] sm:$0xff]
      %v577 = vld [vmem:[%s520 + $0xd8] sm:$0xff]
      %v578 = vld [vmem:[%s520 + $0xe0] sm:$0xff]
      %v579 = vld [vmem:[%s520 + $0xe8] sm:$0xff]
      %v580 = vld [vmem:[%s520 + $0xf0] sm:$0xff]
      %v581 = vld [vmem:[%s520 + $0xf8] sm:$0xff]
      %v582 = vld [vmem:[%s520 + $0x100] sm:$0xff]
      %v583 = vld [vmem:[%s520 + $0x108] sm:$0xff]
      %v584 = vld [vmem:[%s520 + $0x110] sm:$0xff]
      %v585 = vld [vmem:[%s520 + $0x118] sm:$0xff]
      %v586 = vld [vmem:[%s520 + $0x120] sm:$0xff]
      %v587 = vld [vmem:[%s520 + $0x128] sm:$0xff]
      %v588 = vld [vmem:[%s520 + $0x130] sm:$0xff]
      %v589 = vld [vmem:[%s520 + $0x138] sm:$0xff]
      %v590 = vld [vmem:[%s520 + $0x140] sm:$0xff]
      %v591 = vld [vmem:[%s520 + $0x148] sm:$0xff]
      %v592 = vld [vmem:[%s520 + $0x150] sm:$0xff]
      %v593 = vld [vmem:[%s520 + $0x158] sm:$0xff]
      %v594 = vld [vmem:[%s520 + $0x160] sm:$0xff]
      %v595 = vld [vmem:[%s520 + $0x168] sm:$0xff]
      %v596 = vld [vmem:[%s520 + $0x170] sm:$0xff]
      %v597 = vld [vmem:[%s520 + $0x178] sm:$0xff]
      %v598 = vld [vmem:[%s520 + $0x180] sm:$0xff]
      %v599 = vld [vmem:[%s520 + $0x188] sm:$0xff]
      %v600 = vld [vmem:[%s520 + $0x190] sm:$0xff]
      %v601 = vld [vmem:[%s520 + $0x198] sm:$0xff]
      %v602 = vld [vmem:[%s520 + $0x1a0] sm:$0xff]
      %v603 = vld [vmem:[%s520 + $0x1a8] sm:$0xff]
      %v604 = vld [vmem:[%s520 + $0x1b0] sm:$0xff]
      %v605 = vld [vmem:[%s520 + $0x1b8] sm:$0xff]
      %v606 = vld [vmem:[%s520 + $0x1c0] sm:$0xff]
      %v607 = vld [vmem:[%s520 + $0x1c8] sm:$0xff]
      %v608 = vld [vmem:[%s520 + $0x1d0] sm:$0xff]
      %v609 = vld [vmem:[%s520 + $0x1d8] sm:$0xff]
      %v610 = vld [vmem:[%s520 + $0x1e0] sm:$0xff]
      %v611 = vld [vmem:[%s520 + $0x1e8] sm:$0xff]
      %v612 = vld [vmem:[%s520 + $0x1f0] sm:$0xff]
      %v613 = vld [vmem:[%s520 + $0x1f8] sm:$0xff]
      %v614 = vpack.c.bf16 %v552, %v550
      %v615 = vpack.c.bf16 %v553, %v551
      %v616 = vpack.c.bf16 %v556, %v554
      %v617 = vpack.c.bf16 %v557, %v555
      %v618 = vpack.c.bf16 %v560, %v558
      %v619 = vpack.c.bf16 %v561, %v559
      %v620 = vpack.c.bf16 %v564, %v562
      %v621 = vpack.c.bf16 %v565, %v563
      %v622 = vpack.c.bf16 %v568, %v566
      %v623 = vpack.c.bf16 %v569, %v567
      %v624 = vpack.c.bf16 %v572, %v570
      %v625 = vpack.c.bf16 %v573, %v571
      %v626 = vpack.c.bf16 %v576, %v574
      %v627 = vpack.c.bf16 %v577, %v575
      %v628 = vpack.c.bf16 %v580, %v578
      %v629 = vpack.c.bf16 %v581, %v579
      %v630 = vpack.c.bf16 %v584, %v582
      %v631 = vpack.c.bf16 %v585, %v583
      %v632 = vpack.c.bf16 %v588, %v586
      %v633 = vpack.c.bf16 %v589, %v587
      %v634 = vpack.c.bf16 %v592, %v590
      %v635 = vpack.c.bf16 %v593, %v591
      %v636 = vpack.c.bf16 %v596, %v594
      %v637 = vpack.c.bf16 %v597, %v595
      %v638 = vpack.c.bf16 %v600, %v598
      %v639 = vpack.c.bf16 %v601, %v599
      %v640 = vpack.c.bf16 %v604, %v602
      %v641 = vpack.c.bf16 %v605, %v603
      %v642 = vpack.c.bf16 %v608, %v606
      %v643 = vpack.c.bf16 %v609, %v607
      %v644 = vpack.c.bf16 %v612, %v610
      %v645 = vpack.c.bf16 %v613, %v611
      %v646 = vld [vmem:[%s4] sm:$0xf]
      %v647 = vld [vmem:[%s4 + $0x4] sm:$0xf]
      %v648 = vld [vmem:[%s4 + $0x8] sm:$0xf]
      %v649 = vld [vmem:[%s4 + $0xc] sm:$0xf]
      %v650 = vld [vmem:[%s4 + $0x10] sm:$0xf]
      %v651 = vld [vmem:[%s4 + $0x14] sm:$0xf]
      %v652 = vld [vmem:[%s4 + $0x18] sm:$0xf]
      %v653 = vld [vmem:[%s4 + $0x1c] sm:$0xf]
      %v654 = vld [vmem:[%s4 + $0x20] sm:$0xf]
      %v655 = vld [vmem:[%s4 + $0x24] sm:$0xf]
      %v656 = vld [vmem:[%s4 + $0x28] sm:$0xf]
      %v657 = vld [vmem:[%s4 + $0x2c] sm:$0xf]
      %v658 = vld [vmem:[%s4 + $0x30] sm:$0xf]
      %v659 = vld [vmem:[%s4 + $0x34] sm:$0xf]
      %v660 = vld [vmem:[%s4 + $0x38] sm:$0xf]
      %v661 = vld [vmem:[%s4 + $0x3c] sm:$0xf]
      %v662 = vld [vmem:[%s4 + $0x40] sm:$0xf]
      %v663 = vld [vmem:[%s4 + $0x44] sm:$0xf]
      %v664 = vld [vmem:[%s4 + $0x48] sm:$0xf]
      %v665 = vld [vmem:[%s4 + $0x4c] sm:$0xf]
      %v666 = vld [vmem:[%s4 + $0x50] sm:$0xf]
      %v667 = vld [vmem:[%s4 + $0x54] sm:$0xf]
      %v668 = vld [vmem:[%s4 + $0x58] sm:$0xf]
      %v669 = vld [vmem:[%s4 + $0x5c] sm:$0xf]
      %v670 = vld [vmem:[%s4 + $0x60] sm:$0xf]
      %v671 = vld [vmem:[%s4 + $0x64] sm:$0xf]
      %v672 = vld [vmem:[%s4 + $0x68] sm:$0xf]
      %v673 = vld [vmem:[%s4 + $0x6c] sm:$0xf]
      %v674 = vld [vmem:[%s4 + $0x70] sm:$0xf]
      %v675 = vld [vmem:[%s4 + $0x74] sm:$0xf]
      %v676 = vld [vmem:[%s4 + $0x78] sm:$0xf]
      %v677 = vld [vmem:[%s4 + $0x7c] sm:$0xf]
      %v678 = vld [vmem:[%s527] sm:$0xff]
      %v679 = vld [vmem:[%s527 + $0x8] sm:$0xff]
      %v680 = vld [vmem:[%s527 + $0x10] sm:$0xff]
      %v681 = vld [vmem:[%s527 + $0x18] sm:$0xff]
      %v682 = vld [vmem:[%s527 + $0x20] sm:$0xff]
      %v683 = vld [vmem:[%s527 + $0x28] sm:$0xff]
      %v684 = vld [vmem:[%s527 + $0x30] sm:$0xff]
      %v685 = vld [vmem:[%s527 + $0x38] sm:$0xff]
      %v686 = vld [vmem:[%s527 + $0x40] sm:$0xff]
      %v687 = vld [vmem:[%s527 + $0x48] sm:$0xff]
      %v688 = vld [vmem:[%s527 + $0x50] sm:$0xff]
      %v689 = vld [vmem:[%s527 + $0x58] sm:$0xff]
      %v690 = vld [vmem:[%s527 + $0x60] sm:$0xff]
      %v691 = vld [vmem:[%s527 + $0x68] sm:$0xff]
      %v692 = vld [vmem:[%s527 + $0x70] sm:$0xff]
      %v693 = vld [vmem:[%s527 + $0x78] sm:$0xff]
      %v694 = vld [vmem:[%s527 + $0x80] sm:$0xff]
      %v695 = vld [vmem:[%s527 + $0x88] sm:$0xff]
      %v696 = vld [vmem:[%s527 + $0x90] sm:$0xff]
      %v697 = vld [vmem:[%s527 + $0x98] sm:$0xff]
      %v698 = vld [vmem:[%s527 + $0xa0] sm:$0xff]
      %v699 = vld [vmem:[%s527 + $0xa8] sm:$0xff]
      %v700 = vld [vmem:[%s527 + $0xb0] sm:$0xff]
      %v701 = vld [vmem:[%s527 + $0xb8] sm:$0xff]
      %v702 = vld [vmem:[%s527 + $0xc0] sm:$0xff]
      %v703 = vld [vmem:[%s527 + $0xc8] sm:$0xff]
      %v704 = vld [vmem:[%s527 + $0xd0] sm:$0xff]
      %v705 = vld [vmem:[%s527 + $0xd8] sm:$0xff]
      %v706 = vld [vmem:[%s527 + $0xe0] sm:$0xff]
      %v707 = vld [vmem:[%s527 + $0xe8] sm:$0xff]
      %v708 = vld [vmem:[%s527 + $0xf0] sm:$0xff]
      %v709 = vld [vmem:[%s527 + $0xf8] sm:$0xff]
      %v710 = vld [vmem:[%s527 + $0x100] sm:$0xff]
      %v711 = vld [vmem:[%s527 + $0x108] sm:$0xff]
      %v712 = vld [vmem:[%s527 + $0x110] sm:$0xff]
      %v713 = vld [vmem:[%s527 + $0x118] sm:$0xff]
      %v714 = vld [vmem:[%s527 + $0x120] sm:$0xff]
      %v715 = vld [vmem:[%s527 + $0x128] sm:$0xff]
      %v716 = vld [vmem:[%s527 + $0x130] sm:$0xff]
      %v717 = vld [vmem:[%s527 + $0x138] sm:$0xff]
      %v718 = vld [vmem:[%s527 + $0x140] sm:$0xff]
      %v719 = vld [vmem:[%s527 + $0x148] sm:$0xff]
      %v720 = vld [vmem:[%s527 + $0x150] sm:$0xff]
      %v721 = vld [vmem:[%s527 + $0x158] sm:$0xff]
      %v722 = vld [vmem:[%s527 + $0x160] sm:$0xff]
      %v723 = vld [vmem:[%s527 + $0x168] sm:$0xff]
      %v724 = vld [vmem:[%s527 + $0x170] sm:$0xff]
      %v725 = vld [vmem:[%s527 + $0x178] sm:$0xff]
      %v726 = vld [vmem:[%s527 + $0x180] sm:$0xff]
      %v727 = vld [vmem:[%s527 + $0x188] sm:$0xff]
      %v728 = vld [vmem:[%s527 + $0x190] sm:$0xff]
      %v729 = vld [vmem:[%s527 + $0x198] sm:$0xff]
      %v730 = vld [vmem:[%s527 + $0x1a0] sm:$0xff]
      %v731 = vld [vmem:[%s527 + $0x1a8] sm:$0xff]
      %v732 = vld [vmem:[%s527 + $0x1b0] sm:$0xff]
      %v733 = vld [vmem:[%s527 + $0x1b8] sm:$0xff]
      %v734 = vld [vmem:[%s527 + $0x1c0] sm:$0xff]
      %v735 = vld [vmem:[%s527 + $0x1c8] sm:$0xff]
      %v736 = vld [vmem:[%s527 + $0x1d0] sm:$0xff]
      %v737 = vld [vmem:[%s527 + $0x1d8] sm:$0xff]
      %v738 = vld [vmem:[%s527 + $0x1e0] sm:$0xff]
      %v739 = vld [vmem:[%s527 + $0x1e8] sm:$0xff]
      %v740 = vld [vmem:[%s527 + $0x1f0] sm:$0xff]
      %v741 = vld [vmem:[%s527 + $0x1f8] sm:$0xff]
      %v742 = vpack.c.bf16 %v680, %v678
      %v743 = vpack.c.bf16 %v681, %v679
      %v744 = vpack.c.bf16 %v684, %v682
      %v745 = vpack.c.bf16 %v685, %v683
      %v746 = vpack.c.bf16 %v688, %v686
      %v747 = vpack.c.bf16 %v689, %v687
      %v748 = vpack.c.bf16 %v692, %v690
      %v749 = vpack.c.bf16 %v693, %v691
      %v750 = vpack.c.bf16 %v696, %v694
      %v751 = vpack.c.bf16 %v697, %v695
      %v752 = vpack.c.bf16 %v700, %v698
      %v753 = vpack.c.bf16 %v701, %v699
      %v754 = vpack.c.bf16 %v704, %v702
      %v755 = vpack.c.bf16 %v705, %v703
      %v756 = vpack.c.bf16 %v708, %v706
      %v757 = vpack.c.bf16 %v709, %v707
      %v758 = vpack.c.bf16 %v712, %v710
      %v759 = vpack.c.bf16 %v713, %v711
      %v760 = vpack.c.bf16 %v716, %v714
      %v761 = vpack.c.bf16 %v717, %v715
      %v762 = vpack.c.bf16 %v720, %v718
      %v763 = vpack.c.bf16 %v721, %v719
      %v764 = vpack.c.bf16 %v724, %v722
      %v765 = vpack.c.bf16 %v725, %v723
      %v766 = vpack.c.bf16 %v728, %v726
      %v767 = vpack.c.bf16 %v729, %v727
      %v768 = vpack.c.bf16 %v732, %v730
      %v769 = vpack.c.bf16 %v733, %v731
      %v770 = vpack.c.bf16 %v736, %v734
      %v771 = vpack.c.bf16 %v737, %v735
      %v772 = vpack.c.bf16 %v740, %v738
      %v773 = vpack.c.bf16 %v741, %v739
      %v774 = vld [vmem:[%s5] sm:$0xf]
      %v775 = vld [vmem:[%s5 + $0x4] sm:$0xf]
      %v776 = vld [vmem:[%s5 + $0x8] sm:$0xf]
      %v777 = vld [vmem:[%s5 + $0xc] sm:$0xf]
      %v778 = vld [vmem:[%s5 + $0x10] sm:$0xf]
      %v779 = vld [vmem:[%s5 + $0x14] sm:$0xf]
      %v780 = vld [vmem:[%s5 + $0x18] sm:$0xf]
      %v781 = vld [vmem:[%s5 + $0x1c] sm:$0xf]
      %v782 = vld [vmem:[%s5 + $0x20] sm:$0xf]
      %v783 = vld [vmem:[%s5 + $0x24] sm:$0xf]
      %v784 = vld [vmem:[%s5 + $0x28] sm:$0xf]
      %v785 = vld [vmem:[%s5 + $0x2c] sm:$0xf]
      %v786 = vld [vmem:[%s5 + $0x30] sm:$0xf]
      %v787 = vld [vmem:[%s5 + $0x34] sm:$0xf]
      %v788 = vld [vmem:[%s5 + $0x38] sm:$0xf]
      %v789 = vld [vmem:[%s5 + $0x3c] sm:$0xf]
      %v790 = vld [vmem:[%s5 + $0x40] sm:$0xf]
      %v791 = vld [vmem:[%s5 + $0x44] sm:$0xf]
      %v792 = vld [vmem:[%s5 + $0x48] sm:$0xf]
      %v793 = vld [vmem:[%s5 + $0x4c] sm:$0xf]
      %v794 = vld [vmem:[%s5 + $0x50] sm:$0xf]
      %v795 = vld [vmem:[%s5 + $0x54] sm:$0xf]
      %v796 = vld [vmem:[%s5 + $0x58] sm:$0xf]
      %v797 = vld [vmem:[%s5 + $0x5c] sm:$0xf]
      %v798 = vld [vmem:[%s5 + $0x60] sm:$0xf]
      %v799 = vld [vmem:[%s5 + $0x64] sm:$0xf]
      %v800 = vld [vmem:[%s5 + $0x68] sm:$0xf]
      %v801 = vld [vmem:[%s5 + $0x6c] sm:$0xf]
      %v802 = vld [vmem:[%s5 + $0x70] sm:$0xf]
      %v803 = vld [vmem:[%s5 + $0x74] sm:$0xf]
      %v804 = vld [vmem:[%s5 + $0x78] sm:$0xf]
      %v805 = vld [vmem:[%s5 + $0x7c] sm:$0xf]
      %v838 = vunpack.c.l.b16 %v774
      %v839 = vunpack.c.l.b16 %v775
      %v840 = vunpack.c.l.b16 %v776
      %v841 = vunpack.c.l.b16 %v777
      %v842 = vunpack.c.l.b16 %v778
      %v843 = vunpack.c.l.b16 %v779
      %v844 = vunpack.c.l.b16 %v780
      %v845 = vunpack.c.l.b16 %v781
      %v846 = vunpack.c.l.b16 %v782
      %v847 = vunpack.c.l.b16 %v783
      %v848 = vunpack.c.l.b16 %v784
      %v849 = vunpack.c.l.b16 %v785
      %v850 = vunpack.c.l.b16 %v786
      %v851 = vunpack.c.l.b16 %v787
      %v852 = vunpack.c.l.b16 %v788
      %v853 = vunpack.c.l.b16 %v789
      %v854 = vunpack.c.l.b16 %v790
      %v855 = vunpack.c.l.b16 %v791
      %v856 = vunpack.c.l.b16 %v792
      %v857 = vunpack.c.l.b16 %v793
      %v858 = vunpack.c.l.b16 %v794
      %v859 = vunpack.c.l.b16 %v795
      %v860 = vunpack.c.l.b16 %v796
      %v861 = vunpack.c.l.b16 %v797
      %v862 = vunpack.c.l.b16 %v798
      %v863 = vunpack.c.l.b16 %v799
      %v864 = vunpack.c.l.b16 %v800
      %v865 = vunpack.c.l.b16 %v801
      %v866 = vunpack.c.l.b16 %v802
      %v867 = vunpack.c.l.b16 %v803
      %v868 = vunpack.c.l.b16 %v804
      %v869 = vunpack.c.l.b16 %v805
      %v870 = vpack.c.b16 %v839, %v838
      %v871 = vpack.c.b16 %v841, %v840
      %v872 = vpack.c.b16 %v843, %v842
      %v873 = vpack.c.b16 %v845, %v844
      %v874 = vpack.c.b16 %v847, %v846
      %v875 = vpack.c.b16 %v849, %v848
      %v876 = vpack.c.b16 %v851, %v850
      %v877 = vpack.c.b16 %v853, %v852
      %v878 = vpack.c.b16 %v855, %v854
      %v879 = vpack.c.b16 %v857, %v856
      %v880 = vpack.c.b16 %v859, %v858
      %v881 = vpack.c.b16 %v861, %v860
      %v882 = vpack.c.b16 %v863, %v862
      %v883 = vpack.c.b16 %v865, %v864
      %v884 = vpack.c.b16 %v867, %v866
      %v885 = vpack.c.b16 %v869, %v868
      %902 = vmatprep.subr.bf16.mxu0 0
      %903 = vmatpush1.bf16.msra.mxu0 %v870
      %904 = vmatprep.subr.bf16.mxu0 0
      %905 = vmatpush1.bf16.msra.mxu0 %v871
      %906 = vmatprep.subr.bf16.mxu0 0
      %907 = vmatpush1.bf16.msra.mxu0 %v872
      %908 = vmatprep.subr.bf16.mxu0 0
      %909 = vmatpush1.bf16.msra.mxu0 %v873
      %910 = vmatprep.subr.bf16.mxu0 0
      %911 = vmatpush1.bf16.msra.mxu0 %v874
      %912 = vmatprep.subr.bf16.mxu0 0
      %913 = vmatpush1.bf16.msra.mxu0 %v875
      %914 = vmatprep.subr.bf16.mxu0 0
      %915 = vmatpush1.bf16.msra.mxu0 %v876
      %916 = vmatprep.subr.bf16.mxu0 0
      %917 = vmatpush1.bf16.msra.mxu0 %v877
      %918 = vmatprep.subr.bf16.mxu0 0
      %919 = vmatpush1.bf16.msra.mxu0 %v878
      %920 = vmatprep.subr.bf16.mxu0 0
      %921 = vmatpush1.bf16.msra.mxu0 %v879
      %922 = vmatprep.subr.bf16.mxu0 0
      %923 = vmatpush1.bf16.msra.mxu0 %v880
      %924 = vmatprep.subr.bf16.mxu0 0
      %925 = vmatpush1.bf16.msra.mxu0 %v881
      %926 = vmatprep.subr.bf16.mxu0 0
      %927 = vmatpush1.bf16.msra.mxu0 %v882
      %928 = vmatprep.subr.bf16.mxu0 0
      %929 = vmatpush1.bf16.msra.mxu0 %v883
      %930 = vmatprep.subr.bf16.mxu0 0
      %931 = vmatpush1.bf16.msra.mxu0 %v884
      %932 = vmatprep.subr.bf16.mxu0 0
      %933 = vmatpush1.bf16.msra.mxu0 %v885
      %934 = vmatprep.mubr.bf16.mxu0 %v743
      %935 = vmatmul.mubr.bf16.gmra.mrb[0].mxu0 %v742
      %v936 = vpop.f32.mrb[0].mxu0
      %v937 = vadd.f32 0.0, %v936
      %v938 = vpop.f32.mrb[0].mxu0
      %v939 = vpop.f32.mrb[0].mxu0
      %v940 = vadd.f32 0.0, %v939
      %v941 = vpop.f32.mrb[0].mxu0
      %942 = vmatprep.mubr.bf16.mxu0 %v745
      %943 = vmatmul.mubr.bf16.gmra.mrb[0].mxu0 %v744
      %v944 = vpop.f32.mrb[0].mxu0
      %v945 = vadd.f32 0.0, %v944
      %v946 = vpop.f32.mrb[0].mxu0
      %v947 = vpop.f32.mrb[0].mxu0
      %v948 = vadd.f32 0.0, %v947
      %v949 = vpop.f32.mrb[0].mxu0
      %950 = vmatprep.mubr.bf16.mxu0 %v747
      %951 = vmatmul.mubr.bf16.gmra.mrb[0].mxu0 %v746
      %v952 = vpop.f32.mrb[0].mxu0
      %v953 = vadd.f32 0.0, %v952
      %v954 = vpop.f32.mrb[0].mxu0
      %v955 = vpop.f32.mrb[0].mxu0
      %v956 = vadd.f32 0.0, %v955
      %v957 = vpop.f32.mrb[0].mxu0
      %958 = vmatprep.mubr.bf16.mxu0 %v749
      %959 = vmatmul.mubr.bf16.gmra.mrb[0].mxu0 %v748
      %v960 = vpop.f32.mrb[0].mxu0
      %v961 = vadd.f32 0.0, %v960
      %v962 = vpop.f32.mrb[0].mxu0
      %v963 = vpop.f32.mrb[0].mxu0
      %v964 = vadd.f32 0.0, %v963
      %v965 = vpop.f32.mrb[0].mxu0
      %966 = vmatprep.mubr.bf16.mxu0 %v751
      %967 = vmatmul.mubr.bf16.gmra.mrb[0].mxu0 %v750
      %v968 = vpop.f32.mrb[0].mxu0
      %v969 = vadd.f32 0.0, %v968
      %v970 = vpop.f32.mrb[0].mxu0
      %v971 = vpop.f32.mrb[0].mxu0
      %v972 = vadd.f32 0.0, %v971
      %v973 = vpop.f32.mrb[0].mxu0
      %974 = vmatprep.mubr.bf16.mxu0 %v753
      %975 = vmatmul.mubr.bf16.gmra.mrb[0].mxu0 %v752
      %v976 = vpop.f32.mrb[0].mxu0
      %v977 = vadd.f32 0.0, %v976
      %v978 = vpop.f32.mrb[0].mxu0
      %v979 = vpop.f32.mrb[0].mxu0
      %v980 = vadd.f32 0.0, %v979
      %v981 = vpop.f32.mrb[0].mxu0
      %982 = vmatprep.mubr.bf16.mxu0 %v755
      %983 = vmatmul.mubr.bf16.gmra.mrb[0].mxu0 %v754
      %v984 = vpop.f32.mrb[0].mxu0
      %v985 = vadd.f32 0.0, %v984
      %v986 = vpop.f32.mrb[0].mxu0
      %v987 = vpop.f32.mrb[0].mxu0
      %v988 = vadd.f32 0.0, %v987
      %v989 = vpop.f32.mrb[0].mxu0
      %990 = vmatprep.mubr.bf16.mxu0 %v757
      %991 = vmatmul.mubr.bf16.gmra.mrb[0].mxu0 %v756
      %v992 = vpop.f32.mrb[0].mxu0
      %v993 = vadd.f32 0.0, %v992
      %v994 = vpop.f32.mrb[0].mxu0
      %v995 = vpop.f32.mrb[0].mxu0
      %v996 = vadd.f32 0.0, %v995
      %v997 = vpop.f32.mrb[0].mxu0
      %998 = vmatprep.mubr.bf16.mxu0 %v759
      %999 = vmatmul.mubr.bf16.gmra.mrb[0].mxu0 %v758
      %v1000 = vpop.f32.mrb[0].mxu0
      %v1001 = vadd.f32 0.0, %v1000
      %v1002 = vpop.f32.mrb[0].mxu0
      %v1003 = vpop.f32.mrb[0].mxu0
      %v1004 = vadd.f32 0.0, %v1003
      %v1005 = vpop.f32.mrb[0].mxu0
      %1006 = vmatprep.mubr.bf16.mxu0 %v761
      %1007 = vmatmul.mubr.bf16.gmra.mrb[0].mxu0 %v760
      %v1008 = vpop.f32.mrb[0].mxu0
      %v1009 = vadd.f32 0.0, %v1008
      %v1010 = vpop.f32.mrb[0].mxu0
      %v1011 = vpop.f32.mrb[0].mxu0
      %v1012 = vadd.f32 0.0, %v1011
      %v1013 = vpop.f32.mrb[0].mxu0
      %1014 = vmatprep.mubr.bf16.mxu0 %v763
      %1015 = vmatmul.mubr.bf16.gmra.mrb[0].mxu0 %v762
      %v1016 = vpop.f32.mrb[0].mxu0
      %v1017 = vadd.f32 0.0, %v1016
      %v1018 = vpop.f32.mrb[0].mxu0
      %v1019 = vpop.f32.mrb[0].mxu0
      %v1020 = vadd.f32 0.0, %v1019
      %v1021 = vpop.f32.mrb[0].mxu0
      %1022 = vmatprep.mubr.bf16.mxu0 %v765
      %1023 = vmatmul.mubr.bf16.gmra.mrb[0].mxu0 %v764
      %v1024 = vpop.f32.mrb[0].mxu0
      %v1025 = vadd.f32 0.0, %v1024
      %v1026 = vpop.f32.mrb[0].mxu0
      %v1027 = vpop.f32.mrb[0].mxu0
      %v1028 = vadd.f32 0.0, %v1027
      %v1029 = vpop.f32.mrb[0].mxu0
      %1030 = vmatprep.mubr.bf16.mxu0 %v767
      %1031 = vmatmul.mubr.bf16.gmra.mrb[0].mxu0 %v766
      %v1032 = vpop.f32.mrb[0].mxu0
      %v1033 = vadd.f32 0.0, %v1032
      %v1034 = vpop.f32.mrb[0].mxu0
      %v1035 = vpop.f32.mrb[0].mxu0
      %v1036 = vadd.f32 0.0, %v1035
      %v1037 = vpop.f32.mrb[0].mxu0
      %1038 = vmatprep.mubr.bf16.mxu0 %v769
      %1039 = vmatmul.mubr.bf16.gmra.mrb[0].mxu0 %v768
      %v1040 = vpop.f32.mrb[0].mxu0
      %v1041 = vadd.f32 0.0, %v1040
      %v1042 = vpop.f32.mrb[0].mxu0
      %v1043 = vpop.f32.mrb[0].mxu0
      %v1044 = vadd.f32 0.0, %v1043
      %v1045 = vpop.f32.mrb[0].mxu0
      %1046 = vmatprep.mubr.bf16.mxu0 %v771
      %1047 = vmatmul.mubr.bf16.gmra.mrb[0].mxu0 %v770
      %v1048 = vpop.f32.mrb[0].mxu0
      %v1049 = vadd.f32 0.0, %v1048
      %v1050 = vpop.f32.mrb[0].mxu0
      %v1051 = vpop.f32.mrb[0].mxu0
      %v1052 = vadd.f32 0.0, %v1051
      %v1053 = vpop.f32.mrb[0].mxu0
      %1054 = vmatprep.mubr.bf16.mxu0 %v773
      %1055 = vmatmul.mubr.bf16.gmra.mrb[0].mxu0 %v772
      %v1056 = vpop.f32.mrb[0].mxu0
      %v1057 = vadd.f32 0.0, %v1056
      %v1058 = vpop.f32.mrb[0].mxu0
      %v1059 = vpop.f32.mrb[0].mxu0
      %v1060 = vadd.f32 0.0, %v1059
      %v1061 = vpop.f32.mrb[0].mxu0
      %1062 = vdwg.mxu0
      %v1095 = vunpack.c.l.b16 %v646
      %v1096 = vunpack.c.l.b16 %v647
      %v1097 = vunpack.c.l.b16 %v648
      %v1098 = vunpack.c.l.b16 %v649
      %v1099 = vunpack.c.l.b16 %v650
      %v1100 = vunpack.c.l.b16 %v651
      %v1101 = vunpack.c.l.b16 %v652
      %v1102 = vunpack.c.l.b16 %v653
      %v1103 = vunpack.c.l.b16 %v654
      %v1104 = vunpack.c.l.b16 %v655
      %v1105 = vunpack.c.l.b16 %v656
      %v1106 = vunpack.c.l.b16 %v657
      %v1107 = vunpack.c.l.b16 %v658
      %v1108 = vunpack.c.l.b16 %v659
      %v1109 = vunpack.c.l.b16 %v660
      %v1110 = vunpack.c.l.b16 %v661
      %v1111 = vunpack.c.l.b16 %v662
      %v1112 = vunpack.c.l.b16 %v663
      %v1113 = vunpack.c.l.b16 %v664
      %v1114 = vunpack.c.l.b16 %v665
      %v1115 = vunpack.c.l.b16 %v666
      %v1116 = vunpack.c.l.b16 %v667
      %v1117 = vunpack.c.l.b16 %v668
      %v1118 = vunpack.c.l.b16 %v669
      %v1119 = vunpack.c.l.b16 %v670
      %v1120 = vunpack.c.l.b16 %v671
      %v1121 = vunpack.c.l.b16 %v672
      %v1122 = vunpack.c.l.b16 %v673
      %v1123 = vunpack.c.l.b16 %v674
      %v1124 = vunpack.c.l.b16 %v675
      %v1125 = vunpack.c.l.b16 %v676
      %v1126 = vunpack.c.l.b16 %v677
      %v1127 = vpack.c.b16 %v1096, %v1095
      %v1128 = vpack.c.b16 %v1098, %v1097
      %v1129 = vpack.c.b16 %v1100, %v1099
      %v1130 = vpack.c.b16 %v1102, %v1101
      %v1131 = vpack.c.b16 %v1104, %v1103
      %v1132 = vpack.c.b16 %v1106, %v1105
      %v1133 = vpack.c.b16 %v1108, %v1107
      %v1134 = vpack.c.b16 %v1110, %v1109
      %v1135 = vpack.c.b16 %v1112, %v1111
      %v1136 = vpack.c.b16 %v1114, %v1113
      %v1137 = vpack.c.b16 %v1116, %v1115
      %v1138 = vpack.c.b16 %v1118, %v1117
      %v1139 = vpack.c.b16 %v1120, %v1119
      %v1140 = vpack.c.b16 %v1122, %v1121
      %v1141 = vpack.c.b16 %v1124, %v1123
      %v1142 = vpack.c.b16 %v1126, %v1125
      %1159 = vmatprep.subr.bf16.mxu0 0
      %1160 = vmatpush1.bf16.msra.mxu0 %v1127
      %1161 = vmatprep.subr.bf16.mxu0 0
      %1162 = vmatpush1.bf16.msra.mxu0 %v1128
      %1163 = vmatprep.subr.bf16.mxu0 0
      %1164 = vmatpush1.bf16.msra.mxu0 %v1129
      %1165 = vmatprep.subr.bf16.mxu0 0
      %1166 = vmatpush1.bf16.msra.mxu0 %v1130
      %1167 = vmatprep.subr.bf16.mxu0 0
      %1168 = vmatpush1.bf16.msra.mxu0 %v1131
      %1169 = vmatprep.subr.bf16.mxu0 0
      %1170 = vmatpush1.bf16.msra.mxu0 %v1132
      %1171 = vmatprep.subr.bf16.mxu0 0
      %1172 = vmatpush1.bf16.msra.mxu0 %v1133
      %1173 = vmatprep.subr.bf16.mxu0 0
      %1174 = vmatpush1.bf16.msra.mxu0 %v1134
      %1175 = vmatprep.subr.bf16.mxu0 0
      %1176 = vmatpush1.bf16.msra.mxu0 %v1135
      %1177 = vmatprep.subr.bf16.mxu0 0
      %1178 = vmatpush1.bf16.msra.mxu0 %v1136
      %1179 = vmatprep.subr.bf16.mxu0 0
      %1180 = vmatpush1.bf16.msra.mxu0 %v1137
      %1181 = vmatprep.subr.bf16.mxu0 0
      %1182 = vmatpush1.bf16.msra.mxu0 %v1138
      %1183 = vmatprep.subr.bf16.mxu0 0
      %1184 = vmatpush1.bf16.msra.mxu0 %v1139
      %1185 = vmatprep.subr.bf16.mxu0 0
      %1186 = vmatpush1.bf16.msra.mxu0 %v1140
      %1187 = vmatprep.subr.bf16.mxu0 0
      %1188 = vmatpush1.bf16.msra.mxu0 %v1141
      %1189 = vmatprep.subr.bf16.mxu0 0
      %1190 = vmatpush1.bf16.msra.mxu0 %v1142
      %1191 = vmatprep.mubr.bf16.mxu0 %v615
      %1192 = vmatmul.mubr.bf16.gmra.mrb[0].mxu0 %v614
      %v1193 = vpop.f32.mrb[0].mxu0
      %v1194 = vadd.f32 %v937, %v1193
      %v1195 = vpop.f32.mrb[0].mxu0
      %v1196 = vpop.f32.mrb[0].mxu0
      %v1197 = vadd.f32 %v940, %v1196
      %v1198 = vpop.f32.mrb[0].mxu0
      %1199 = vmatprep.mubr.bf16.mxu0 %v617
      %1200 = vmatmul.mubr.bf16.gmra.mrb[0].mxu0 %v616
      %v1201 = vpop.f32.mrb[0].mxu0
      %v1202 = vadd.f32 %v945, %v1201
      %v1203 = vpop.f32.mrb[0].mxu0
      %v1204 = vpop.f32.mrb[0].mxu0
      %v1205 = vadd.f32 %v948, %v1204
      %v1206 = vpop.f32.mrb[0].mxu0
      %1207 = vmatprep.mubr.bf16.mxu0 %v619
      %1208 = vmatmul.mubr.bf16.gmra.mrb[0].mxu0 %v618
      %v1209 = vpop.f32.mrb[0].mxu0
      %v1210 = vadd.f32 %v953, %v1209
      %v1211 = vpop.f32.mrb[0].mxu0
      %v1212 = vpop.f32.mrb[0].mxu0
      %v1213 = vadd.f32 %v956, %v1212
      %v1214 = vpop.f32.mrb[0].mxu0
      %1215 = vmatprep.mubr.bf16.mxu0 %v621
      %1216 = vmatmul.mubr.bf16.gmra.mrb[0].mxu0 %v620
      %v1217 = vpop.f32.mrb[0].mxu0
      %v1218 = vadd.f32 %v961, %v1217
      %v1219 = vpop.f32.mrb[0].mxu0
      %v1220 = vpop.f32.mrb[0].mxu0
      %v1221 = vadd.f32 %v964, %v1220
      %v1222 = vpop.f32.mrb[0].mxu0
      %1223 = vmatprep.mubr.bf16.mxu0 %v623
      %1224 = vmatmul.mubr.bf16.gmra.mrb[0].mxu0 %v622
      %v1225 = vpop.f32.mrb[0].mxu0
      %v1226 = vadd.f32 %v969, %v1225
      %v1227 = vpop.f32.mrb[0].mxu0
      %v1228 = vpop.f32.mrb[0].mxu0
      %v1229 = vadd.f32 %v972, %v1228
      %v1230 = vpop.f32.mrb[0].mxu0
      %1231 = vmatprep.mubr.bf16.mxu0 %v625
      %1232 = vmatmul.mubr.bf16.gmra.mrb[0].mxu0 %v624
      %v1233 = vpop.f32.mrb[0].mxu0
      %v1234 = vadd.f32 %v977, %v1233
      %v1235 = vpop.f32.mrb[0].mxu0
      %v1236 = vpop.f32.mrb[0].mxu0
      %v1237 = vadd.f32 %v980, %v1236
      %v1238 = vpop.f32.mrb[0].mxu0
      %1239 = vmatprep.mubr.bf16.mxu0 %v627
      %1240 = vmatmul.mubr.bf16.gmra.mrb[0].mxu0 %v626
      %v1241 = vpop.f32.mrb[0].mxu0
      %v1242 = vadd.f32 %v985, %v1241
      %v1243 = vpop.f32.mrb[0].mxu0
      %v1244 = vpop.f32.mrb[0].mxu0
      %v1245 = vadd.f32 %v988, %v1244
      %v1246 = vpop.f32.mrb[0].mxu0
      %1247 = vmatprep.mubr.bf16.mxu0 %v629
      %1248 = vmatmul.mubr.bf16.gmra.mrb[0].mxu0 %v628
      %v1249 = vpop.f32.mrb[0].mxu0
      %v1250 = vadd.f32 %v993, %v1249
      %v1251 = vpop.f32.mrb[0].mxu0
      %v1252 = vpop.f32.mrb[0].mxu0
      %v1253 = vadd.f32 %v996, %v1252
      %v1254 = vpop.f32.mrb[0].mxu0
      %1255 = vmatprep.mubr.bf16.mxu0 %v631
      %1256 = vmatmul.mubr.bf16.gmra.mrb[0].mxu0 %v630
      %v1257 = vpop.f32.mrb[0].mxu0
      %v1258 = vadd.f32 %v1001, %v1257
      %v1259 = vpop.f32.mrb[0].mxu0
      %v1260 = vpop.f32.mrb[0].mxu0
      %v1261 = vadd.f32 %v1004, %v1260
      %v1262 = vpop.f32.mrb[0].mxu0
      %1263 = vmatprep.mubr.bf16.mxu0 %v633
      %1264 = vmatmul.mubr.bf16.gmra.mrb[0].mxu0 %v632
      %v1265 = vpop.f32.mrb[0].mxu0
      %v1266 = vadd.f32 %v1009, %v1265
      %v1267 = vpop.f32.mrb[0].mxu0
      %v1268 = vpop.f32.mrb[0].mxu0
      %v1269 = vadd.f32 %v1012, %v1268
      %v1270 = vpop.f32.mrb[0].mxu0
      %1271 = vmatprep.mubr.bf16.mxu0 %v635
      %1272 = vmatmul.mubr.bf16.gmra.mrb[0].mxu0 %v634
      %v1273 = vpop.f32.mrb[0].mxu0
      %v1274 = vadd.f32 %v1017, %v1273
      %v1275 = vpop.f32.mrb[0].mxu0
      %v1276 = vpop.f32.mrb[0].mxu0
      %v1277 = vadd.f32 %v1020, %v1276
      %v1278 = vpop.f32.mrb[0].mxu0
      %1279 = vmatprep.mubr.bf16.mxu0 %v637
      %1280 = vmatmul.mubr.bf16.gmra.mrb[0].mxu0 %v636
      %v1281 = vpop.f32.mrb[0].mxu0
      %v1282 = vadd.f32 %v1025, %v1281
      %v1283 = vpop.f32.mrb[0].mxu0
      %v1284 = vpop.f32.mrb[0].mxu0
      %v1285 = vadd.f32 %v1028, %v1284
      %v1286 = vpop.f32.mrb[0].mxu0
      %1287 = vmatprep.mubr.bf16.mxu0 %v639
      %1288 = vmatmul.mubr.bf16.gmra.mrb[0].mxu0 %v638
      %v1289 = vpop.f32.mrb[0].mxu0
      %v1290 = vadd.f32 %v1033, %v1289
      %v1291 = vpop.f32.mrb[0].mxu0
      %v1292 = vpop.f32.mrb[0].mxu0
      %v1293 = vadd.f32 %v1036, %v1292
      %v1294 = vpop.f32.mrb[0].mxu0
      %1295 = vmatprep.mubr.bf16.mxu0 %v641
      %1296 = vmatmul.mubr.bf16.gmra.mrb[0].mxu0 %v640
      %v1297 = vpop.f32.mrb[0].mxu0
      %v1298 = vadd.f32 %v1041, %v1297
      %v1299 = vpop.f32.mrb[0].mxu0
      %v1300 = vpop.f32.mrb[0].mxu0
      %v1301 = vadd.f32 %v1044, %v1300
      %v1302 = vpop.f32.mrb[0].mxu0
      %1303 = vmatprep.mubr.bf16.mxu0 %v643
      %1304 = vmatmul.mubr.bf16.gmra.mrb[0].mxu0 %v642
      %v1305 = vpop.f32.mrb[0].mxu0
      %v1306 = vadd.f32 %v1049, %v1305
      %v1307 = vpop.f32.mrb[0].mxu0
      %v1308 = vpop.f32.mrb[0].mxu0
      %v1309 = vadd.f32 %v1052, %v1308
      %v1310 = vpop.f32.mrb[0].mxu0
      %1311 = vmatprep.mubr.bf16.mxu0 %v645
      %1312 = vmatmul.mubr.bf16.gmra.mrb[0].mxu0 %v644
      %v1313 = vpop.f32.mrb[0].mxu0
      %v1314 = vadd.f32 %v1057, %v1313
      %v1315 = vpop.f32.mrb[0].mxu0
      %v1316 = vpop.f32.mrb[0].mxu0
      %v1317 = vadd.f32 %v1060, %v1316
      %v1318 = vpop.f32.mrb[0].mxu0
      %1319 = vdwg.mxu0
      %v1320 = vld [vmem:[%s534] sm:$0xff]
      %v1321 = vld [vmem:[%s534 + $0x8] sm:$0xff]
      %v1322 = vld [vmem:[%s534 + $0x10] sm:$0xff]
      %v1323 = vld [vmem:[%s534 + $0x18] sm:$0xff]
      %v1324 = vld [vmem:[%s534 + $0x20] sm:$0xff]
      %v1325 = vld [vmem:[%s534 + $0x28] sm:$0xff]
      %v1326 = vld [vmem:[%s534 + $0x30] sm:$0xff]
      %v1327 = vld [vmem:[%s534 + $0x38] sm:$0xff]
      %v1328 = vld [vmem:[%s534 + $0x40] sm:$0xff]
      %v1329 = vld [vmem:[%s534 + $0x48] sm:$0xff]
      %v1330 = vld [vmem:[%s534 + $0x50] sm:$0xff]
      %v1331 = vld [vmem:[%s534 + $0x58] sm:$0xff]
      %v1332 = vld [vmem:[%s534 + $0x60] sm:$0xff]
      %v1333 = vld [vmem:[%s534 + $0x68] sm:$0xff]
      %v1334 = vld [vmem:[%s534 + $0x70] sm:$0xff]
      %v1335 = vld [vmem:[%s534 + $0x78] sm:$0xff]
      %v1336 = vld [vmem:[%s534 + $0x80] sm:$0xff]
      %v1337 = vld [vmem:[%s534 + $0x88] sm:$0xff]
      %v1338 = vld [vmem:[%s534 + $0x90] sm:$0xff]
      %v1339 = vld [vmem:[%s534 + $0x98] sm:$0xff]
      %v1340 = vld [vmem:[%s534 + $0xa0] sm:$0xff]
      %v1341 = vld [vmem:[%s534 + $0xa8] sm:$0xff]
      %v1342 = vld [vmem:[%s534 + $0xb0] sm:$0xff]
      %v1343 = vld [vmem:[%s534 + $0xb8] sm:$0xff]
      %v1344 = vld [vmem:[%s534 + $0xc0] sm:$0xff]
      %v1345 = vld [vmem:[%s534 + $0xc8] sm:$0xff]
      %v1346 = vld [vmem:[%s534 + $0xd0] sm:$0xff]
      %v1347 = vld [vmem:[%s534 + $0xd8] sm:$0xff]
      %v1348 = vld [vmem:[%s534 + $0xe0] sm:$0xff]
      %v1349 = vld [vmem:[%s534 + $0xe8] sm:$0xff]
      %v1350 = vld [vmem:[%s534 + $0xf0] sm:$0xff]
      %v1351 = vld [vmem:[%s534 + $0xf8] sm:$0xff]
      %v1352 = vld [vmem:[%s534 + $0x100] sm:$0xff]
      %v1353 = vld [vmem:[%s534 + $0x108] sm:$0xff]
      %v1354 = vld [vmem:[%s534 + $0x110] sm:$0xff]
      %v1355 = vld [vmem:[%s534 + $0x118] sm:$0xff]
      %v1356 = vld [vmem:[%s534 + $0x120] sm:$0xff]
      %v1357 = vld [vmem:[%s534 + $0x128] sm:$0xff]
      %v1358 = vld [vmem:[%s534 + $0x130] sm:$0xff]
      %v1359 = vld [vmem:[%s534 + $0x138] sm:$0xff]
      %v1360 = vld [vmem:[%s534 + $0x140] sm:$0xff]
      %v1361 = vld [vmem:[%s534 + $0x148] sm:$0xff]
      %v1362 = vld [vmem:[%s534 + $0x150] sm:$0xff]
      %v1363 = vld [vmem:[%s534 + $0x158] sm:$0xff]
      %v1364 = vld [vmem:[%s534 + $0x160] sm:$0xff]
      %v1365 = vld [vmem:[%s534 + $0x168] sm:$0xff]
      %v1366 = vld [vmem:[%s534 + $0x170] sm:$0xff]
      %v1367 = vld [vmem:[%s534 + $0x178] sm:$0xff]
      %v1368 = vld [vmem:[%s534 + $0x180] sm:$0xff]
      %v1369 = vld [vmem:[%s534 + $0x188] sm:$0xff]
      %v1370 = vld [vmem:[%s534 + $0x190] sm:$0xff]
      %v1371 = vld [vmem:[%s534 + $0x198] sm:$0xff]
      %v1372 = vld [vmem:[%s534 + $0x1a0] sm:$0xff]
      %v1373 = vld [vmem:[%s534 + $0x1a8] sm:$0xff]
      %v1374 = vld [vmem:[%s534 + $0x1b0] sm:$0xff]
      %v1375 = vld [vmem:[%s534 + $0x1b8] sm:$0xff]
      %v1376 = vld [vmem:[%s534 + $0x1c0] sm:$0xff]
      %v1377 = vld [vmem:[%s534 + $0x1c8] sm:$0xff]
      %v1378 = vld [vmem:[%s534 + $0x1d0] sm:$0xff]
      %v1379 = vld [vmem:[%s534 + $0x1d8] sm:$0xff]
      %v1380 = vld [vmem:[%s534 + $0x1e0] sm:$0xff]
      %v1381 = vld [vmem:[%s534 + $0x1e8] sm:$0xff]
      %v1382 = vld [vmem:[%s534 + $0x1f0] sm:$0xff]
      %v1383 = vld [vmem:[%s534 + $0x1f8] sm:$0xff]
      %v1384 = vpack.c.bf16 %v1322, %v1320
      %v1385 = vpack.c.bf16 %v1323, %v1321
      %v1386 = vpack.c.bf16 %v1326, %v1324
      %v1387 = vpack.c.bf16 %v1327, %v1325
      %v1388 = vpack.c.bf16 %v1330, %v1328
      %v1389 = vpack.c.bf16 %v1331, %v1329
      %v1390 = vpack.c.bf16 %v1334, %v1332
      %v1391 = vpack.c.bf16 %v1335, %v1333
      %v1392 = vpack.c.bf16 %v1338, %v1336
      %v1393 = vpack.c.bf16 %v1339, %v1337
      %v1394 = vpack.c.bf16 %v1342, %v1340
      %v1395 = vpack.c.bf16 %v1343, %v1341
      %v1396 = vpack.c.bf16 %v1346, %v1344
      %v1397 = vpack.c.bf16 %v1347, %v1345
      %v1398 = vpack.c.bf16 %v1350, %v1348
      %v1399 = vpack.c.bf16 %v1351, %v1349
      %v1400 = vpack.c.bf16 %v1354, %v1352
      %v1401 = vpack.c.bf16 %v1355, %v1353
      %v1402 = vpack.c.bf16 %v1358, %v1356
      %v1403 = vpack.c.bf16 %v1359, %v1357
      %v1404 = vpack.c.bf16 %v1362, %v1360
      %v1405 = vpack.c.bf16 %v1363, %v1361
      %v1406 = vpack.c.bf16 %v1366, %v1364
      %v1407 = vpack.c.bf16 %v1367, %v1365
      %v1408 = vpack.c.bf16 %v1370, %v1368
      %v1409 = vpack.c.bf16 %v1371, %v1369
      %v1410 = vpack.c.bf16 %v1374, %v1372
      %v1411 = vpack.c.bf16 %v1375, %v1373
      %v1412 = vpack.c.bf16 %v1378, %v1376
      %v1413 = vpack.c.bf16 %v1379, %v1377
      %v1414 = vpack.c.bf16 %v1382, %v1380
      %v1415 = vpack.c.bf16 %v1383, %v1381
      %v1416 = vld [vmem:[%s6] sm:$0xf]
      %v1417 = vld [vmem:[%s6 + $0x4] sm:$0xf]
      %v1418 = vld [vmem:[%s6 + $0x8] sm:$0xf]
      %v1419 = vld [vmem:[%s6 + $0xc] sm:$0xf]
      %v1420 = vld [vmem:[%s6 + $0x10] sm:$0xf]
      %v1421 = vld [vmem:[%s6 + $0x14] sm:$0xf]
      %v1422 = vld [vmem:[%s6 + $0x18] sm:$0xf]
      %v1423 = vld [vmem:[%s6 + $0x1c] sm:$0xf]
      %v1424 = vld [vmem:[%s6 + $0x20] sm:$0xf]
      %v1425 = vld [vmem:[%s6 + $0x24] sm:$0xf]
      %v1426 = vld [vmem:[%s6 + $0x28] sm:$0xf]
      %v1427 = vld [vmem:[%s6 + $0x2c] sm:$0xf]
      %v1428 = vld [vmem:[%s6 + $0x30] sm:$0xf]
      %v1429 = vld [vmem:[%s6 + $0x34] sm:$0xf]
      %v1430 = vld [vmem:[%s6 + $0x38] sm:$0xf]
      %v1431 = vld [vmem:[%s6 + $0x3c] sm:$0xf]
      %v1432 = vld [vmem:[%s6 + $0x40] sm:$0xf]
      %v1433 = vld [vmem:[%s6 + $0x44] sm:$0xf]
      %v1434 = vld [vmem:[%s6 + $0x48] sm:$0xf]
      %v1435 = vld [vmem:[%s6 + $0x4c] sm:$0xf]
      %v1436 = vld [vmem:[%s6 + $0x50] sm:$0xf]
      %v1437 = vld [vmem:[%s6 + $0x54] sm:$0xf]
      %v1438 = vld [vmem:[%s6 + $0x58] sm:$0xf]
      %v1439 = vld [vmem:[%s6 + $0x5c] sm:$0xf]
      %v1440 = vld [vmem:[%s6 + $0x60] sm:$0xf]
      %v1441 = vld [vmem:[%s6 + $0x64] sm:$0xf]
      %v1442 = vld [vmem:[%s6 + $0x68] sm:$0xf]
      %v1443 = vld [vmem:[%s6 + $0x6c] sm:$0xf]
      %v1444 = vld [vmem:[%s6 + $0x70] sm:$0xf]
      %v1445 = vld [vmem:[%s6 + $0x74] sm:$0xf]
      %v1446 = vld [vmem:[%s6 + $0x78] sm:$0xf]
      %v1447 = vld [vmem:[%s6 + $0x7c] sm:$0xf]
      %v1480 = vunpack.c.l.b16 %v1416
      %v1481 = vunpack.c.l.b16 %v1417
      %v1482 = vunpack.c.l.b16 %v1418
      %v1483 = vunpack.c.l.b16 %v1419
      %v1484 = vunpack.c.l.b16 %v1420
      %v1485 = vunpack.c.l.b16 %v1421
      %v1486 = vunpack.c.l.b16 %v1422
      %v1487 = vunpack.c.l.b16 %v1423
      %v1488 = vunpack.c.l.b16 %v1424
      %v1489 = vunpack.c.l.b16 %v1425
      %v1490 = vunpack.c.l.b16 %v1426
      %v1491 = vunpack.c.l.b16 %v1427
      %v1492 = vunpack.c.l.b16 %v1428
      %v1493 = vunpack.c.l.b16 %v1429
      %v1494 = vunpack.c.l.b16 %v1430
      %v1495 = vunpack.c.l.b16 %v1431
      %v1496 = vunpack.c.l.b16 %v1432
      %v1497 = vunpack.c.l.b16 %v1433
      %v1498 = vunpack.c.l.b16 %v1434
      %v1499 = vunpack.c.l.b16 %v1435
      %v1500 = vunpack.c.l.b16 %v1436
      %v1501 = vunpack.c.l.b16 %v1437
      %v1502 = vunpack.c.l.b16 %v1438
      %v1503 = vunpack.c.l.b16 %v1439
      %v1504 = vunpack.c.l.b16 %v1440
      %v1505 = vunpack.c.l.b16 %v1441
      %v1506 = vunpack.c.l.b16 %v1442
      %v1507 = vunpack.c.l.b16 %v1443
      %v1508 = vunpack.c.l.b16 %v1444
      %v1509 = vunpack.c.l.b16 %v1445
      %v1510 = vunpack.c.l.b16 %v1446
      %v1511 = vunpack.c.l.b16 %v1447
      %v1512 = vpack.c.b16 %v1481, %v1480
      %v1513 = vpack.c.b16 %v1483, %v1482
      %v1514 = vpack.c.b16 %v1485, %v1484
      %v1515 = vpack.c.b16 %v1487, %v1486
      %v1516 = vpack.c.b16 %v1489, %v1488
      %v1517 = vpack.c.b16 %v1491, %v1490
      %v1518 = vpack.c.b16 %v1493, %v1492
      %v1519 = vpack.c.b16 %v1495, %v1494
      %v1520 = vpack.c.b16 %v1497, %v1496
      %v1521 = vpack.c.b16 %v1499, %v1498
      %v1522 = vpack.c.b16 %v1501, %v1500
      %v1523 = vpack.c.b16 %v1503, %v1502
      %v1524 = vpack.c.b16 %v1505, %v1504
      %v1525 = vpack.c.b16 %v1507, %v1506
      %v1526 = vpack.c.b16 %v1509, %v1508
      %v1527 = vpack.c.b16 %v1511, %v1510
      %1544 = vmatprep.subr.bf16.mxu0 0
      %1545 = vmatpush1.bf16.msra.mxu0 %v1512
      %1546 = vmatprep.subr.bf16.mxu0 0
      %1547 = vmatpush1.bf16.msra.mxu0 %v1513
      %1548 = vmatprep.subr.bf16.mxu0 0
      %1549 = vmatpush1.bf16.msra.mxu0 %v1514
      %1550 = vmatprep.subr.bf16.mxu0 0
      %1551 = vmatpush1.bf16.msra.mxu0 %v1515
      %1552 = vmatprep.subr.bf16.mxu0 0
      %1553 = vmatpush1.bf16.msra.mxu0 %v1516
      %1554 = vmatprep.subr.bf16.mxu0 0
      %1555 = vmatpush1.bf16.msra.mxu0 %v1517
      %1556 = vmatprep.subr.bf16.mxu0 0
      %1557 = vmatpush1.bf16.msra.mxu0 %v1518
      %1558 = vmatprep.subr.bf16.mxu0 0
      %1559 = vmatpush1.bf16.msra.mxu0 %v1519
      %1560 = vmatprep.subr.bf16.mxu0 0
      %1561 = vmatpush1.bf16.msra.mxu0 %v1520
      %1562 = vmatprep.subr.bf16.mxu0 0
      %1563 = vmatpush1.bf16.msra.mxu0 %v1521
      %1564 = vmatprep.subr.bf16.mxu0 0
      %1565 = vmatpush1.bf16.msra.mxu0 %v1522
      %1566 = vmatprep.subr.bf16.mxu0 0
      %1567 = vmatpush1.bf16.msra.mxu0 %v1523
      %1568 = vmatprep.subr.bf16.mxu0 0
      %1569 = vmatpush1.bf16.msra.mxu0 %v1524
      %1570 = vmatprep.subr.bf16.mxu0 0
      %1571 = vmatpush1.bf16.msra.mxu0 %v1525
      %1572 = vmatprep.subr.bf16.mxu0 0
      %1573 = vmatpush1.bf16.msra.mxu0 %v1526
      %1574 = vmatprep.subr.bf16.mxu0 0
      %1575 = vmatpush1.bf16.msra.mxu0 %v1527
      %1576 = vmatprep.mubr.bf16.mxu0 %v1385
      %1577 = vmatmul.mubr.bf16.gmra.mrb[0].mxu0 %v1384
      %v1578 = vpop.f32.mrb[0].mxu0
      %v1579 = vadd.f32 0.0, %v1578
      %v1580 = vpop.f32.mrb[0].mxu0
      %v1581 = vpop.f32.mrb[0].mxu0
      %v1582 = vadd.f32 0.0, %v1581
      %v1583 = vpop.f32.mrb[0].mxu0
      %1584 = vmatprep.mubr.bf16.mxu0 %v1387
      %1585 = vmatmul.mubr.bf16.gmra.mrb[0].mxu0 %v1386
      %v1586 = vpop.f32.mrb[0].mxu0
      %v1587 = vadd.f32 0.0, %v1586
      %v1588 = vpop.f32.mrb[0].mxu0
      %v1589 = vpop.f32.mrb[0].mxu0
      %v1590 = vadd.f32 0.0, %v1589
      %v1591 = vpop.f32.mrb[0].mxu0
      %1592 = vmatprep.mubr.bf16.mxu0 %v1389
      %1593 = vmatmul.mubr.bf16.gmra.mrb[0].mxu0 %v1388
      %v1594 = vpop.f32.mrb[0].mxu0
      %v1595 = vadd.f32 0.0, %v1594
      %v1596 = vpop.f32.mrb[0].mxu0
      %v1597 = vpop.f32.mrb[0].mxu0
      %v1598 = vadd.f32 0.0, %v1597
      %v1599 = vpop.f32.mrb[0].mxu0
      %1600 = vmatprep.mubr.bf16.mxu0 %v1391
      %1601 = vmatmul.mubr.bf16.gmra.mrb[0].mxu0 %v1390
      %v1602 = vpop.f32.mrb[0].mxu0
      %v1603 = vadd.f32 0.0, %v1602
      %v1604 = vpop.f32.mrb[0].mxu0
      %v1605 = vpop.f32.mrb[0].mxu0
      %v1606 = vadd.f32 0.0, %v1605
      %v1607 = vpop.f32.mrb[0].mxu0
      %1608 = vmatprep.mubr.bf16.mxu0 %v1393
      %1609 = vmatmul.mubr.bf16.gmra.mrb[0].mxu0 %v1392
      %v1610 = vpop.f32.mrb[0].mxu0
      %v1611 = vadd.f32 0.0, %v1610
      %v1612 = vpop.f32.mrb[0].mxu0
      %v1613 = vpop.f32.mrb[0].mxu0
      %v1614 = vadd.f32 0.0, %v1613
      %v1615 = vpop.f32.mrb[0].mxu0
      %1616 = vmatprep.mubr.bf16.mxu0 %v1395
      %1617 = vmatmul.mubr.bf16.gmra.mrb[0].mxu0 %v1394
      %v1618 = vpop.f32.mrb[0].mxu0
      %v1619 = vadd.f32 0.0, %v1618
      %v1620 = vpop.f32.mrb[0].mxu0
      %v1621 = vpop.f32.mrb[0].mxu0
      %v1622 = vadd.f32 0.0, %v1621
      %v1623 = vpop.f32.mrb[0].mxu0
      %1624 = vmatprep.mubr.bf16.mxu0 %v1397
      %1625 = vmatmul.mubr.bf16.gmra.mrb[0].mxu0 %v1396
      %v1626 = vpop.f32.mrb[0].mxu0
      %v1627 = vadd.f32 0.0, %v1626
      %v1628 = vpop.f32.mrb[0].mxu0
      %v1629 = vpop.f32.mrb[0].mxu0
      %v1630 = vadd.f32 0.0, %v1629
      %v1631 = vpop.f32.mrb[0].mxu0
      %1632 = vmatprep.mubr.bf16.mxu0 %v1399
      %1633 = vmatmul.mubr.bf16.gmra.mrb[0].mxu0 %v1398
      %v1634 = vpop.f32.mrb[0].mxu0
      %v1635 = vadd.f32 0.0, %v1634
      %v1636 = vpop.f32.mrb[0].mxu0
      %v1637 = vpop.f32.mrb[0].mxu0
      %v1638 = vadd.f32 0.0, %v1637
      %v1639 = vpop.f32.mrb[0].mxu0
      %1640 = vmatprep.mubr.bf16.mxu0 %v1401
      %1641 = vmatmul.mubr.bf16.gmra.mrb[0].mxu0 %v1400
      %v1642 = vpop.f32.mrb[0].mxu0
      %v1643 = vadd.f32 0.0, %v1642
      %v1644 = vpop.f32.mrb[0].mxu0
      %v1645 = vpop.f32.mrb[0].mxu0
      %v1646 = vadd.f32 0.0, %v1645
      %v1647 = vpop.f32.mrb[0].mxu0
      %1648 = vmatprep.mubr.bf16.mxu0 %v1403
      %1649 = vmatmul.mubr.bf16.gmra.mrb[0].mxu0 %v1402
      %v1650 = vpop.f32.mrb[0].mxu0
      %v1651 = vadd.f32 0.0, %v1650
      %v1652 = vpop.f32.mrb[0].mxu0
      %v1653 = vpop.f32.mrb[0].mxu0
      %v1654 = vadd.f32 0.0, %v1653
      %v1655 = vpop.f32.mrb[0].mxu0
      %1656 = vmatprep.mubr.bf16.mxu0 %v1405
      %1657 = vmatmul.mubr.bf16.gmra.mrb[0].mxu0 %v1404
      %v1658 = vpop.f32.mrb[0].mxu0
      %v1659 = vadd.f32 0.0, %v1658
      %v1660 = vpop.f32.mrb[0].mxu0
      %v1661 = vpop.f32.mrb[0].mxu0
      %v1662 = vadd.f32 0.0, %v1661
      %v1663 = vpop.f32.mrb[0].mxu0
      %1664 = vmatprep.mubr.bf16.mxu0 %v1407
      %1665 = vmatmul.mubr.bf16.gmra.mrb[0].mxu0 %v1406
      %v1666 = vpop.f32.mrb[0].mxu0
      %v1667 = vadd.f32 0.0, %v1666
      %v1668 = vpop.f32.mrb[0].mxu0
      %v1669 = vpop.f32.mrb[0].mxu0
      %v1670 = vadd.f32 0.0, %v1669
      %v1671 = vpop.f32.mrb[0].mxu0
      %1672 = vmatprep.mubr.bf16.mxu0 %v1409
      %1673 = vmatmul.mubr.bf16.gmra.mrb[0].mxu0 %v1408
      %v1674 = vpop.f32.mrb[0].mxu0
      %v1675 = vadd.f32 0.0, %v1674
      %v1676 = vpop.f32.mrb[0].mxu0
      %v1677 = vpop.f32.mrb[0].mxu0
      %v1678 = vadd.f32 0.0, %v1677
      %v1679 = vpop.f32.mrb[0].mxu0
      %1680 = vmatprep.mubr.bf16.mxu0 %v1411
      %1681 = vmatmul.mubr.bf16.gmra.mrb[0].mxu0 %v1410
      %v1682 = vpop.f32.mrb[0].mxu0
      %v1683 = vadd.f32 0.0, %v1682
      %v1684 = vpop.f32.mrb[0].mxu0
      %v1685 = vpop.f32.mrb[0].mxu0
      %v1686 = vadd.f32 0.0, %v1685
      %v1687 = vpop.f32.mrb[0].mxu0
      %1688 = vmatprep.mubr.bf16.mxu0 %v1413
      %1689 = vmatmul.mubr.bf16.gmra.mrb[0].mxu0 %v1412
      %v1690 = vpop.f32.mrb[0].mxu0
      %v1691 = vadd.f32 0.0, %v1690
      %v1692 = vpop.f32.mrb[0].mxu0
      %v1693 = vpop.f32.mrb[0].mxu0
      %v1694 = vadd.f32 0.0, %v1693
      %v1695 = vpop.f32.mrb[0].mxu0
      %1696 = vmatprep.mubr.bf16.mxu0 %v1415
      %1697 = vmatmul.mubr.bf16.gmra.mrb[0].mxu0 %v1414
      %v1698 = vpop.f32.mrb[0].mxu0
      %v1699 = vadd.f32 0.0, %v1698
      %v1700 = vpop.f32.mrb[0].mxu0
      %v1701 = vpop.f32.mrb[0].mxu0
      %v1702 = vadd.f32 0.0, %v1701
      %v1703 = vpop.f32.mrb[0].mxu0
      %1704 = vdwg.mxu0
      %v1705 = vadd.f32 %v1194, %v1579
      %v1706 = vadd.f32 %v1197, %v1582
      %v1707 = vadd.f32 %v1202, %v1587
      %v1708 = vadd.f32 %v1205, %v1590
      %v1709 = vadd.f32 %v1210, %v1595
      %v1710 = vadd.f32 %v1213, %v1598
      %v1711 = vadd.f32 %v1218, %v1603
      %v1712 = vadd.f32 %v1221, %v1606
      %v1713 = vadd.f32 %v1226, %v1611
      %v1714 = vadd.f32 %v1229, %v1614
      %v1715 = vadd.f32 %v1234, %v1619
      %v1716 = vadd.f32 %v1237, %v1622
      %v1717 = vadd.f32 %v1242, %v1627
      %v1718 = vadd.f32 %v1245, %v1630
      %v1719 = vadd.f32 %v1250, %v1635
      %v1720 = vadd.f32 %v1253, %v1638
      %v1721 = vadd.f32 %v1258, %v1643
      %v1722 = vadd.f32 %v1261, %v1646
      %v1723 = vadd.f32 %v1266, %v1651
      %v1724 = vadd.f32 %v1269, %v1654
      %v1725 = vadd.f32 %v1274, %v1659
      %v1726 = vadd.f32 %v1277, %v1662
      %v1727 = vadd.f32 %v1282, %v1667
      %v1728 = vadd.f32 %v1285, %v1670
      %v1729 = vadd.f32 %v1290, %v1675
      %v1730 = vadd.f32 %v1293, %v1678
      %v1731 = vadd.f32 %v1298, %v1683
      %v1732 = vadd.f32 %v1301, %v1686
      %v1733 = vadd.f32 %v1306, %v1691
      %v1734 = vadd.f32 %v1309, %v1694
      %v1735 = vadd.f32 %v1314, %v1699
      %v1736 = vadd.f32 %v1317, %v1702
      %v1737 = vld [vmem:[%s541] sm:$0xff]
      %v1738 = vld [vmem:[%s541 + $0x8] sm:$0xff]
      %v1739 = vld [vmem:[%s541 + $0x10] sm:$0xff]
      %v1740 = vld [vmem:[%s541 + $0x18] sm:$0xff]
      %v1741 = vld [vmem:[%s541 + $0x20] sm:$0xff]
      %v1742 = vld [vmem:[%s541 + $0x28] sm:$0xff]
      %v1743 = vld [vmem:[%s541 + $0x30] sm:$0xff]
      %v1744 = vld [vmem:[%s541 + $0x38] sm:$0xff]
      %v1745 = vld [vmem:[%s541 + $0x40] sm:$0xff]
      %v1746 = vld [vmem:[%s541 + $0x48] sm:$0xff]
      %v1747 = vld [vmem:[%s541 + $0x50] sm:$0xff]
      %v1748 = vld [vmem:[%s541 + $0x58] sm:$0xff]
      %v1749 = vld [vmem:[%s541 + $0x60] sm:$0xff]
      %v1750 = vld [vmem:[%s541 + $0x68] sm:$0xff]
      %v1751 = vld [vmem:[%s541 + $0x70] sm:$0xff]
      %v1752 = vld [vmem:[%s541 + $0x78] sm:$0xff]
      %v1753 = vld [vmem:[%s541 + $0x80] sm:$0xff]
      %v1754 = vld [vmem:[%s541 + $0x88] sm:$0xff]
      %v1755 = vld [vmem:[%s541 + $0x90] sm:$0xff]
      %v1756 = vld [vmem:[%s541 + $0x98] sm:$0xff]
      %v1757 = vld [vmem:[%s541 + $0xa0] sm:$0xff]
      %v1758 = vld [vmem:[%s541 + $0xa8] sm:$0xff]
      %v1759 = vld [vmem:[%s541 + $0xb0] sm:$0xff]
      %v1760 = vld [vmem:[%s541 + $0xb8] sm:$0xff]
      %v1761 = vld [vmem:[%s541 + $0xc0] sm:$0xff]
      %v1762 = vld [vmem:[%s541 + $0xc8] sm:$0xff]
      %v1763 = vld [vmem:[%s541 + $0xd0] sm:$0xff]
      %v1764 = vld [vmem:[%s541 + $0xd8] sm:$0xff]
      %v1765 = vld [vmem:[%s541 + $0xe0] sm:$0xff]
      %v1766 = vld [vmem:[%s541 + $0xe8] sm:$0xff]
      %v1767 = vld [vmem:[%s541 + $0xf0] sm:$0xff]
      %v1768 = vld [vmem:[%s541 + $0xf8] sm:$0xff]
      %v1769 = vld [vmem:[%s541 + $0x100] sm:$0xff]
      %v1770 = vld [vmem:[%s541 + $0x108] sm:$0xff]
      %v1771 = vld [vmem:[%s541 + $0x110] sm:$0xff]
      %v1772 = vld [vmem:[%s541 + $0x118] sm:$0xff]
      %v1773 = vld [vmem:[%s541 + $0x120] sm:$0xff]
      %v1774 = vld [vmem:[%s541 + $0x128] sm:$0xff]
      %v1775 = vld [vmem:[%s541 + $0x130] sm:$0xff]
      %v1776 = vld [vmem:[%s541 + $0x138] sm:$0xff]
      %v1777 = vld [vmem:[%s541 + $0x140] sm:$0xff]
      %v1778 = vld [vmem:[%s541 + $0x148] sm:$0xff]
      %v1779 = vld [vmem:[%s541 + $0x150] sm:$0xff]
      %v1780 = vld [vmem:[%s541 + $0x158] sm:$0xff]
      %v1781 = vld [vmem:[%s541 + $0x160] sm:$0xff]
      %v1782 = vld [vmem:[%s541 + $0x168] sm:$0xff]
      %v1783 = vld [vmem:[%s541 + $0x170] sm:$0xff]
      %v1784 = vld [vmem:[%s541 + $0x178] sm:$0xff]
      %v1785 = vld [vmem:[%s541 + $0x180] sm:$0xff]
      %v1786 = vld [vmem:[%s541 + $0x188] sm:$0xff]
      %v1787 = vld [vmem:[%s541 + $0x190] sm:$0xff]
      %v1788 = vld [vmem:[%s541 + $0x198] sm:$0xff]
      %v1789 = vld [vmem:[%s541 + $0x1a0] sm:$0xff]
      %v1790 = vld [vmem:[%s541 + $0x1a8] sm:$0xff]
      %v1791 = vld [vmem:[%s541 + $0x1b0] sm:$0xff]
      %v1792 = vld [vmem:[%s541 + $0x1b8] sm:$0xff]
      %v1793 = vld [vmem:[%s541 + $0x1c0] sm:$0xff]
      %v1794 = vld [vmem:[%s541 + $0x1c8] sm:$0xff]
      %v1795 = vld [vmem:[%s541 + $0x1d0] sm:$0xff]
      %v1796 = vld [vmem:[%s541 + $0x1d8] sm:$0xff]
      %v1797 = vld [vmem:[%s541 + $0x1e0] sm:$0xff]
      %v1798 = vld [vmem:[%s541 + $0x1e8] sm:$0xff]
      %v1799 = vld [vmem:[%s541 + $0x1f0] sm:$0xff]
      %v1800 = vld [vmem:[%s541 + $0x1f8] sm:$0xff]
      %v1801 = vpack.c.bf16 %v1739, %v1737
      %v1802 = vpack.c.bf16 %v1740, %v1738
      %v1803 = vpack.c.bf16 %v1743, %v1741
      %v1804 = vpack.c.bf16 %v1744, %v1742
      %v1805 = vpack.c.bf16 %v1747, %v1745
      %v1806 = vpack.c.bf16 %v1748, %v1746
      %v1807 = vpack.c.bf16 %v1751, %v1749
      %v1808 = vpack.c.bf16 %v1752, %v1750
      %v1809 = vpack.c.bf16 %v1755, %v1753
      %v1810 = vpack.c.bf16 %v1756, %v1754
      %v1811 = vpack.c.bf16 %v1759, %v1757
      %v1812 = vpack.c.bf16 %v1760, %v1758
      %v1813 = vpack.c.bf16 %v1763, %v1761
      %v1814 = vpack.c.bf16 %v1764, %v1762
      %v1815 = vpack.c.bf16 %v1767, %v1765
      %v1816 = vpack.c.bf16 %v1768, %v1766
      %v1817 = vpack.c.bf16 %v1771, %v1769
      %v1818 = vpack.c.bf16 %v1772, %v1770
      %v1819 = vpack.c.bf16 %v1775, %v1773
      %v1820 = vpack.c.bf16 %v1776, %v1774
      %v1821 = vpack.c.bf16 %v1779, %v1777
      %v1822 = vpack.c.bf16 %v1780, %v1778
      %v1823 = vpack.c.bf16 %v1783, %v1781
      %v1824 = vpack.c.bf16 %v1784, %v1782
      %v1825 = vpack.c.bf16 %v1787, %v1785
      %v1826 = vpack.c.bf16 %v1788, %v1786
      %v1827 = vpack.c.bf16 %v1791, %v1789
      %v1828 = vpack.c.bf16 %v1792, %v1790
      %v1829 = vpack.c.bf16 %v1795, %v1793
      %v1830 = vpack.c.bf16 %v1796, %v1794
      %v1831 = vpack.c.bf16 %v1799, %v1797
      %v1832 = vpack.c.bf16 %v1800, %v1798
      %v1833 = vld [vmem:[%s7] sm:$0xf]
      %v1834 = vld [vmem:[%s7 + $0x4] sm:$0xf]
      %v1835 = vld [vmem:[%s7 + $0x8] sm:$0xf]
      %v1836 = vld [vmem:[%s7 + $0xc] sm:$0xf]
      %v1837 = vld [vmem:[%s7 + $0x10] sm:$0xf]
      %v1838 = vld [vmem:[%s7 + $0x14] sm:$0xf]
      %v1839 = vld [vmem:[%s7 + $0x18] sm:$0xf]
      %v1840 = vld [vmem:[%s7 + $0x1c] sm:$0xf]
      %v1841 = vld [vmem:[%s7 + $0x20] sm:$0xf]
      %v1842 = vld [vmem:[%s7 + $0x24] sm:$0xf]
      %v1843 = vld [vmem:[%s7 + $0x28] sm:$0xf]
      %v1844 = vld [vmem:[%s7 + $0x2c] sm:$0xf]
      %v1845 = vld [vmem:[%s7 + $0x30] sm:$0xf]
      %v1846 = vld [vmem:[%s7 + $0x34] sm:$0xf]
      %v1847 = vld [vmem:[%s7 + $0x38] sm:$0xf]
      %v1848 = vld [vmem:[%s7 + $0x3c] sm:$0xf]
      %v1849 = vld [vmem:[%s7 + $0x40] sm:$0xf]
      %v1850 = vld [vmem:[%s7 + $0x44] sm:$0xf]
      %v1851 = vld [vmem:[%s7 + $0x48] sm:$0xf]
      %v1852 = vld [vmem:[%s7 + $0x4c] sm:$0xf]
      %v1853 = vld [vmem:[%s7 + $0x50] sm:$0xf]
      %v1854 = vld [vmem:[%s7 + $0x54] sm:$0xf]
      %v1855 = vld [vmem:[%s7 + $0x58] sm:$0xf]
      %v1856 = vld [vmem:[%s7 + $0x5c] sm:$0xf]
      %v1857 = vld [vmem:[%s7 + $0x60] sm:$0xf]
      %v1858 = vld [vmem:[%s7 + $0x64] sm:$0xf]
      %v1859 = vld [vmem:[%s7 + $0x68] sm:$0xf]
      %v1860 = vld [vmem:[%s7 + $0x6c] sm:$0xf]
      %v1861 = vld [vmem:[%s7 + $0x70] sm:$0xf]
      %v1862 = vld [vmem:[%s7 + $0x74] sm:$0xf]
      %v1863 = vld [vmem:[%s7 + $0x78] sm:$0xf]
      %v1864 = vld [vmem:[%s7 + $0x7c] sm:$0xf]
      %v1897 = vunpack.c.l.b16 %v1833
      %v1898 = vunpack.c.l.b16 %v1834
      %v1899 = vunpack.c.l.b16 %v1835
      %v1900 = vunpack.c.l.b16 %v1836
      %v1901 = vunpack.c.l.b16 %v1837
      %v1902 = vunpack.c.l.b16 %v1838
      %v1903 = vunpack.c.l.b16 %v1839
      %v1904 = vunpack.c.l.b16 %v1840
      %v1905 = vunpack.c.l.b16 %v1841
      %v1906 = vunpack.c.l.b16 %v1842
      %v1907 = vunpack.c.l.b16 %v1843
      %v1908 = vunpack.c.l.b16 %v1844
      %v1909 = vunpack.c.l.b16 %v1845
      %v1910 = vunpack.c.l.b16 %v1846
      %v1911 = vunpack.c.l.b16 %v1847
      %v1912 = vunpack.c.l.b16 %v1848
      %v1913 = vunpack.c.l.b16 %v1849
      %v1914 = vunpack.c.l.b16 %v1850
      %v1915 = vunpack.c.l.b16 %v1851
      %v1916 = vunpack.c.l.b16 %v1852
      %v1917 = vunpack.c.l.b16 %v1853
      %v1918 = vunpack.c.l.b16 %v1854
      %v1919 = vunpack.c.l.b16 %v1855
      %v1920 = vunpack.c.l.b16 %v1856
      %v1921 = vunpack.c.l.b16 %v1857
      %v1922 = vunpack.c.l.b16 %v1858
      %v1923 = vunpack.c.l.b16 %v1859
      %v1924 = vunpack.c.l.b16 %v1860
      %v1925 = vunpack.c.l.b16 %v1861
      %v1926 = vunpack.c.l.b16 %v1862
      %v1927 = vunpack.c.l.b16 %v1863
      %v1928 = vunpack.c.l.b16 %v1864
      %v1929 = vpack.c.b16 %v1898, %v1897
      %v1930 = vpack.c.b16 %v1900, %v1899
      %v1931 = vpack.c.b16 %v1902, %v1901
      %v1932 = vpack.c.b16 %v1904, %v1903
      %v1933 = vpack.c.b16 %v1906, %v1905
      %v1934 = vpack.c.b16 %v1908, %v1907
      %v1935 = vpack.c.b16 %v1910, %v1909
      %v1936 = vpack.c.b16 %v1912, %v1911
      %v1937 = vpack.c.b16 %v1914, %v1913
      %v1938 = vpack.c.b16 %v1916, %v1915
      %v1939 = vpack.c.b16 %v1918, %v1917
      %v1940 = vpack.c.b16 %v1920, %v1919
      %v1941 = vpack.c.b16 %v1922, %v1921
      %v1942 = vpack.c.b16 %v1924, %v1923
      %v1943 = vpack.c.b16 %v1926, %v1925
      %v1944 = vpack.c.b16 %v1928, %v1927
      %1961 = vmatprep.subr.bf16.mxu0 0
      %1962 = vmatpush1.bf16.msra.mxu0 %v1929
      %1963 = vmatprep.subr.bf16.mxu0 0
      %1964 = vmatpush1.bf16.msra.mxu0 %v1930
      %1965 = vmatprep.subr.bf16.mxu0 0
      %1966 = vmatpush1.bf16.msra.mxu0 %v1931
      %1967 = vmatprep.subr.bf16.mxu0 0
      %1968 = vmatpush1.bf16.msra.mxu0 %v1932
      %1969 = vmatprep.subr.bf16.mxu0 0
      %1970 = vmatpush1.bf16.msra.mxu0 %v1933
      %1971 = vmatprep.subr.bf16.mxu0 0
      %1972 = vmatpush1.bf16.msra.mxu0 %v1934
      %1973 = vmatprep.subr.bf16.mxu0 0
      %1974 = vmatpush1.bf16.msra.mxu0 %v1935
      %1975 = vmatprep.subr.bf16.mxu0 0
      %1976 = vmatpush1.bf16.msra.mxu0 %v1936
      %1977 = vmatprep.subr.bf16.mxu0 0
      %1978 = vmatpush1.bf16.msra.mxu0 %v1937
      %1979 = vmatprep.subr.bf16.mxu0 0
      %1980 = vmatpush1.bf16.msra.mxu0 %v1938
      %1981 = vmatprep.subr.bf16.mxu0 0
      %1982 = vmatpush1.bf16.msra.mxu0 %v1939
      %1983 = vmatprep.subr.bf16.mxu0 0
      %1984 = vmatpush1.bf16.msra.mxu0 %v1940
      %1985 = vmatprep.subr.bf16.mxu0 0
      %1986 = vmatpush1.bf16.msra.mxu0 %v1941
      %1987 = vmatprep.subr.bf16.mxu0 0
      %1988 = vmatpush1.bf16.msra.mxu0 %v1942
      %1989 = vmatprep.subr.bf16.mxu0 0
      %1990 = vmatpush1.bf16.msra.mxu0 %v1943
      %1991 = vmatprep.subr.bf16.mxu0 0
      %1992 = vmatpush1.bf16.msra.mxu0 %v1944
      %1993 = vmatprep.mubr.bf16.mxu0 %v1802
      %1994 = vmatmul.mubr.bf16.gmra.mrb[0].mxu0 %v1801
      %v1995 = vpop.f32.mrb[0].mxu0
      %v1996 = vadd.f32 0.0, %v1995
      %v1997 = vpop.f32.mrb[0].mxu0
      %v1998 = vpop.f32.mrb[0].mxu0
      %v1999 = vadd.f32 0.0, %v1998
      %v2000 = vpop.f32.mrb[0].mxu0
      %2001 = vmatprep.mubr.bf16.mxu0 %v1804
      %2002 = vmatmul.mubr.bf16.gmra.mrb[0].mxu0 %v1803
      %v2003 = vpop.f32.mrb[0].mxu0
      %v2004 = vadd.f32 0.0, %v2003
      %v2005 = vpop.f32.mrb[0].mxu0
      %v2006 = vpop.f32.mrb[0].mxu0
      %v2007 = vadd.f32 0.0, %v2006
      %v2008 = vpop.f32.mrb[0].mxu0
      %2009 = vmatprep.mubr.bf16.mxu0 %v1806
      %2010 = vmatmul.mubr.bf16.gmra.mrb[0].mxu0 %v1805
      %v2011 = vpop.f32.mrb[0].mxu0
      %v2012 = vadd.f32 0.0, %v2011
      %v2013 = vpop.f32.mrb[0].mxu0
      %v2014 = vpop.f32.mrb[0].mxu0
      %v2015 = vadd.f32 0.0, %v2014
      %v2016 = vpop.f32.mrb[0].mxu0
      %2017 = vmatprep.mubr.bf16.mxu0 %v1808
      %2018 = vmatmul.mubr.bf16.gmra.mrb[0].mxu0 %v1807
      %v2019 = vpop.f32.mrb[0].mxu0
      %v2020 = vadd.f32 0.0, %v2019
      %v2021 = vpop.f32.mrb[0].mxu0
      %v2022 = vpop.f32.mrb[0].mxu0
      %v2023 = vadd.f32 0.0, %v2022
      %v2024 = vpop.f32.mrb[0].mxu0
      %2025 = vmatprep.mubr.bf16.mxu0 %v1810
      %2026 = vmatmul.mubr.bf16.gmra.mrb[0].mxu0 %v1809
      %v2027 = vpop.f32.mrb[0].mxu0
      %v2028 = vadd.f32 0.0, %v2027
      %v2029 = vpop.f32.mrb[0].mxu0
      %v2030 = vpop.f32.mrb[0].mxu0
      %v2031 = vadd.f32 0.0, %v2030
      %v2032 = vpop.f32.mrb[0].mxu0
      %2033 = vmatprep.mubr.bf16.mxu0 %v1812
      %2034 = vmatmul.mubr.bf16.gmra.mrb[0].mxu0 %v1811
      %v2035 = vpop.f32.mrb[0].mxu0
      %v2036 = vadd.f32 0.0, %v2035
      %v2037 = vpop.f32.mrb[0].mxu0
      %v2038 = vpop.f32.mrb[0].mxu0
      %v2039 = vadd.f32 0.0, %v2038
      %v2040 = vpop.f32.mrb[0].mxu0
      %2041 = vmatprep.mubr.bf16.mxu0 %v1814
      %2042 = vmatmul.mubr.bf16.gmra.mrb[0].mxu0 %v1813
      %v2043 = vpop.f32.mrb[0].mxu0
      %v2044 = vadd.f32 0.0, %v2043
      %v2045 = vpop.f32.mrb[0].mxu0
      %v2046 = vpop.f32.mrb[0].mxu0
      %v2047 = vadd.f32 0.0, %v2046
      %v2048 = vpop.f32.mrb[0].mxu0
      %2049 = vmatprep.mubr.bf16.mxu0 %v1816
      %2050 = vmatmul.mubr.bf16.gmra.mrb[0].mxu0 %v1815
      %v2051 = vpop.f32.mrb[0].mxu0
      %v2052 = vadd.f32 0.0, %v2051
      %v2053 = vpop.f32.mrb[0].mxu0
      %v2054 = vpop.f32.mrb[0].mxu0
      %v2055 = vadd.f32 0.0, %v2054
      %v2056 = vpop.f32.mrb[0].mxu0
      %2057 = vmatprep.mubr.bf16.mxu0 %v1818
      %2058 = vmatmul.mubr.bf16.gmra.mrb[0].mxu0 %v1817
      %v2059 = vpop.f32.mrb[0].mxu0
      %v2060 = vadd.f32 0.0, %v2059
      %v2061 = vpop.f32.mrb[0].mxu0
      %v2062 = vpop.f32.mrb[0].mxu0
      %v2063 = vadd.f32 0.0, %v2062
      %v2064 = vpop.f32.mrb[0].mxu0
      %2065 = vmatprep.mubr.bf16.mxu0 %v1820
      %2066 = vmatmul.mubr.bf16.gmra.mrb[0].mxu0 %v1819
      %v2067 = vpop.f32.mrb[0].mxu0
      %v2068 = vadd.f32 0.0, %v2067
      %v2069 = vpop.f32.mrb[0].mxu0
      %v2070 = vpop.f32.mrb[0].mxu0
      %v2071 = vadd.f32 0.0, %v2070
      %v2072 = vpop.f32.mrb[0].mxu0
      %2073 = vmatprep.mubr.bf16.mxu0 %v1822
      %2074 = vmatmul.mubr.bf16.gmra.mrb[0].mxu0 %v1821
      %v2075 = vpop.f32.mrb[0].mxu0
      %v2076 = vadd.f32 0.0, %v2075
      %v2077 = vpop.f32.mrb[0].mxu0
      %v2078 = vpop.f32.mrb[0].mxu0
      %v2079 = vadd.f32 0.0, %v2078
      %v2080 = vpop.f32.mrb[0].mxu0
      %2081 = vmatprep.mubr.bf16.mxu0 %v1824
      %2082 = vmatmul.mubr.bf16.gmra.mrb[0].mxu0 %v1823
      %v2083 = vpop.f32.mrb[0].mxu0
      %v2084 = vadd.f32 0.0, %v2083
      %v2085 = vpop.f32.mrb[0].mxu0
      %v2086 = vpop.f32.mrb[0].mxu0
      %v2087 = vadd.f32 0.0, %v2086
      %v2088 = vpop.f32.mrb[0].mxu0
      %2089 = vmatprep.mubr.bf16.mxu0 %v1826
      %2090 = vmatmul.mubr.bf16.gmra.mrb[0].mxu0 %v1825
      %v2091 = vpop.f32.mrb[0].mxu0
      %v2092 = vadd.f32 0.0, %v2091
      %v2093 = vpop.f32.mrb[0].mxu0
      %v2094 = vpop.f32.mrb[0].mxu0
      %v2095 = vadd.f32 0.0, %v2094
      %v2096 = vpop.f32.mrb[0].mxu0
      %2097 = vmatprep.mubr.bf16.mxu0 %v1828
      %2098 = vmatmul.mubr.bf16.gmra.mrb[0].mxu0 %v1827
      %v2099 = vpop.f32.mrb[0].mxu0
      %v2100 = vadd.f32 0.0, %v2099
      %v2101 = vpop.f32.mrb[0].mxu0
      %v2102 = vpop.f32.mrb[0].mxu0
      %v2103 = vadd.f32 0.0, %v2102
      %v2104 = vpop.f32.mrb[0].mxu0
      %2105 = vmatprep.mubr.bf16.mxu0 %v1830
      %2106 = vmatmul.mubr.bf16.gmra.mrb[0].mxu0 %v1829
      %v2107 = vpop.f32.mrb[0].mxu0
      %v2108 = vadd.f32 0.0, %v2107
      %v2109 = vpop.f32.mrb[0].mxu0
      %v2110 = vpop.f32.mrb[0].mxu0
      %v2111 = vadd.f32 0.0, %v2110
      %v2112 = vpop.f32.mrb[0].mxu0
      %2113 = vmatprep.mubr.bf16.mxu0 %v1832
      %2114 = vmatmul.mubr.bf16.gmra.mrb[0].mxu0 %v1831
      %v2115 = vpop.f32.mrb[0].mxu0
      %v2116 = vadd.f32 0.0, %v2115
      %v2117 = vpop.f32.mrb[0].mxu0
      %v2118 = vpop.f32.mrb[0].mxu0
      %v2119 = vadd.f32 0.0, %v2118
      %v2120 = vpop.f32.mrb[0].mxu0
      %2121 = vdwg.mxu0
      %v2122 = vadd.f32 %v1705, %v1996
      %v2123 = vadd.f32 %v1706, %v1999
      %v2124 = vadd.f32 %v1707, %v2004
      %v2125 = vadd.f32 %v1708, %v2007
      %v2126 = vadd.f32 %v1709, %v2012
      %v2127 = vadd.f32 %v1710, %v2015
      %v2128 = vadd.f32 %v1711, %v2020
      %v2129 = vadd.f32 %v1712, %v2023
      %v2130 = vadd.f32 %v1713, %v2028
      %v2131 = vadd.f32 %v1714, %v2031
      %v2132 = vadd.f32 %v1715, %v2036
      %v2133 = vadd.f32 %v1716, %v2039
      %v2134 = vadd.f32 %v1717, %v2044
      %v2135 = vadd.f32 %v1718, %v2047
      %v2136 = vadd.f32 %v1719, %v2052
      %v2137 = vadd.f32 %v1720, %v2055
      %v2138 = vadd.f32 %v1721, %v2060
      %v2139 = vadd.f32 %v1722, %v2063
      %v2140 = vadd.f32 %v1723, %v2068
      %v2141 = vadd.f32 %v1724, %v2071
      %v2142 = vadd.f32 %v1725, %v2076
      %v2143 = vadd.f32 %v1726, %v2079
      %v2144 = vadd.f32 %v1727, %v2084
      %v2145 = vadd.f32 %v1728, %v2087
      %v2146 = vadd.f32 %v1729, %v2092
      %v2147 = vadd.f32 %v1730, %v2095
      %v2148 = vadd.f32 %v1731, %v2100
      %v2149 = vadd.f32 %v1732, %v2103
      %v2150 = vadd.f32 %v1733, %v2108
      %v2151 = vadd.f32 %v1734, %v2111
      %v2152 = vadd.f32 %v1735, %v2116
      %v2153 = vadd.f32 %v1736, %v2119
      %v2154 = vld [vmem:[%s8] sm:$0x1]
      %v2156 = vlaneseq
      %v2157 = vshrl.u32 %v2156, 7
      %v2158 = vsub.s32 0, %v2157
      %v2159 = vrot.slane %v2154, %v2158
      %v2161 = vadd.f32 %v2122, %v2159
      %v2162 = vadd.f32 %v2123, %v2159
      %v2163 = vadd.f32 %v2124, %v2159
      %v2164 = vadd.f32 %v2125, %v2159
      %v2165 = vadd.f32 %v2126, %v2159
      %v2166 = vadd.f32 %v2127, %v2159
      %v2167 = vadd.f32 %v2128, %v2159
      %v2168 = vadd.f32 %v2129, %v2159
      %v2169 = vadd.f32 %v2130, %v2159
      %v2170 = vadd.f32 %v2131, %v2159
      %v2171 = vadd.f32 %v2132, %v2159
      %v2172 = vadd.f32 %v2133, %v2159
      %v2173 = vadd.f32 %v2134, %v2159
      %v2174 = vadd.f32 %v2135, %v2159
      %v2175 = vadd.f32 %v2136, %v2159
      %v2176 = vadd.f32 %v2137, %v2159
      %v2177 = vadd.f32 %v2138, %v2159
      %v2178 = vadd.f32 %v2139, %v2159
      %v2179 = vadd.f32 %v2140, %v2159
      %v2180 = vadd.f32 %v2141, %v2159
      %v2181 = vadd.f32 %v2142, %v2159
      %v2182 = vadd.f32 %v2143, %v2159
      %v2183 = vadd.f32 %v2144, %v2159
      %v2184 = vadd.f32 %v2145, %v2159
      %v2185 = vadd.f32 %v2146, %v2159
      %v2186 = vadd.f32 %v2147, %v2159
      %v2187 = vadd.f32 %v2148, %v2159
      %v2188 = vadd.f32 %v2149, %v2159
      %v2189 = vadd.f32 %v2150, %v2159
      %v2190 = vadd.f32 %v2151, %v2159
      %v2191 = vadd.f32 %v2152, %v2159
      %v2192 = vadd.f32 %v2153, %v2159
      %v2193 = vmax.f32 %v2161, 0.0
      %v2194 = vmax.f32 %v2162, 0.0
      %v2195 = vmax.f32 %v2163, 0.0
      %v2196 = vmax.f32 %v2164, 0.0
      %v2197 = vmax.f32 %v2165, 0.0
      %v2198 = vmax.f32 %v2166, 0.0
      %v2199 = vmax.f32 %v2167, 0.0
      %v2200 = vmax.f32 %v2168, 0.0
      %v2201 = vmax.f32 %v2169, 0.0
      %v2202 = vmax.f32 %v2170, 0.0
      %v2203 = vmax.f32 %v2171, 0.0
      %v2204 = vmax.f32 %v2172, 0.0
      %v2205 = vmax.f32 %v2173, 0.0
      %v2206 = vmax.f32 %v2174, 0.0
      %v2207 = vmax.f32 %v2175, 0.0
      %v2208 = vmax.f32 %v2176, 0.0
      %v2209 = vmax.f32 %v2177, 0.0
      %v2210 = vmax.f32 %v2178, 0.0
      %v2211 = vmax.f32 %v2179, 0.0
      %v2212 = vmax.f32 %v2180, 0.0
      %v2213 = vmax.f32 %v2181, 0.0
      %v2214 = vmax.f32 %v2182, 0.0
      %v2215 = vmax.f32 %v2183, 0.0
      %v2216 = vmax.f32 %v2184, 0.0
      %v2217 = vmax.f32 %v2185, 0.0
      %v2218 = vmax.f32 %v2186, 0.0
      %v2219 = vmax.f32 %v2187, 0.0
      %v2220 = vmax.f32 %v2188, 0.0
      %v2221 = vmax.f32 %v2189, 0.0
      %v2222 = vmax.f32 %v2190, 0.0
      %v2223 = vmax.f32 %v2191, 0.0
      %v2224 = vmax.f32 %v2192, 0.0
      %v2225 = vpack.c.bf16 %v2194, %v2193
      %v2226 = vpack.c.bf16 %v2196, %v2195
      %v2227 = vpack.c.bf16 %v2198, %v2197
      %v2228 = vpack.c.bf16 %v2200, %v2199
      %v2229 = vpack.c.bf16 %v2202, %v2201
      %v2230 = vpack.c.bf16 %v2204, %v2203
      %v2231 = vpack.c.bf16 %v2206, %v2205
      %v2232 = vpack.c.bf16 %v2208, %v2207
      %v2233 = vpack.c.bf16 %v2210, %v2209
      %v2234 = vpack.c.bf16 %v2212, %v2211
      %v2235 = vpack.c.bf16 %v2214, %v2213
      %v2236 = vpack.c.bf16 %v2216, %v2215
      %v2237 = vpack.c.bf16 %v2218, %v2217
      %v2238 = vpack.c.bf16 %v2220, %v2219
      %v2239 = vpack.c.bf16 %v2222, %v2221
      %v2240 = vpack.c.bf16 %v2224, %v2223
      %v2241 = vld [vmem:[%s9] sm:$0xf]
      %v2242 = vld [vmem:[%s9 + $0x4] sm:$0xf]
      %v2243 = vld [vmem:[%s9 + $0x8] sm:$0xf]
      %v2244 = vld [vmem:[%s9 + $0xc] sm:$0xf]
      %v2245 = vld [vmem:[%s9 + $0x10] sm:$0xf]
      %v2246 = vld [vmem:[%s9 + $0x14] sm:$0xf]
      %v2247 = vld [vmem:[%s9 + $0x18] sm:$0xf]
      %v2248 = vld [vmem:[%s9 + $0x1c] sm:$0xf]
      %v2249 = vld [vmem:[%s9 + $0x20] sm:$0xf]
      %v2250 = vld [vmem:[%s9 + $0x24] sm:$0xf]
      %v2251 = vld [vmem:[%s9 + $0x28] sm:$0xf]
      %v2252 = vld [vmem:[%s9 + $0x2c] sm:$0xf]
      %v2253 = vld [vmem:[%s9 + $0x30] sm:$0xf]
      %v2254 = vld [vmem:[%s9 + $0x34] sm:$0xf]
      %v2255 = vld [vmem:[%s9 + $0x38] sm:$0xf]
      %v2256 = vld [vmem:[%s9 + $0x3c] sm:$0xf]
      %v2257 = vld [vmem:[%s10] sm:$0x1]
      %v2259 = vlaneseq
      %v2260 = vshrl.u32 %v2259, 7
      %v2261 = vsub.s32 0, %v2260
      %v2262 = vrot.slane %v2257, %v2261
      %v2280 = vunpack.c.l.b16 %v2241
      %v2281 = vunpack.c.l.b16 %v2242
      %v2282 = vunpack.c.l.b16 %v2243
      %v2283 = vunpack.c.l.b16 %v2244
      %v2284 = vunpack.c.l.b16 %v2245
      %v2285 = vunpack.c.l.b16 %v2246
      %v2286 = vunpack.c.l.b16 %v2247
      %v2287 = vunpack.c.l.b16 %v2248
      %v2288 = vunpack.c.l.b16 %v2249
      %v2289 = vunpack.c.l.b16 %v2250
      %v2290 = vunpack.c.l.b16 %v2251
      %v2291 = vunpack.c.l.b16 %v2252
      %v2292 = vunpack.c.l.b16 %v2253
      %v2293 = vunpack.c.l.b16 %v2254
      %v2294 = vunpack.c.l.b16 %v2255
      %v2295 = vunpack.c.l.b16 %v2256
      %v2296 = vpack.c.b16 %v2281, %v2280
      %v2297 = vpack.c.b16 %v2283, %v2282
      %v2298 = vpack.c.b16 %v2285, %v2284
      %v2299 = vpack.c.b16 %v2287, %v2286
      %v2300 = vpack.c.b16 %v2289, %v2288
      %v2301 = vpack.c.b16 %v2291, %v2290
      %v2302 = vpack.c.b16 %v2293, %v2292
      %v2303 = vpack.c.b16 %v2295, %v2294
      %2312 = vmatprep.subr.bf16.mxu0 0
      %2313 = vmatpush1.bf16.msra.mxu0 %v2296
      %2314 = vmatprep.subr.bf16.mxu0 0
      %2315 = vmatpush1.bf16.msra.mxu0 %v2297
      %2316 = vmatprep.subr.bf16.mxu0 0
      %2317 = vmatpush1.bf16.msra.mxu0 %v2298
      %2318 = vmatprep.subr.bf16.mxu0 0
      %2319 = vmatpush1.bf16.msra.mxu0 %v2299
      %2320 = vmatprep.subr.bf16.mxu0 0
      %2321 = vmatpush1.bf16.msra.mxu0 %v2300
      %2322 = vmatprep.subr.bf16.mxu0 0
      %2323 = vmatpush1.bf16.msra.mxu0 %v2301
      %2324 = vmatprep.subr.bf16.mxu0 0
      %2325 = vmatpush1.bf16.msra.mxu0 %v2302
      %2326 = vmatprep.subr.bf16.mxu0 0
      %2327 = vmatpush1.bf16.msra.mxu0 %v2303
      %2328 = vmatprep.subr.bf16.mxu0 0
      %2329 = vmatpush1.bf16.msra.mxu0 0
      %2330 = vmatprep.subr.bf16.mxu0 0
      %2331 = vmatpush1.bf16.msra.mxu0 0
      %2332 = vmatprep.subr.bf16.mxu0 0
      %2333 = vmatpush1.bf16.msra.mxu0 0
      %2334 = vmatprep.subr.bf16.mxu0 0
      %2335 = vmatpush1.bf16.msra.mxu0 0
      %2336 = vmatprep.subr.bf16.mxu0 0
      %2337 = vmatpush1.bf16.msra.mxu0 0
      %2338 = vmatprep.subr.bf16.mxu0 0
      %2339 = vmatpush1.bf16.msra.mxu0 0
      %2340 = vmatprep.subr.bf16.mxu0 0
      %2341 = vmatpush1.bf16.msra.mxu0 0
      %2342 = vmatprep.subr.bf16.mxu0 0
      %2343 = vmatpush1.bf16.msra.mxu0 0
      %2344 = vmatprep.mubr.bf16.mxu0 0
      %2345 = vmatmul.mubr.bf16.gmra.mrb[0].mxu0 %v2225
      %v2346 = vpop.f32.mrb[0].mxu0
      %v2347 = vadd.f32 %v2262, %v2346
      %v2348 = vpop.f32.mrb[0].mxu0
      %v2349 = vpop.f32.mrb[0].mxu0
      %v2350 = vadd.f32 %v2262, %v2349
      %v2351 = vpop.f32.mrb[0].mxu0
      %2352 = vmatprep.mubr.bf16.mxu0 0
      %2353 = vmatmul.mubr.bf16.gmra.mrb[0].mxu0 %v2226
      %v2354 = vpop.f32.mrb[0].mxu0
      %v2355 = vadd.f32 %v2262, %v2354
      %v2356 = vpop.f32.mrb[0].mxu0
      %v2357 = vpop.f32.mrb[0].mxu0
      %v2358 = vadd.f32 %v2262, %v2357
      %v2359 = vpop.f32.mrb[0].mxu0
      %2360 = vmatprep.mubr.bf16.mxu0 0
      %2361 = vmatmul.mubr.bf16.gmra.mrb[0].mxu0 %v2227
      %v2362 = vpop.f32.mrb[0].mxu0
      %v2363 = vadd.f32 %v2262, %v2362
      %v2364 = vpop.f32.mrb[0].mxu0
      %v2365 = vpop.f32.mrb[0].mxu0
      %v2366 = vadd.f32 %v2262, %v2365
      %v2367 = vpop.f32.mrb[0].mxu0
      %2368 = vmatprep.mubr.bf16.mxu0 0
      %2369 = vmatmul.mubr.bf16.gmra.mrb[0].mxu0 %v2228
      %v2370 = vpop.f32.mrb[0].mxu0
      %v2371 = vadd.f32 %v2262, %v2370
      %v2372 = vpop.f32.mrb[0].mxu0
      %v2373 = vpop.f32.mrb[0].mxu0
      %v2374 = vadd.f32 %v2262, %v2373
      %v2375 = vpop.f32.mrb[0].mxu0
      %2376 = vmatprep.mubr.bf16.mxu0 0
      %2377 = vmatmul.mubr.bf16.gmra.mrb[0].mxu0 %v2229
      %v2378 = vpop.f32.mrb[0].mxu0
      %v2379 = vadd.f32 %v2262, %v2378
      %v2380 = vpop.f32.mrb[0].mxu0
      %v2381 = vpop.f32.mrb[0].mxu0
      %v2382 = vadd.f32 %v2262, %v2381
      %v2383 = vpop.f32.mrb[0].mxu0
      %2384 = vmatprep.mubr.bf16.mxu0 0
      %2385 = vmatmul.mubr.bf16.gmra.mrb[0].mxu0 %v2230
      %v2386 = vpop.f32.mrb[0].mxu0
      %v2387 = vadd.f32 %v2262, %v2386
      %v2388 = vpop.f32.mrb[0].mxu0
      %v2389 = vpop.f32.mrb[0].mxu0
      %v2390 = vadd.f32 %v2262, %v2389
      %v2391 = vpop.f32.mrb[0].mxu0
      %2392 = vmatprep.mubr.bf16.mxu0 0
      %2393 = vmatmul.mubr.bf16.gmra.mrb[0].mxu0 %v2231
      %v2394 = vpop.f32.mrb[0].mxu0
      %v2395 = vadd.f32 %v2262, %v2394
      %v2396 = vpop.f32.mrb[0].mxu0
      %v2397 = vpop.f32.mrb[0].mxu0
      %v2398 = vadd.f32 %v2262, %v2397
      %v2399 = vpop.f32.mrb[0].mxu0
      %2400 = vmatprep.mubr.bf16.mxu0 0
      %2401 = vmatmul.mubr.bf16.gmra.mrb[0].mxu0 %v2232
      %v2402 = vpop.f32.mrb[0].mxu0
      %v2403 = vadd.f32 %v2262, %v2402
      %v2404 = vpop.f32.mrb[0].mxu0
      %v2405 = vpop.f32.mrb[0].mxu0
      %v2406 = vadd.f32 %v2262, %v2405
      %v2407 = vpop.f32.mrb[0].mxu0
      %2408 = vmatprep.mubr.bf16.mxu0 0
      %2409 = vmatmul.mubr.bf16.gmra.mrb[0].mxu0 %v2233
      %v2410 = vpop.f32.mrb[0].mxu0
      %v2411 = vadd.f32 %v2262, %v2410
      %v2412 = vpop.f32.mrb[0].mxu0
      %v2413 = vpop.f32.mrb[0].mxu0
      %v2414 = vadd.f32 %v2262, %v2413
      %v2415 = vpop.f32.mrb[0].mxu0
      %2416 = vmatprep.mubr.bf16.mxu0 0
      %2417 = vmatmul.mubr.bf16.gmra.mrb[0].mxu0 %v2234
      %v2418 = vpop.f32.mrb[0].mxu0
      %v2419 = vadd.f32 %v2262, %v2418
      %v2420 = vpop.f32.mrb[0].mxu0
      %v2421 = vpop.f32.mrb[0].mxu0
      %v2422 = vadd.f32 %v2262, %v2421
      %v2423 = vpop.f32.mrb[0].mxu0
      %2424 = vmatprep.mubr.bf16.mxu0 0
      %2425 = vmatmul.mubr.bf16.gmra.mrb[0].mxu0 %v2235
      %v2426 = vpop.f32.mrb[0].mxu0
      %v2427 = vadd.f32 %v2262, %v2426
      %v2428 = vpop.f32.mrb[0].mxu0
      %v2429 = vpop.f32.mrb[0].mxu0
      %v2430 = vadd.f32 %v2262, %v2429
      %v2431 = vpop.f32.mrb[0].mxu0
      %2432 = vmatprep.mubr.bf16.mxu0 0
      %2433 = vmatmul.mubr.bf16.gmra.mrb[0].mxu0 %v2236
      %v2434 = vpop.f32.mrb[0].mxu0
      %v2435 = vadd.f32 %v2262, %v2434
      %v2436 = vpop.f32.mrb[0].mxu0
      %v2437 = vpop.f32.mrb[0].mxu0
      %v2438 = vadd.f32 %v2262, %v2437
      %v2439 = vpop.f32.mrb[0].mxu0
      %2440 = vmatprep.mubr.bf16.mxu0 0
      %2441 = vmatmul.mubr.bf16.gmra.mrb[0].mxu0 %v2237
      %v2442 = vpop.f32.mrb[0].mxu0
      %v2443 = vadd.f32 %v2262, %v2442
      %v2444 = vpop.f32.mrb[0].mxu0
      %v2445 = vpop.f32.mrb[0].mxu0
      %v2446 = vadd.f32 %v2262, %v2445
      %v2447 = vpop.f32.mrb[0].mxu0
      %2448 = vmatprep.mubr.bf16.mxu0 0
      %2449 = vmatmul.mubr.bf16.gmra.mrb[0].mxu0 %v2238
      %v2450 = vpop.f32.mrb[0].mxu0
      %v2451 = vadd.f32 %v2262, %v2450
      %v2452 = vpop.f32.mrb[0].mxu0
      %v2453 = vpop.f32.mrb[0].mxu0
      %v2454 = vadd.f32 %v2262, %v2453
      %v2455 = vpop.f32.mrb[0].mxu0
      %2456 = vmatprep.mubr.bf16.mxu0 0
      %2457 = vmatmul.mubr.bf16.gmra.mrb[0].mxu0 %v2239
      %v2458 = vpop.f32.mrb[0].mxu0
      %v2459 = vadd.f32 %v2262, %v2458
      %v2460 = vpop.f32.mrb[0].mxu0
      %v2461 = vpop.f32.mrb[0].mxu0
      %v2462 = vadd.f32 %v2262, %v2461
      %v2463 = vpop.f32.mrb[0].mxu0
      %2464 = vmatprep.mubr.bf16.mxu0 0
      %2465 = vmatmul.mubr.bf16.gmra.mrb[0].mxu0 %v2240
      %v2466 = vpop.f32.mrb[0].mxu0
      %v2467 = vadd.f32 %v2262, %v2466
      %v2468 = vpop.f32.mrb[0].mxu0
      %v2469 = vpop.f32.mrb[0].mxu0
      %v2470 = vadd.f32 %v2262, %v2469
      %v2471 = vpop.f32.mrb[0].mxu0
      %2472 = vdwg.mxu0
      %v2473 = vld [vmem:[%s13] sm:$0xf]
      %v2474 = vld [vmem:[%s13 + $0x4] sm:$0xf]
      %v2475 = vld [vmem:[%s13 + $0x8] sm:$0xf]
      %v2476 = vld [vmem:[%s13 + $0xc] sm:$0xf]
      %v2477 = vld [vmem:[%s13 + $0x10] sm:$0xf]
      %v2478 = vld [vmem:[%s13 + $0x14] sm:$0xf]
      %v2479 = vld [vmem:[%s13 + $0x18] sm:$0xf]
      %v2480 = vld [vmem:[%s13 + $0x1c] sm:$0xf]
      %v2481 = vld [vmem:[%s13 + $0x20] sm:$0xf]
      %v2482 = vld [vmem:[%s13 + $0x24] sm:$0xf]
      %v2483 = vld [vmem:[%s13 + $0x28] sm:$0xf]
      %v2484 = vld [vmem:[%s13 + $0x2c] sm:$0xf]
      %v2485 = vld [vmem:[%s13 + $0x30] sm:$0xf]
      %v2486 = vld [vmem:[%s13 + $0x34] sm:$0xf]
      %v2487 = vld [vmem:[%s13 + $0x38] sm:$0xf]
      %v2488 = vld [vmem:[%s13 + $0x3c] sm:$0xf]
      %v2489 = vpack.c.bf16 %v2350, %v2347
      %v2490 = vpack.c.bf16 %v2358, %v2355
      %v2491 = vpack.c.bf16 %v2366, %v2363
      %v2492 = vpack.c.bf16 %v2374, %v2371
      %v2493 = vpack.c.bf16 %v2382, %v2379
      %v2494 = vpack.c.bf16 %v2390, %v2387
      %v2495 = vpack.c.bf16 %v2398, %v2395
      %v2496 = vpack.c.bf16 %v2406, %v2403
      %v2497 = vpack.c.bf16 %v2414, %v2411
      %v2498 = vpack.c.bf16 %v2422, %v2419
      %v2499 = vpack.c.bf16 %v2430, %v2427
      %v2500 = vpack.c.bf16 %v2438, %v2435
      %v2501 = vpack.c.bf16 %v2446, %v2443
      %v2502 = vpack.c.bf16 %v2454, %v2451
      %v2503 = vpack.c.bf16 %v2462, %v2459
      %v2504 = vpack.c.bf16 %v2470, %v2467
      %v2521 = vunpack.c.l.b16 %v2473
      %v2522 = vunpack.c.l.b16 %v2474
      %v2523 = vunpack.c.l.b16 %v2475
      %v2524 = vunpack.c.l.b16 %v2476
      %v2525 = vunpack.c.l.b16 %v2477
      %v2526 = vunpack.c.l.b16 %v2478
      %v2527 = vunpack.c.l.b16 %v2479
      %v2528 = vunpack.c.l.b16 %v2480
      %v2529 = vunpack.c.l.b16 %v2481
      %v2530 = vunpack.c.l.b16 %v2482
      %v2531 = vunpack.c.l.b16 %v2483
      %v2532 = vunpack.c.l.b16 %v2484
      %v2533 = vunpack.c.l.b16 %v2485
      %v2534 = vunpack.c.l.b16 %v2486
      %v2535 = vunpack.c.l.b16 %v2487
      %v2536 = vunpack.c.l.b16 %v2488
      %v2537 = vpack.c.b16 %v2522, %v2521
      %v2538 = vpack.c.b16 %v2524, %v2523
      %v2539 = vpack.c.b16 %v2526, %v2525
      %v2540 = vpack.c.b16 %v2528, %v2527
      %v2541 = vpack.c.b16 %v2530, %v2529
      %v2542 = vpack.c.b16 %v2532, %v2531
      %v2543 = vpack.c.b16 %v2534, %v2533
      %v2544 = vpack.c.b16 %v2536, %v2535
      %2553 = vmatprep.subr.bf16.mxu0 0
      %2554 = vmatpush1.bf16.msra.mxu0 %v2537
      %2555 = vmatprep.subr.bf16.mxu0 0
      %2556 = vmatpush1.bf16.msra.mxu0 %v2538
      %2557 = vmatprep.subr.bf16.mxu0 0
      %2558 = vmatpush1.bf16.msra.mxu0 %v2539
      %2559 = vmatprep.subr.bf16.mxu0 0
      %2560 = vmatpush1.bf16.msra.mxu0 %v2540
      %2561 = vmatprep.subr.bf16.mxu0 0
      %2562 = vmatpush1.bf16.msra.mxu0 %v2541
      %2563 = vmatprep.subr.bf16.mxu0 0
      %2564 = vmatpush1.bf16.msra.mxu0 %v2542
      %2565 = vmatprep.subr.bf16.mxu0 0
      %2566 = vmatpush1.bf16.msra.mxu0 %v2543
      %2567 = vmatprep.subr.bf16.mxu0 0
      %2568 = vmatpush1.bf16.msra.mxu0 %v2544
      %2569 = vmatprep.subr.bf16.mxu0 0
      %2570 = vmatpush1.bf16.msra.mxu0 0
      %2571 = vmatprep.subr.bf16.mxu0 0
      %2572 = vmatpush1.bf16.msra.mxu0 0
      %2573 = vmatprep.subr.bf16.mxu0 0
      %2574 = vmatpush1.bf16.msra.mxu0 0
      %2575 = vmatprep.subr.bf16.mxu0 0
      %2576 = vmatpush1.bf16.msra.mxu0 0
      %2577 = vmatprep.subr.bf16.mxu0 0
      %2578 = vmatpush1.bf16.msra.mxu0 0
      %2579 = vmatprep.subr.bf16.mxu0 0
      %2580 = vmatpush1.bf16.msra.mxu0 0
      %2581 = vmatprep.subr.bf16.mxu0 0
      %2582 = vmatpush1.bf16.msra.mxu0 0
      %2583 = vmatprep.subr.bf16.mxu0 0
      %2584 = vmatpush1.bf16.msra.mxu0 0
      %2585 = vmatprep.mubr.bf16.mxu0 0
      %2586 = vmatmul.mubr.bf16.gmra.mrb[0].mxu0 %v2489
      %v2587 = vpop.f32.mrb[0].mxu0
      %v2588 = vadd.f32 0.0, %v2587
      %v2589 = vpop.f32.mrb[0].mxu0
      %v2590 = vpop.f32.mrb[0].mxu0
      %v2591 = vadd.f32 0.0, %v2590
      %v2592 = vpop.f32.mrb[0].mxu0
      %2593 = vmatprep.mubr.bf16.mxu0 0
      %2594 = vmatmul.mubr.bf16.gmra.mrb[0].mxu0 %v2490
      %v2595 = vpop.f32.mrb[0].mxu0
      %v2596 = vadd.f32 0.0, %v2595
      %v2597 = vpop.f32.mrb[0].mxu0
      %v2598 = vpop.f32.mrb[0].mxu0
      %v2599 = vadd.f32 0.0, %v2598
      %v2600 = vpop.f32.mrb[0].mxu0
      %2601 = vmatprep.mubr.bf16.mxu0 0
      %2602 = vmatmul.mubr.bf16.gmra.mrb[0].mxu0 %v2491
      %v2603 = vpop.f32.mrb[0].mxu0
      %v2604 = vadd.f32 0.0, %v2603
      %v2605 = vpop.f32.mrb[0].mxu0
      %v2606 = vpop.f32.mrb[0].mxu0
      %v2607 = vadd.f32 0.0, %v2606
      %v2608 = vpop.f32.mrb[0].mxu0
      %2609 = vmatprep.mubr.bf16.mxu0 0
      %2610 = vmatmul.mubr.bf16.gmra.mrb[0].mxu0 %v2492
      %v2611 = vpop.f32.mrb[0].mxu0
      %v2612 = vadd.f32 0.0, %v2611
      %v2613 = vpop.f32.mrb[0].mxu0
      %v2614 = vpop.f32.mrb[0].mxu0
      %v2615 = vadd.f32 0.0, %v2614
      %v2616 = vpop.f32.mrb[0].mxu0
      %2617 = vmatprep.mubr.bf16.mxu0 0
      %2618 = vmatmul.mubr.bf16.gmra.mrb[0].mxu0 %v2493
      %v2619 = vpop.f32.mrb[0].mxu0
      %v2620 = vadd.f32 0.0, %v2619
      %v2621 = vpop.f32.mrb[0].mxu0
      %v2622 = vpop.f32.mrb[0].mxu0
      %v2623 = vadd.f32 0.0, %v2622
      %v2624 = vpop.f32.mrb[0].mxu0
      %2625 = vmatprep.mubr.bf16.mxu0 0
      %2626 = vmatmul.mubr.bf16.gmra.mrb[0].mxu0 %v2494
      %v2627 = vpop.f32.mrb[0].mxu0
      %v2628 = vadd.f32 0.0, %v2627
      %v2629 = vpop.f32.mrb[0].mxu0
      %v2630 = vpop.f32.mrb[0].mxu0
      %v2631 = vadd.f32 0.0, %v2630
      %v2632 = vpop.f32.mrb[0].mxu0
      %2633 = vmatprep.mubr.bf16.mxu0 0
      %2634 = vmatmul.mubr.bf16.gmra.mrb[0].mxu0 %v2495
      %v2635 = vpop.f32.mrb[0].mxu0
      %v2636 = vadd.f32 0.0, %v2635
      %v2637 = vpop.f32.mrb[0].mxu0
      %v2638 = vpop.f32.mrb[0].mxu0
      %v2639 = vadd.f32 0.0, %v2638
      %v2640 = vpop.f32.mrb[0].mxu0
      %2641 = vmatprep.mubr.bf16.mxu0 0
      %2642 = vmatmul.mubr.bf16.gmra.mrb[0].mxu0 %v2496
      %v2643 = vpop.f32.mrb[0].mxu0
      %v2644 = vadd.f32 0.0, %v2643
      %v2645 = vpop.f32.mrb[0].mxu0
      %v2646 = vpop.f32.mrb[0].mxu0
      %v2647 = vadd.f32 0.0, %v2646
      %v2648 = vpop.f32.mrb[0].mxu0
      %2649 = vmatprep.mubr.bf16.mxu0 0
      %2650 = vmatmul.mubr.bf16.gmra.mrb[0].mxu0 %v2497
      %v2651 = vpop.f32.mrb[0].mxu0
      %v2652 = vadd.f32 0.0, %v2651
      %v2653 = vpop.f32.mrb[0].mxu0
      %v2654 = vpop.f32.mrb[0].mxu0
      %v2655 = vadd.f32 0.0, %v2654
      %v2656 = vpop.f32.mrb[0].mxu0
      %2657 = vmatprep.mubr.bf16.mxu0 0
      %2658 = vmatmul.mubr.bf16.gmra.mrb[0].mxu0 %v2498
      %v2659 = vpop.f32.mrb[0].mxu0
      %v2660 = vadd.f32 0.0, %v2659
      %v2661 = vpop.f32.mrb[0].mxu0
      %v2662 = vpop.f32.mrb[0].mxu0
      %v2663 = vadd.f32 0.0, %v2662
      %v2664 = vpop.f32.mrb[0].mxu0
      %2665 = vmatprep.mubr.bf16.mxu0 0
      %2666 = vmatmul.mubr.bf16.gmra.mrb[0].mxu0 %v2499
      %v2667 = vpop.f32.mrb[0].mxu0
      %v2668 = vadd.f32 0.0, %v2667
      %v2669 = vpop.f32.mrb[0].mxu0
      %v2670 = vpop.f32.mrb[0].mxu0
      %v2671 = vadd.f32 0.0, %v2670
      %v2672 = vpop.f32.mrb[0].mxu0
      %2673 = vmatprep.mubr.bf16.mxu0 0
      %2674 = vmatmul.mubr.bf16.gmra.mrb[0].mxu0 %v2500
      %v2675 = vpop.f32.mrb[0].mxu0
      %v2676 = vadd.f32 0.0, %v2675
      %v2677 = vpop.f32.mrb[0].mxu0
      %v2678 = vpop.f32.mrb[0].mxu0
      %v2679 = vadd.f32 0.0, %v2678
      %v2680 = vpop.f32.mrb[0].mxu0
      %2681 = vmatprep.mubr.bf16.mxu0 0
      %2682 = vmatmul.mubr.bf16.gmra.mrb[0].mxu0 %v2501
      %v2683 = vpop.f32.mrb[0].mxu0
      %v2684 = vadd.f32 0.0, %v2683
      %v2685 = vpop.f32.mrb[0].mxu0
      %v2686 = vpop.f32.mrb[0].mxu0
      %v2687 = vadd.f32 0.0, %v2686
      %v2688 = vpop.f32.mrb[0].mxu0
      %2689 = vmatprep.mubr.bf16.mxu0 0
      %2690 = vmatmul.mubr.bf16.gmra.mrb[0].mxu0 %v2502
      %v2691 = vpop.f32.mrb[0].mxu0
      %v2692 = vadd.f32 0.0, %v2691
      %v2693 = vpop.f32.mrb[0].mxu0
      %v2694 = vpop.f32.mrb[0].mxu0
      %v2695 = vadd.f32 0.0, %v2694
      %v2696 = vpop.f32.mrb[0].mxu0
      %2697 = vmatprep.mubr.bf16.mxu0 0
      %2698 = vmatmul.mubr.bf16.gmra.mrb[0].mxu0 %v2503
      %v2699 = vpop.f32.mrb[0].mxu0
      %v2700 = vadd.f32 0.0, %v2699
      %v2701 = vpop.f32.mrb[0].mxu0
      %v2702 = vpop.f32.mrb[0].mxu0
      %v2703 = vadd.f32 0.0, %v2702
      %v2704 = vpop.f32.mrb[0].mxu0
      %2705 = vmatprep.mubr.bf16.mxu0 0
      %2706 = vmatmul.mubr.bf16.gmra.mrb[0].mxu0 %v2504
      %v2707 = vpop.f32.mrb[0].mxu0
      %v2708 = vadd.f32 0.0, %v2707
      %v2709 = vpop.f32.mrb[0].mxu0
      %v2710 = vpop.f32.mrb[0].mxu0
      %v2711 = vadd.f32 0.0, %v2710
      %v2712 = vpop.f32.mrb[0].mxu0
      %2713 = vdwg.mxu0
      %v2714 = vsub.f32 %v2347, %v2588
      %v2715 = vsub.f32 %v2350, %v2591
      %v2716 = vsub.f32 %v2355, %v2596
      %v2717 = vsub.f32 %v2358, %v2599
      %v2718 = vsub.f32 %v2363, %v2604
      %v2719 = vsub.f32 %v2366, %v2607
      %v2720 = vsub.f32 %v2371, %v2612
      %v2721 = vsub.f32 %v2374, %v2615
      %v2722 = vsub.f32 %v2379, %v2620
      %v2723 = vsub.f32 %v2382, %v2623
      %v2724 = vsub.f32 %v2387, %v2628
      %v2725 = vsub.f32 %v2390, %v2631
      %v2726 = vsub.f32 %v2395, %v2636
      %v2727 = vsub.f32 %v2398, %v2639
      %v2728 = vsub.f32 %v2403, %v2644
      %v2729 = vsub.f32 %v2406, %v2647
      %v2730 = vsub.f32 %v2411, %v2652
      %v2731 = vsub.f32 %v2414, %v2655
      %v2732 = vsub.f32 %v2419, %v2660
      %v2733 = vsub.f32 %v2422, %v2663
      %v2734 = vsub.f32 %v2427, %v2668
      %v2735 = vsub.f32 %v2430, %v2671
      %v2736 = vsub.f32 %v2435, %v2676
      %v2737 = vsub.f32 %v2438, %v2679
      %v2738 = vsub.f32 %v2443, %v2684
      %v2739 = vsub.f32 %v2446, %v2687
      %v2740 = vsub.f32 %v2451, %v2692
      %v2741 = vsub.f32 %v2454, %v2695
      %v2742 = vsub.f32 %v2459, %v2700
      %v2743 = vsub.f32 %v2462, %v2703
      %v2744 = vsub.f32 %v2467, %v2708
      %v2745 = vsub.f32 %v2470, %v2711
      %v2746 = vmul.f32 %v2714, %v2714
      %v2747 = vmul.f32 %v2715, %v2715
      %v2748 = vmul.f32 %v2716, %v2716
      %v2749 = vmul.f32 %v2717, %v2717
      %v2750 = vmul.f32 %v2718, %v2718
      %v2751 = vmul.f32 %v2719, %v2719
      %v2752 = vmul.f32 %v2720, %v2720
      %v2753 = vmul.f32 %v2721, %v2721
      %v2754 = vmul.f32 %v2722, %v2722
      %v2755 = vmul.f32 %v2723, %v2723
      %v2756 = vmul.f32 %v2724, %v2724
      %v2757 = vmul.f32 %v2725, %v2725
      %v2758 = vmul.f32 %v2726, %v2726
      %v2759 = vmul.f32 %v2727, %v2727
      %v2760 = vmul.f32 %v2728, %v2728
      %v2761 = vmul.f32 %v2729, %v2729
      %v2762 = vmul.f32 %v2730, %v2730
      %v2763 = vmul.f32 %v2731, %v2731
      %v2764 = vmul.f32 %v2732, %v2732
      %v2765 = vmul.f32 %v2733, %v2733
      %v2766 = vmul.f32 %v2734, %v2734
      %v2767 = vmul.f32 %v2735, %v2735
      %v2768 = vmul.f32 %v2736, %v2736
      %v2769 = vmul.f32 %v2737, %v2737
      %v2770 = vmul.f32 %v2738, %v2738
      %v2771 = vmul.f32 %v2739, %v2739
      %v2772 = vmul.f32 %v2740, %v2740
      %v2773 = vmul.f32 %v2741, %v2741
      %v2774 = vmul.f32 %v2742, %v2742
      %v2775 = vmul.f32 %v2743, %v2743
      %v2776 = vmul.f32 %v2744, %v2744
      %v2777 = vmul.f32 %v2745, %v2745
      %v2778 = vpack.c.bf16 %v2747, %v2746
      %v2779 = vpack.c.bf16 %v2749, %v2748
      %v2780 = vpack.c.bf16 %v2751, %v2750
      %v2781 = vpack.c.bf16 %v2753, %v2752
      %v2782 = vpack.c.bf16 %v2755, %v2754
      %v2783 = vpack.c.bf16 %v2757, %v2756
      %v2784 = vpack.c.bf16 %v2759, %v2758
      %v2785 = vpack.c.bf16 %v2761, %v2760
      %v2786 = vpack.c.bf16 %v2763, %v2762
      %v2787 = vpack.c.bf16 %v2765, %v2764
      %v2788 = vpack.c.bf16 %v2767, %v2766
      %v2789 = vpack.c.bf16 %v2769, %v2768
      %v2790 = vpack.c.bf16 %v2771, %v2770
      %v2791 = vpack.c.bf16 %v2773, %v2772
      %v2792 = vpack.c.bf16 %v2775, %v2774
      %v2793 = vpack.c.bf16 %v2777, %v2776
      %2794 = vmatprep.subr.bf16.mxu0 0
      %2795 = vmatpush1.bf16.msra.mxu0 %v2537
      %2796 = vmatprep.subr.bf16.mxu0 0
      %2797 = vmatpush1.bf16.msra.mxu0 %v2538
      %2798 = vmatprep.subr.bf16.mxu0 0
      %2799 = vmatpush1.bf16.msra.mxu0 %v2539
      %2800 = vmatprep.subr.bf16.mxu0 0
      %2801 = vmatpush1.bf16.msra.mxu0 %v2540
      %2802 = vmatprep.subr.bf16.mxu0 0
      %2803 = vmatpush1.bf16.msra.mxu0 %v2541
      %2804 = vmatprep.subr.bf16.mxu0 0
      %2805 = vmatpush1.bf16.msra.mxu0 %v2542
      %2806 = vmatprep.subr.bf16.mxu0 0
      %2807 = vmatpush1.bf16.msra.mxu0 %v2543
      %2808 = vmatprep.subr.bf16.mxu0 0
      %2809 = vmatpush1.bf16.msra.mxu0 %v2544
      %2810 = vmatprep.subr.bf16.mxu0 0
      %2811 = vmatpush1.bf16.msra.mxu0 0
      %2812 = vmatprep.subr.bf16.mxu0 0
      %2813 = vmatpush1.bf16.msra.mxu0 0
      %2814 = vmatprep.subr.bf16.mxu0 0
      %2815 = vmatpush1.bf16.msra.mxu0 0
      %2816 = vmatprep.subr.bf16.mxu0 0
      %2817 = vmatpush1.bf16.msra.mxu0 0
      %2818 = vmatprep.subr.bf16.mxu0 0
      %2819 = vmatpush1.bf16.msra.mxu0 0
      %2820 = vmatprep.subr.bf16.mxu0 0
      %2821 = vmatpush1.bf16.msra.mxu0 0
      %2822 = vmatprep.subr.bf16.mxu0 0
      %2823 = vmatpush1.bf16.msra.mxu0 0
      %2824 = vmatprep.subr.bf16.mxu0 0
      %2825 = vmatpush1.bf16.msra.mxu0 0
      %2826 = vmatprep.mubr.bf16.mxu0 0
      %2827 = vmatmul.mubr.bf16.gmra.mrb[0].mxu0 %v2778
      %v2828 = vpop.f32.mrb[0].mxu0
      %v2829 = vadd.f32 1e-05, %v2828
      %v2830 = vpop.f32.mrb[0].mxu0
      %v2831 = vpop.f32.mrb[0].mxu0
      %v2832 = vadd.f32 1e-05, %v2831
      %v2833 = vpop.f32.mrb[0].mxu0
      %2834 = vmatprep.mubr.bf16.mxu0 0
      %2835 = vmatmul.mubr.bf16.gmra.mrb[0].mxu0 %v2779
      %v2836 = vpop.f32.mrb[0].mxu0
      %v2837 = vadd.f32 1e-05, %v2836
      %v2838 = vpop.f32.mrb[0].mxu0
      %v2839 = vpop.f32.mrb[0].mxu0
      %v2840 = vadd.f32 1e-05, %v2839
      %v2841 = vpop.f32.mrb[0].mxu0
      %2842 = vmatprep.mubr.bf16.mxu0 0
      %2843 = vmatmul.mubr.bf16.gmra.mrb[0].mxu0 %v2780
      %v2844 = vpop.f32.mrb[0].mxu0
      %v2845 = vadd.f32 1e-05, %v2844
      %v2846 = vpop.f32.mrb[0].mxu0
      %v2847 = vpop.f32.mrb[0].mxu0
      %v2848 = vadd.f32 1e-05, %v2847
      %v2849 = vpop.f32.mrb[0].mxu0
      %2850 = vmatprep.mubr.bf16.mxu0 0
      %2851 = vmatmul.mubr.bf16.gmra.mrb[0].mxu0 %v2781
      %v2852 = vpop.f32.mrb[0].mxu0
      %v2853 = vadd.f32 1e-05, %v2852
      %v2854 = vpop.f32.mrb[0].mxu0
      %v2855 = vpop.f32.mrb[0].mxu0
      %v2856 = vadd.f32 1e-05, %v2855
      %v2857 = vpop.f32.mrb[0].mxu0
      %2858 = vmatprep.mubr.bf16.mxu0 0
      %2859 = vmatmul.mubr.bf16.gmra.mrb[0].mxu0 %v2782
      %v2860 = vpop.f32.mrb[0].mxu0
      %v2861 = vadd.f32 1e-05, %v2860
      %v2862 = vpop.f32.mrb[0].mxu0
      %v2863 = vpop.f32.mrb[0].mxu0
      %v2864 = vadd.f32 1e-05, %v2863
      %v2865 = vpop.f32.mrb[0].mxu0
      %2866 = vmatprep.mubr.bf16.mxu0 0
      %2867 = vmatmul.mubr.bf16.gmra.mrb[0].mxu0 %v2783
      %v2868 = vpop.f32.mrb[0].mxu0
      %v2869 = vadd.f32 1e-05, %v2868
      %v2870 = vpop.f32.mrb[0].mxu0
      %v2871 = vpop.f32.mrb[0].mxu0
      %v2872 = vadd.f32 1e-05, %v2871
      %v2873 = vpop.f32.mrb[0].mxu0
      %2874 = vmatprep.mubr.bf16.mxu0 0
      %2875 = vmatmul.mubr.bf16.gmra.mrb[0].mxu0 %v2784
      %v2876 = vpop.f32.mrb[0].mxu0
      %v2877 = vadd.f32 1e-05, %v2876
      %v2878 = vpop.f32.mrb[0].mxu0
      %v2879 = vpop.f32.mrb[0].mxu0
      %v2880 = vadd.f32 1e-05, %v2879
      %v2881 = vpop.f32.mrb[0].mxu0
      %2882 = vmatprep.mubr.bf16.mxu0 0
      %2883 = vmatmul.mubr.bf16.gmra.mrb[0].mxu0 %v2785
      %v2884 = vpop.f32.mrb[0].mxu0
      %v2885 = vadd.f32 1e-05, %v2884
      %v2886 = vpop.f32.mrb[0].mxu0
      %v2887 = vpop.f32.mrb[0].mxu0
      %v2888 = vadd.f32 1e-05, %v2887
      %v2889 = vpop.f32.mrb[0].mxu0
      %2890 = vmatprep.mubr.bf16.mxu0 0
      %2891 = vmatmul.mubr.bf16.gmra.mrb[0].mxu0 %v2786
      %v2892 = vpop.f32.mrb[0].mxu0
      %v2893 = vadd.f32 1e-05, %v2892
      %v2894 = vpop.f32.mrb[0].mxu0
      %v2895 = vpop.f32.mrb[0].mxu0
      %v2896 = vadd.f32 1e-05, %v2895
      %v2897 = vpop.f32.mrb[0].mxu0
      %2898 = vmatprep.mubr.bf16.mxu0 0
      %2899 = vmatmul.mubr.bf16.gmra.mrb[0].mxu0 %v2787
      %v2900 = vpop.f32.mrb[0].mxu0
      %v2901 = vadd.f32 1e-05, %v2900
      %v2902 = vpop.f32.mrb[0].mxu0
      %v2903 = vpop.f32.mrb[0].mxu0
      %v2904 = vadd.f32 1e-05, %v2903
      %v2905 = vpop.f32.mrb[0].mxu0
      %2906 = vmatprep.mubr.bf16.mxu0 0
      %2907 = vmatmul.mubr.bf16.gmra.mrb[0].mxu0 %v2788
      %v2908 = vpop.f32.mrb[0].mxu0
      %v2909 = vadd.f32 1e-05, %v2908
      %v2910 = vpop.f32.mrb[0].mxu0
      %v2911 = vpop.f32.mrb[0].mxu0
      %v2912 = vadd.f32 1e-05, %v2911
      %v2913 = vpop.f32.mrb[0].mxu0
      %2914 = vmatprep.mubr.bf16.mxu0 0
      %2915 = vmatmul.mubr.bf16.gmra.mrb[0].mxu0 %v2789
      %v2916 = vpop.f32.mrb[0].mxu0
      %v2917 = vadd.f32 1e-05, %v2916
      %v2918 = vpop.f32.mrb[0].mxu0
      %v2919 = vpop.f32.mrb[0].mxu0
      %v2920 = vadd.f32 1e-05, %v2919
      %v2921 = vpop.f32.mrb[0].mxu0
      %2922 = vmatprep.mubr.bf16.mxu0 0
      %2923 = vmatmul.mubr.bf16.gmra.mrb[0].mxu0 %v2790
      %v2924 = vpop.f32.mrb[0].mxu0
      %v2925 = vadd.f32 1e-05, %v2924
      %v2926 = vpop.f32.mrb[0].mxu0
      %v2927 = vpop.f32.mrb[0].mxu0
      %v2928 = vadd.f32 1e-05, %v2927
      %v2929 = vpop.f32.mrb[0].mxu0
      %2930 = vmatprep.mubr.bf16.mxu0 0
      %2931 = vmatmul.mubr.bf16.gmra.mrb[0].mxu0 %v2791
      %v2932 = vpop.f32.mrb[0].mxu0
      %v2933 = vadd.f32 1e-05, %v2932
      %v2934 = vpop.f32.mrb[0].mxu0
      %v2935 = vpop.f32.mrb[0].mxu0
      %v2936 = vadd.f32 1e-05, %v2935
      %v2937 = vpop.f32.mrb[0].mxu0
      %2938 = vmatprep.mubr.bf16.mxu0 0
      %2939 = vmatmul.mubr.bf16.gmra.mrb[0].mxu0 %v2792
      %v2940 = vpop.f32.mrb[0].mxu0
      %v2941 = vadd.f32 1e-05, %v2940
      %v2942 = vpop.f32.mrb[0].mxu0
      %v2943 = vpop.f32.mrb[0].mxu0
      %v2944 = vadd.f32 1e-05, %v2943
      %v2945 = vpop.f32.mrb[0].mxu0
      %2946 = vmatprep.mubr.bf16.mxu0 0
      %2947 = vmatmul.mubr.bf16.gmra.mrb[0].mxu0 %v2793
      %v2948 = vpop.f32.mrb[0].mxu0
      %v2949 = vadd.f32 1e-05, %v2948
      %v2950 = vpop.f32.mrb[0].mxu0
      %v2951 = vpop.f32.mrb[0].mxu0
      %v2952 = vadd.f32 1e-05, %v2951
      %v2953 = vpop.f32.mrb[0].mxu0
      %2954 = vdwg.mxu0
      %v2955 = vrsqrt.pop %v2829
      %v2956 = vrsqrt.pop %v2832
      %v2957 = vrsqrt.pop %v2837
      %v2958 = vrsqrt.pop %v2840
      %v2959 = vrsqrt.pop %v2845
      %v2960 = vrsqrt.pop %v2848
      %v2961 = vrsqrt.pop %v2853
      %v2962 = vrsqrt.pop %v2856
      %v2963 = vrsqrt.pop %v2861
      %v2964 = vrsqrt.pop %v2864
      %v2965 = vrsqrt.pop %v2869
      %v2966 = vrsqrt.pop %v2872
      %v2967 = vrsqrt.pop %v2877
      %v2968 = vrsqrt.pop %v2880
      %v2969 = vrsqrt.pop %v2885
      %v2970 = vrsqrt.pop %v2888
      %v2971 = vrsqrt.pop %v2893
      %v2972 = vrsqrt.pop %v2896
      %v2973 = vrsqrt.pop %v2901
      %v2974 = vrsqrt.pop %v2904
      %v2975 = vrsqrt.pop %v2909
      %v2976 = vrsqrt.pop %v2912
      %v2977 = vrsqrt.pop %v2917
      %v2978 = vrsqrt.pop %v2920
      %v2979 = vrsqrt.pop %v2925
      %v2980 = vrsqrt.pop %v2928
      %v2981 = vrsqrt.pop %v2933
      %v2982 = vrsqrt.pop %v2936
      %v2983 = vrsqrt.pop %v2941
      %v2984 = vrsqrt.pop %v2944
      %v2985 = vrsqrt.pop %v2949
      %v2986 = vrsqrt.pop %v2952
      %v2987 = vmul.f32 %v2714, %v2955
      %v2988 = vmul.f32 %v2715, %v2956
      %v2989 = vmul.f32 %v2716, %v2957
      %v2990 = vmul.f32 %v2717, %v2958
      %v2991 = vmul.f32 %v2718, %v2959
      %v2992 = vmul.f32 %v2719, %v2960
      %v2993 = vmul.f32 %v2720, %v2961
      %v2994 = vmul.f32 %v2721, %v2962
      %v2995 = vmul.f32 %v2722, %v2963
      %v2996 = vmul.f32 %v2723, %v2964
      %v2997 = vmul.f32 %v2724, %v2965
      %v2998 = vmul.f32 %v2725, %v2966
      %v2999 = vmul.f32 %v2726, %v2967
      %v3000 = vmul.f32 %v2727, %v2968
      %v3001 = vmul.f32 %v2728, %v2969
      %v3002 = vmul.f32 %v2729, %v2970
      %v3003 = vmul.f32 %v2730, %v2971
      %v3004 = vmul.f32 %v2731, %v2972
      %v3005 = vmul.f32 %v2732, %v2973
      %v3006 = vmul.f32 %v2733, %v2974
      %v3007 = vmul.f32 %v2734, %v2975
      %v3008 = vmul.f32 %v2735, %v2976
      %v3009 = vmul.f32 %v2736, %v2977
      %v3010 = vmul.f32 %v2737, %v2978
      %v3011 = vmul.f32 %v2738, %v2979
      %v3012 = vmul.f32 %v2739, %v2980
      %v3013 = vmul.f32 %v2740, %v2981
      %v3014 = vmul.f32 %v2741, %v2982
      %v3015 = vmul.f32 %v2742, %v2983
      %v3016 = vmul.f32 %v2743, %v2984
      %v3017 = vmul.f32 %v2744, %v2985
      %v3018 = vmul.f32 %v2745, %v2986
      %v3019 = vld [vmem:[%s11] sm:$0x1]
      %v3021 = vlaneseq
      %v3022 = vshrl.u32 %v3021, 7
      %v3023 = vsub.s32 0, %v3022
      %v3024 = vrot.slane %v3019, %v3023
      %v3026 = vmul.f32 %v2987, %v3024
      %v3027 = vmul.f32 %v2988, %v3024
      %v3028 = vmul.f32 %v2989, %v3024
      %v3029 = vmul.f32 %v2990, %v3024
      %v3030 = vmul.f32 %v2991, %v3024
      %v3031 = vmul.f32 %v2992, %v3024
      %v3032 = vmul.f32 %v2993, %v3024
      %v3033 = vmul.f32 %v2994, %v3024
      %v3034 = vmul.f32 %v2995, %v3024
      %v3035 = vmul.f32 %v2996, %v3024
      %v3036 = vmul.f32 %v2997, %v3024
      %v3037 = vmul.f32 %v2998, %v3024
      %v3038 = vmul.f32 %v2999, %v3024
      %v3039 = vmul.f32 %v3000, %v3024
      %v3040 = vmul.f32 %v3001, %v3024
      %v3041 = vmul.f32 %v3002, %v3024
      %v3042 = vmul.f32 %v3003, %v3024
      %v3043 = vmul.f32 %v3004, %v3024
      %v3044 = vmul.f32 %v3005, %v3024
      %v3045 = vmul.f32 %v3006, %v3024
      %v3046 = vmul.f32 %v3007, %v3024
      %v3047 = vmul.f32 %v3008, %v3024
      %v3048 = vmul.f32 %v3009, %v3024
      %v3049 = vmul.f32 %v3010, %v3024
      %v3050 = vmul.f32 %v3011, %v3024
      %v3051 = vmul.f32 %v3012, %v3024
      %v3052 = vmul.f32 %v3013, %v3024
      %v3053 = vmul.f32 %v3014, %v3024
      %v3054 = vmul.f32 %v3015, %v3024
      %v3055 = vmul.f32 %v3016, %v3024
      %v3056 = vmul.f32 %v3017, %v3024
      %v3057 = vmul.f32 %v3018, %v3024
      %v3058 = vld [vmem:[%s12] sm:$0x1]
      %v3060 = vlaneseq
      %v3061 = vshrl.u32 %v3060, 7
      %v3062 = vsub.s32 0, %v3061
      %v3063 = vrot.slane %v3058, %v3062
      %v3065 = vadd.f32 %v3026, %v3063
      %v3066 = vadd.f32 %v3027, %v3063
      %v3067 = vadd.f32 %v3028, %v3063
      %v3068 = vadd.f32 %v3029, %v3063
      %v3069 = vadd.f32 %v3030, %v3063
      %v3070 = vadd.f32 %v3031, %v3063
      %v3071 = vadd.f32 %v3032, %v3063
      %v3072 = vadd.f32 %v3033, %v3063
      %v3073 = vadd.f32 %v3034, %v3063
      %v3074 = vadd.f32 %v3035, %v3063
      %v3075 = vadd.f32 %v3036, %v3063
      %v3076 = vadd.f32 %v3037, %v3063
      %v3077 = vadd.f32 %v3038, %v3063
      %v3078 = vadd.f32 %v3039, %v3063
      %v3079 = vadd.f32 %v3040, %v3063
      %v3080 = vadd.f32 %v3041, %v3063
      %v3081 = vadd.f32 %v3042, %v3063
      %v3082 = vadd.f32 %v3043, %v3063
      %v3083 = vadd.f32 %v3044, %v3063
      %v3084 = vadd.f32 %v3045, %v3063
      %v3085 = vadd.f32 %v3046, %v3063
      %v3086 = vadd.f32 %v3047, %v3063
      %v3087 = vadd.f32 %v3048, %v3063
      %v3088 = vadd.f32 %v3049, %v3063
      %v3089 = vadd.f32 %v3050, %v3063
      %v3090 = vadd.f32 %v3051, %v3063
      %v3091 = vadd.f32 %v3052, %v3063
      %v3092 = vadd.f32 %v3053, %v3063
      %v3093 = vadd.f32 %v3054, %v3063
      %v3094 = vadd.f32 %v3055, %v3063
      %v3095 = vadd.f32 %v3056, %v3063
      %v3096 = vadd.f32 %v3057, %v3063
      %3097 = vst [vmem:[%s547] sm:$0xff] %v3065
      %3098 = vst [vmem:[%s547 + $0x8] sm:$0xff] %v3066
      %3099 = vst [vmem:[%s547 + $0x10] sm:$0xff] %v3067
      %3100 = vst [vmem:[%s547 + $0x18] sm:$0xff] %v3068
      %3101 = vst [vmem:[%s547 + $0x20] sm:$0xff] %v3069
      %3102 = vst [vmem:[%s547 + $0x28] sm:$0xff] %v3070
      %3103 = vst [vmem:[%s547 + $0x30] sm:$0xff] %v3071
      %3104 = vst [vmem:[%s547 + $0x38] sm:$0xff] %v3072
      %3105 = vst [vmem:[%s547 + $0x40] sm:$0xff] %v3073
      %3106 = vst [vmem:[%s547 + $0x48] sm:$0xff] %v3074
      %3107 = vst [vmem:[%s547 + $0x50] sm:$0xff] %v3075
      %3108 = vst [vmem:[%s547 + $0x58] sm:$0xff] %v3076
      %3109 = vst [vmem:[%s547 + $0x60] sm:$0xff] %v3077
      %3110 = vst [vmem:[%s547 + $0x68] sm:$0xff] %v3078
      %3111 = vst [vmem:[%s547 + $0x70] sm:$0xff] %v3079
      %3112 = vst [vmem:[%s547 + $0x78] sm:$0xff] %v3080
      %3113 = vst [vmem:[%s547 + $0x80] sm:$0xff] %v3081
      %3114 = vst [vmem:[%s547 + $0x88] sm:$0xff] %v3082
      %3115 = vst [vmem:[%s547 + $0x90] sm:$0xff] %v3083
      %3116 = vst [vmem:[%s547 + $0x98] sm:$0xff] %v3084
      %3117 = vst [vmem:[%s547 + $0xa0] sm:$0xff] %v3085
      %3118 = vst [vmem:[%s547 + $0xa8] sm:$0xff] %v3086
      %3119 = vst [vmem:[%s547 + $0xb0] sm:$0xff] %v3087
      %3120 = vst [vmem:[%s547 + $0xb8] sm:$0xff] %v3088
      %3121 = vst [vmem:[%s547 + $0xc0] sm:$0xff] %v3089
      %3122 = vst [vmem:[%s547 + $0xc8] sm:$0xff] %v3090
      %3123 = vst [vmem:[%s547 + $0xd0] sm:$0xff] %v3091
      %3124 = vst [vmem:[%s547 + $0xd8] sm:$0xff] %v3092
      %3125 = vst [vmem:[%s547 + $0xe0] sm:$0xff] %v3093
      %3126 = vst [vmem:[%s547 + $0xe8] sm:$0xff] %v3094
      %3127 = vst [vmem:[%s547 + $0xf0] sm:$0xff] %v3095
      %3128 = vst [vmem:[%s547 + $0xf8] sm:$0xff] %v3096
      %s3129 = smul.u32 32, %s25
      %p3130 = scmp.lt.s32.totalorder %s3129, 63
      %s3131 = scalar_select %p3130, %s3129, 63
      %s3132 = smul.addr %s3131, 8
      %s3133 = scalar_lea.vmem %s14, %s3132
      // Predicated region
      $region77: #{edge_model_ltp_forward.1} parent=75 // pred_check
        %p3134 = pneg %p357
      $region78: #{edge_model_ltp_forward.1} parent=75 // pred_check_branch
        %3136 = sbr.rel (%p3134) target = $region80
      $region79: #{edge_model_ltp_forward.1} parent=75 // pred_region
        %s3137 = smul.u32 32, %s25
      $region80: #{edge_model_ltp_forward.1} parent=75 // pred_fallthru
        _
    $region76: #{edge_model_ltp_forward.1} parent=5 // pred_fallthru
      _
    %p3138 = scmp.le.s32.totalorder 2, %s20
    // Predicated region
    $region81: #{edge_model_ltp_forward.1} parent=5 // pred_check
      %p3139 = pneg %p3138
    $region82: #{edge_model_ltp_forward.1} parent=5 // pred_check_branch
      %3141 = sbr.rel (%p3139) target = $region84
    $region83: #{edge_model_ltp_forward.1} parent=5 // pred_region
      %s3142 = ssub.s32 %s20, 2
      // Predicated region
      $region85: #{edge_model_ltp_forward.1} parent=83 // pred_check
        %p3143 = pneg %p363
      $region86: #{edge_model_ltp_forward.1} parent=83 // pred_check_branch
        %3145 = sbr.rel (%p3143) target = $region88
      $region87: #{edge_model_ltp_forward.1} parent=83 // pred_region
        %s3146 = smul.u32 32, %s26
        %p3147 = scmp.lt.s32.totalorder %s3146, 63
        %s3148 = scalar_select %p3147, %s3146, 63
        %s3149 = smul.addr %s3148, 8
        %s3150 = scalar_lea.vmem %s14, %s3149
      $region88: #{edge_model_ltp_forward.1} parent=83 // pred_fallthru
        _
    $region84: #{edge_model_ltp_forward.1} parent=5 // pred_fallthru
      _
  $region6: #{edge_model_ltp_forward.1} parent=0 // loop_footer
    %s24 = sadd.s32 1, %s20
  $region7: #{edge_model_ltp_forward.1} parent=0 // loop_footer_branch
    %19 = sbr.rel target = $region3
  $region8: #{edge_model_ltp_forward.1} parent=0 // loop_exit
    _

</llo_original>
